<compile_context>
chip_gen: v5e
topology: v5e:2x2
jax: 0.10.0
libtpu: 0.0.40
codegen_flags: <defaults>
</compile_context>

<pallas_src>
import functools

import jax
import jax.numpy as jnp
from jax.experimental import pallas as pl
from jax.experimental.pallas import tpu as pltpu


# ----------------------------------------------------------------------------
# helpers
# ----------------------------------------------------------------------------
def _full_spec(shape):
    return pl.BlockSpec(shape, lambda i, _nd=len(shape): (0,) * _nd)


_COMPILER_PARAMS = pltpu.CompilerParams(dimension_semantics=("arbitrary",))

_STAGES = ((1, 28), (2, 14), (3, 7))   # (stage index, H == W of that stage's conv input)


# ----------------------------------------------------------------------------
# Pallas kernels
# ----------------------------------------------------------------------------
def _conv_stage_kernel(*refs, inv_n, has_rest):
    """Fused conv3x3(+bias) -> ReLU -> BatchNorm(batch stats) -> 2x2 max-pool.

    Inputs are 2D "row context" matrices (rows = output pixels rows, pre-split
    into even/odd/leftover spatial rows), the weight is a banded (K, Dp)
    matrix whose columns are [even-w | odd-w | leftover-w] blocks, each padded
    to a 128-lane boundary, so the whole stage is matmuls + elementwise ops +
    aligned slices and the activation never leaves VMEM.
    """
    if has_rest:
        (xt_ref, xb_ref, xr_ref, w_ref, b_ref, g_ref, bt_ref,
         ms_ref, mb_ref, o_ref) = refs
    else:
        (xt_ref, xb_ref, w_ref, b_ref, g_ref, bt_ref,
         ms_ref, mb_ref, o_ref) = refs
        xr_ref = None

    w = w_ref[...]
    bias = b_ref[...]

    def conv_relu(ref):
        y = jnp.dot(ref[...], w, preferred_element_type=jnp.float32) + bias
        return jnp.maximum(y, 0.0)

    yt = conv_relu(xt_ref)           # even output rows   (n, ho)
    yb = conv_relu(xb_ref)           # odd  output rows   (n, ho)

    col_s = jnp.sum(yt, axis=0, keepdims=True) + jnp.sum(yb, axis=0, keepdims=True)
    col_ss = (jnp.sum(yt * yt, axis=0, keepdims=True)
              + jnp.sum(yb * yb, axis=0, keepdims=True))
    if xr_ref is not None:           # leftover rows (odd H): BN stats only
        yr = conv_relu(xr_ref)
        col_s = col_s + jnp.sum(yr, axis=0, keepdims=True)
        col_ss = col_ss + jnp.sum(yr * yr, axis=0, keepdims=True)

    # per-channel batch statistics via a 0/1 column->channel reduction matrix
    # (padded lanes have all-zero rows, so they never corrupt the stats).
    ms = ms_ref[...]                                             # (Dp, Cout)
    mean_c = jnp.dot(col_s, ms, preferred_element_type=jnp.float32) * inv_n
    ex2_c = jnp.dot(col_ss, ms, preferred_element_type=jnp.float32) * inv_n
    var_c = jnp.maximum(ex2_c - mean_c * mean_c, 0.0)            # biased var
    scale_c = g_ref[...] * jax.lax.rsqrt(var_c + 1e-5)
    shift_c = bt_ref[...] - mean_c * scale_c

    # broadcast per-channel scale/shift back onto the (w, c) column layout
    mb = mb_ref[...]                                             # (Cout, Dp)
    scale_cols = jnp.dot(scale_c, mb, preferred_element_type=jnp.float32)
    shift_cols = jnp.dot(shift_c, mb, preferred_element_type=jnp.float32)

    yt = yt * scale_cols + shift_cols
    yb = yb * scale_cols + shift_cols

    # 2x2 max-pool: rows were pre-split even/odd, columns pre-split into two
    # 128-lane-aligned blocks (even-w / odd-w).  Output is 128 lanes wide.
    m_rows = jnp.maximum(yt, yb)
    o_ref[...] = jnp.maximum(m_rows[:, 0:128], m_rows[:, 128:256])


def _head_kernel(x_ref, w1_ref, b1_ref, w2_ref, b2_ref, o_ref):
    """Fused fc1 + ReLU + fc2 + log_softmax (weights/bias lane-padded to 128;
    pad logits carry -1e30 bias so they vanish from the softmax sum)."""
    h = jnp.dot(x_ref[...], w1_ref[...], preferred_element_type=jnp.float32) + b1_ref[...]
    h = jnp.maximum(h, 0.0)
    logits = jnp.dot(h, w2_ref[...], preferred_element_type=jnp.float32) + b2_ref[...]
    m = jnp.max(logits, axis=-1, keepdims=True)
    z = logits - m
    lse = jnp.log(jnp.sum(jnp.exp(z), axis=-1, keepdims=True))
    o_ref[...] = z - lse


# ----------------------------------------------------------------------------
# pallas_call wrappers (tiny arrays -> one full-array block, grid=(1,))
# ----------------------------------------------------------------------------
def conv_bn_pool_stage(xt, xb, xr, wbig, bias_cols, gamma, beta, msum, mbro,
                       n_positions):
    Mt = xt.shape[0]
    inputs = [xt, xb] + ([xr] if xr is not None else []) + [
        wbig, bias_cols, gamma, beta, msum, mbro]
    kernel = functools.partial(_conv_stage_kernel,
                               inv_n=1.0 / float(n_positions),
                               has_rest=xr is not None)
    return pl.pallas_call(
        kernel,
        out_shape=jax.ShapeDtypeStruct((Mt, 128), jnp.float32),
        grid=(1,),
        in_specs=[_full_spec(a.shape) for a in inputs],
        out_specs=_full_spec((Mt, 128)),
        compiler_params=_COMPILER_PARAMS,
    )(*inputs)


def head_fc_logsoftmax(x, w1, b1, w2, b2):
    nb = x.shape[0]
    inputs = [x, w1, b1, w2, b2]
    return pl.pallas_call(
        _head_kernel,
        out_shape=jax.ShapeDtypeStruct((nb, 128), jnp.float32),
        grid=(1,),
        in_specs=[_full_spec(a.shape) for a in inputs],
        out_specs=_full_spec((nb, 128)),
        compiler_params=_COMPILER_PARAMS,
    )(*inputs)


# ----------------------------------------------------------------------------
# layout glue (XLA, tiny tensors): build the per-stage "row context" matrices
# ----------------------------------------------------------------------------
def _build_stage_lhs(a_nhwc):
    """For each output row h, concat the 3 padded input rows h..h+2 (each
    flattened to (W+2)*Cin).  Rows are re-ordered (even-h | odd-h | leftover-h)
    so the in-kernel H-pool is a plain elementwise max."""
    N, H, W, Cin = a_nhwc.shape
    Ho = H // 2
    Hrem = H - 2 * Ho
    ap = jnp.pad(a_nhwc, ((0, 0), (1, 1), (1, 1), (0, 0)))
    k0 = (W + 2) * Cin
    L = jnp.concatenate(
        [ap[:, dy:dy + H].reshape(N, H, k0) for dy in range(3)], axis=-1)
    K = 3 * k0
    xt = L[:, 0:2 * Ho:2].reshape(N * Ho, K)
    xb = L[:, 1:2 * Ho:2].reshape(N * Ho, K)
    xr = L[:, 2 * Ho:H].reshape(N * Hrem, K) if Hrem > 0 else None
    return xt, xb, xr


# ----------------------------------------------------------------------------
# parameters
# ----------------------------------------------------------------------------
def init_params(key):
    def u(k, shape, fan_in):
        bound = 1.0 / jnp.sqrt(jnp.float32(fan_in))
        return jax.random.uniform(k, shape, jnp.float32, -bound, bound)

    ks = jax.random.split(key, 10)
    return {
        "conv1_w": u(ks[0], (8, 1, 3, 3), 1 * 9),    "conv1_b": u(ks[1], (8,), 1 * 9),
        "conv2_w": u(ks[2], (16, 8, 3, 3), 8 * 9),   "conv2_b": u(ks[3], (16,), 8 * 9),
        "conv3_w": u(ks[4], (32, 16, 3, 3), 16 * 9), "conv3_b": u(ks[5], (32,), 16 * 9),
        "fc1_w": u(ks[6], (64, 288), 288), "fc1_b": u(ks[7], (64,), 288),
        "fc2_w": u(ks[8], (10, 64), 64),   "fc2_b": u(ks[9], (10,), 64),
        # BatchNorm affine params (PyTorch default init: gamma=1, beta=0)
        "bn1_g": jnp.ones((8,), jnp.float32),  "bn1_b": jnp.zeros((8,), jnp.float32),
        "bn2_g": jnp.ones((16,), jnp.float32), "bn2_b": jnp.zeros((16,), jnp.float32),
        "bn3_g": jnp.ones((32,), jnp.float32), "bn3_b": jnp.zeros((32,), jnp.float32),
    }


def prepare_params(params):
    """One-time re-layout of the PyTorch-style weights into the lane-dense,
    MXU-friendly layouts the Pallas kernels consume (done once, off the hot
    path)."""
    prepped = {}
    for idx, H in _STAGES:
        W = H
        w = params[f"conv{idx}_w"]                       # (Cout, Cin, 3, 3)
        b = params[f"conv{idx}_b"]
        Cout, Cin = int(w.shape[0]), int(w.shape[1])
        Wo = W // 2
        Wrem = W - 2 * Wo
        padw = 128 - Wo * Cout
        K = 3 * (W + 2) * Cin

        # banded conv weight: rows (dy, wp, ci), cols (w, co); cross-correlation.
        sel = (jnp.arange(W + 2)[None, :, None]
               == jnp.arange(W)[None, None, :] + jnp.arange(3)[:, None, None]
               ).astype(jnp.float32)                     # (dx, wp, w)
        wt = jnp.transpose(w, (2, 3, 1, 0))              # (dy, dx, ci, co)
        big = jnp.einsum("xpw,yxio->ypiwo", sel, wt).reshape(K, W, Cout)

        even = jnp.pad(big[:, 0:2 * Wo:2].reshape(K, Wo * Cout), ((0, 0), (0, padw)))
        odd = jnp.pad(big[:, 1:2 * Wo:2].reshape(K, Wo * Cout), ((0, 0), (0, padw)))
        zpad = jnp.zeros((padw,), jnp.float32)
        b_half = jnp.concatenate([jnp.tile(b, Wo), zpad])
        eye = jnp.eye(Cout, dtype=jnp.float32)
        m_half = jnp.concatenate(
            [jnp.tile(eye, (Wo, 1)), jnp.zeros((padw, Cout), jnp.float32)], axis=0)

        w_parts, b_parts, m_parts = [even, odd], [b_half, b_half], [m_half, m_half]
        if Wrem > 0:                                     # leftover columns (odd W)
            w_parts.append(big[:, 2 * Wo:W].reshape(K, Wrem * Cout))
            b_parts.append(jnp.tile(b, Wrem))
            m_parts.append(jnp.tile(eye, (Wrem, 1)))

        prepped[f"s{idx}"] = {
            "wbig": jnp.concatenate(w_parts, axis=-1),               # (K, Dp)
            "bias": jnp.concatenate(b_parts).reshape(1, -1),         # (1, Dp)
            "gamma": params[f"bn{idx}_g"].reshape(1, Cout),
            "beta": params[f"bn{idx}_b"].reshape(1, Cout),
            "msum": jnp.concatenate(m_parts, axis=0),                # (Dp, Cout)
            "mbro": jnp.concatenate(m_parts, axis=0).T,              # (Cout, Dp)
        }

    # fc head: permute fc1 columns from CHW-flatten to HWC-flatten so the NHWC
    # conv output needs no transpose; pad hidden/output dims to 128 lanes.
    w1 = params["fc1_w"].reshape(64, 32, 3, 3).transpose(2, 3, 1, 0).reshape(288, 64)
    prepped["w1"] = jnp.pad(w1, ((0, 0), (0, 64)))                   # (288, 128)
    prepped["b1"] = jnp.pad(params["fc1_b"], (0, 64)).reshape(1, 128)
    prepped["w2"] = jnp.pad(params["fc2_w"].T, ((0, 64), (0, 118)))  # (128, 128)
    prepped["b2"] = jnp.concatenate(
        [params["fc2_b"], jnp.full((118,), -1e30, jnp.float32)]).reshape(1, 128)
    return prepped


# ----------------------------------------------------------------------------
# forward pass
# ----------------------------------------------------------------------------
@jax.jit
def forward(prepped, x_nchw):
    x = jnp.transpose(x_nchw, (0, 2, 3, 1)).astype(jnp.float32)      # NCHW -> NHWC
    N = x.shape[0]
    for idx, H in _STAGES:
        W = H
        Ho, Wo = H // 2, W // 2
        p = prepped[f"s{idx}"]
        Cout = p["msum"].shape[1]
        xt, xb, xr = _build_stage_lhs(x)
        pooled = conv_bn_pool_stage(xt, xb, xr, p["wbig"], p["bias"],
                                    p["gamma"], p["beta"], p["msum"], p["mbro"],
                                    n_positions=N * H * W)
        x = pooled[:, :Wo * Cout].reshape(N, Ho, Wo, Cout)           # NHWC
    feats = x.reshape(N, 3 * 3 * 32)     # HWC-flatten; fc1 weights are permuted to match
    out = head_fc_logsoftmax(feats, prepped["w1"], prepped["b1"],
                             prepped["w2"], prepped["b2"])
    return out[:, :10]


# ----------------------------------------------------------------------------
# pure-JAX reference (for in-script numerical validation)
# ----------------------------------------------------------------------------
def reference_forward(params, x_nchw):
    hp = jax.lax.Precision.HIGHEST
    x = x_nchw.astype(jnp.float32)
    for i in (1, 2, 3):
        w = params[f"conv{i}_w"]
        b = params[f"conv{i}_b"]
        x = jax.lax.conv_general_dilated(
            x, w, window_strides=(1, 1), padding=((1, 1), (1, 1)),
            dimension_numbers=("NCHW", "OIHW", "NCHW"), precision=hp)
        x = jnp.maximum(x + b.reshape(1, -1, 1, 1), 0.0)
        mean = jnp.mean(x, axis=(0, 2, 3), keepdims=True)
        var = jnp.mean(jnp.square(x - mean), axis=(0, 2, 3), keepdims=True)
        x = ((x - mean) * jax.lax.rsqrt(var + 1e-5)
             * params[f"bn{i}_g"].reshape(1, -1, 1, 1)
             + params[f"bn{i}_b"].reshape(1, -1, 1, 1))
        n, c, h, wd = x.shape
        x = x[:, :, :2 * (h // 2), :2 * (wd // 2)]
        x = x.reshape(n, c, h // 2, 2, wd // 2, 2).max(axis=(3, 5))
    feat = x.reshape(x.shape[0], -1)
    hdn = jnp.maximum(
        jnp.dot(feat, params["fc1_w"].T, precision=hp) + params["fc1_b"], 0.0)
    logits = jnp.dot(hdn, params["fc2_w"].T, precision=hp) + params["fc2_b"]
    return jax.nn.log_softmax(logits, axis=-1)


if __name__ == "__main__":
    key = jax.random.PRNGKey(0)
    pkey, xkey = jax.random.split(key)
    params = init_params(pkey)
    prepped = prepare_params(params)          # one-time weight re-layout / padding
    # MNIST-shaped input (28x28 implied by fc1 in_features=288), small batch.
    x = jax.random.normal(xkey, (2, 1, 28, 28), dtype=jnp.float32)

    out = jax.block_until_ready(forward(prepped, x))

    assert out.shape == (2, 10)
    assert bool(jnp.all(jnp.isfinite(out)))
    # log_softmax rows should exponentiate-sum to ~1
    assert bool(jnp.allclose(jnp.sum(jnp.exp(out), axis=1), 1.0, atol=1e-4))
    # numerical check against a pure-JAX reference of the PyTorch forward
    ref = reference_forward(params, x)
    assert bool(jnp.allclose(out, ref, atol=5e-2, rtol=1e-3)), (
        float(jnp.max(jnp.abs(out - ref))))
    print("KERNEL_OK")
</pallas_src>

<mosaic_0001>
module attributes {stable_mosaic.version = 11 : i64} {
  func.func @_conv_stage_kernel(%arg0: i32, %arg1: memref<28x90xf32, #tpu.memory_space<vmem>>, %arg2: memref<28x90xf32, #tpu.memory_space<vmem>>, %arg3: memref<90x256xf32, #tpu.memory_space<vmem>>, %arg4: memref<1x256xf32, #tpu.memory_space<vmem>>, %arg5: memref<1x8xf32, #tpu.memory_space<vmem>>, %arg6: memref<1x8xf32, #tpu.memory_space<vmem>>, %arg7: memref<256x8xf32, #tpu.memory_space<vmem>>, %arg8: memref<8x256xf32, #tpu.memory_space<vmem>>, %arg9: memref<28x128xf32, #tpu.memory_space<vmem>>) attributes {dimension_semantics = [#tpu.dimension_semantics<arbitrary>], iteration_bounds = array<i64: 1>, scalar_prefetch = 0 : i64, scratch_operands = 0 : i64, tpu.core_type = #tpu.core_type<tc>, window_params = [{pipeline_mode = #tpu.pipeline_mode<synchronous>, transform_indices = @transform_0, window_bounds = array<i64: 28, 90>}, {pipeline_mode = #tpu.pipeline_mode<synchronous>, transform_indices = @transform_1, window_bounds = array<i64: 28, 90>}, {pipeline_mode = #tpu.pipeline_mode<synchronous>, transform_indices = @transform_2, window_bounds = array<i64: 90, 256>}, {pipeline_mode = #tpu.pipeline_mode<synchronous>, transform_indices = @transform_3, window_bounds = array<i64: 1, 256>}, {pipeline_mode = #tpu.pipeline_mode<synchronous>, transform_indices = @transform_4, window_bounds = array<i64: 1, 8>}, {pipeline_mode = #tpu.pipeline_mode<synchronous>, transform_indices = @transform_5, window_bounds = array<i64: 1, 8>}, {pipeline_mode = #tpu.pipeline_mode<synchronous>, transform_indices = @transform_6, window_bounds = array<i64: 256, 8>}, {pipeline_mode = #tpu.pipeline_mode<synchronous>, transform_indices = @transform_7, window_bounds = array<i64: 8, 256>}, {pipeline_mode = #tpu.pipeline_mode<synchronous>, transform_indices = @transform_8, window_bounds = array<i64: 28, 128>}]} {
    %c0 = arith.constant 0 : index
    %c0_0 = arith.constant 0 : index
    %0 = vector.load %arg3[%c0, %c0_0] : memref<90x256xf32, #tpu.memory_space<vmem>>, vector<90x256xf32>
    %c0_1 = arith.constant 0 : index
    %c0_2 = arith.constant 0 : index
    %1 = vector.load %arg4[%c0_1, %c0_2] : memref<1x256xf32, #tpu.memory_space<vmem>>, vector<1x256xf32>
    %c0_3 = arith.constant 0 : index
    %c0_4 = arith.constant 0 : index
    %2 = vector.load %arg1[%c0_3, %c0_4] : memref<28x90xf32, #tpu.memory_space<vmem>>, vector<28x90xf32>
    %cst = arith.constant dense<0.000000e+00> : vector<28x256xf32>
    %3 = tpu.matmul %2, %0, %cst {dimension_numbers = #tpu.dot_dimension_numbers<[1], [0], [0], [1], [0, 0, 1, 1], [], []>} : vector<28x90xf32>, vector<90x256xf32>, vector<28x256xf32> -> vector<28x256xf32>
    %4 = vector.broadcast %1 : vector<1x256xf32> to vector<28x256xf32>
    %5 = arith.addf %3, %4 : vector<28x256xf32>
    %cst_5 = arith.constant 0.000000e+00 : f32
    %6 = vector.broadcast %cst_5 : f32 to vector<28x256xf32>
    %7 = arith.maximumf %5, %6 : vector<28x256xf32>
    %c0_6 = arith.constant 0 : index
    %c0_7 = arith.constant 0 : index
    %8 = vector.load %arg2[%c0_6, %c0_7] : memref<28x90xf32, #tpu.memory_space<vmem>>, vector<28x90xf32>
    %cst_8 = arith.constant dense<0.000000e+00> : vector<28x256xf32>
    %9 = tpu.matmul %8, %0, %cst_8 {dimension_numbers = #tpu.dot_dimension_numbers<[1], [0], [0], [1], [0, 0, 1, 1], [], []>} : vector<28x90xf32>, vector<90x256xf32>, vector<28x256xf32> -> vector<28x256xf32>
    %10 = vector.broadcast %1 : vector<1x256xf32> to vector<28x256xf32>
    %11 = arith.addf %9, %10 : vector<28x256xf32>
    %cst_9 = arith.constant 0.000000e+00 : f32
    %12 = vector.broadcast %cst_9 : f32 to vector<28x256xf32>
    %13 = arith.maximumf %11, %12 : vector<28x256xf32>
    %cst_10 = arith.constant dense<0.000000e+00> : vector<256xf32>
    %14 = vector.multi_reduction <add>, %7, %cst_10 [0] : vector<28x256xf32> to vector<256xf32>
    %15 = vector.shape_cast %14 : vector<256xf32> to vector<1x256xf32>
    %cst_11 = arith.constant dense<0.000000e+00> : vector<256xf32>
    %16 = vector.multi_reduction <add>, %13, %cst_11 [0] : vector<28x256xf32> to vector<256xf32>
    %17 = vector.shape_cast %16 : vector<256xf32> to vector<1x256xf32>
    %18 = arith.addf %15, %17 : vector<1x256xf32>
    %19 = arith.mulf %7, %7 : vector<28x256xf32>
    %cst_12 = arith.constant dense<0.000000e+00> : vector<256xf32>
    %20 = vector.multi_reduction <add>, %19, %cst_12 [0] : vector<28x256xf32> to vector<256xf32>
    %21 = vector.shape_cast %20 : vector<256xf32> to vector<1x256xf32>
    %22 = arith.mulf %13, %13 : vector<28x256xf32>
    %cst_13 = arith.constant dense<0.000000e+00> : vector<256xf32>
    %23 = vector.multi_reduction <add>, %22, %cst_13 [0] : vector<28x256xf32> to vector<256xf32>
    %24 = vector.shape_cast %23 : vector<256xf32> to vector<1x256xf32>
    %25 = arith.addf %21, %24 : vector<1x256xf32>
    %c0_14 = arith.constant 0 : index
    %c0_15 = arith.constant 0 : index
    %26 = vector.load %arg7[%c0_14, %c0_15] : memref<256x8xf32, #tpu.memory_space<vmem>>, vector<256x8xf32>
    %cst_16 = arith.constant dense<0.000000e+00> : vector<1x8xf32>
    %27 = tpu.matmul %18, %26, %cst_16 {dimension_numbers = #tpu.dot_dimension_numbers<[1], [0], [0], [1], [0, 0, 1, 1], [], []>} : vector<1x256xf32>, vector<256x8xf32>, vector<1x8xf32> -> vector<1x8xf32>
    %cst_17 = arith.constant 6.37755089E-4 : f32
    %28 = vector.broadcast %cst_17 : f32 to vector<1x8xf32>
    %29 = arith.mulf %27, %28 : vector<1x8xf32>
    %cst_18 = arith.constant dense<0.000000e+00> : vector<1x8xf32>
    %30 = tpu.matmul %25, %26, %cst_18 {dimension_numbers = #tpu.dot_dimension_numbers<[1], [0], [0], [1], [0, 0, 1, 1], [], []>} : vector<1x256xf32>, vector<256x8xf32>, vector<1x8xf32> -> vector<1x8xf32>
    %cst_19 = arith.constant 6.37755089E-4 : f32
    %31 = vector.broadcast %cst_19 : f32 to vector<1x8xf32>
    %32 = arith.mulf %30, %31 : vector<1x8xf32>
    %33 = arith.mulf %29, %29 : vector<1x8xf32>
    %34 = arith.subf %32, %33 : vector<1x8xf32>
    %cst_20 = arith.constant 0.000000e+00 : f32
    %35 = vector.broadcast %cst_20 : f32 to vector<1x8xf32>
    %36 = arith.maximumf %34, %35 : vector<1x8xf32>
    %c0_21 = arith.constant 0 : index
    %c0_22 = arith.constant 0 : index
    %37 = vector.load %arg5[%c0_21, %c0_22] : memref<1x8xf32, #tpu.memory_space<vmem>>, vector<1x8xf32>
    %cst_23 = arith.constant 9.99999974E-6 : f32
    %38 = vector.broadcast %cst_23 : f32 to vector<1x8xf32>
    %39 = arith.addf %36, %38 : vector<1x8xf32>
    %40 = math.rsqrt %39 : vector<1x8xf32>
    %41 = arith.mulf %37, %40 : vector<1x8xf32>
    %c0_24 = arith.constant 0 : index
    %c0_25 = arith.constant 0 : index
    %42 = vector.load %arg6[%c0_24, %c0_25] : memref<1x8xf32, #tpu.memory_space<vmem>>, vector<1x8xf32>
    %43 = arith.mulf %29, %41 : vector<1x8xf32>
    %44 = arith.subf %42, %43 : vector<1x8xf32>
    %c0_26 = arith.constant 0 : index
    %c0_27 = arith.constant 0 : index
    %45 = vector.load %arg8[%c0_26, %c0_27] : memref<8x256xf32, #tpu.memory_space<vmem>>, vector<8x256xf32>
    %cst_28 = arith.constant dense<0.000000e+00> : vector<1x256xf32>
    %46 = tpu.matmul %41, %45, %cst_28 {dimension_numbers = #tpu.dot_dimension_numbers<[1], [0], [0], [1], [0, 0, 1, 1], [], []>} : vector<1x8xf32>, vector<8x256xf32>, vector<1x256xf32> -> vector<1x256xf32>
    %cst_29 = arith.constant dense<0.000000e+00> : vector<1x256xf32>
    %47 = tpu.matmul %44, %45, %cst_29 {dimension_numbers = #tpu.dot_dimension_numbers<[1], [0], [0], [1], [0, 0, 1, 1], [], []>} : vector<1x8xf32>, vector<8x256xf32>, vector<1x256xf32> -> vector<1x256xf32>
    %48 = vector.broadcast %46 : vector<1x256xf32> to vector<28x256xf32>
    %49 = arith.mulf %7, %48 : vector<28x256xf32>
    %50 = vector.broadcast %47 : vector<1x256xf32> to vector<28x256xf32>
    %51 = arith.addf %49, %50 : vector<28x256xf32>
    %52 = vector.broadcast %46 : vector<1x256xf32> to vector<28x256xf32>
    %53 = arith.mulf %13, %52 : vector<28x256xf32>
    %54 = vector.broadcast %47 : vector<1x256xf32> to vector<28x256xf32>
    %55 = arith.addf %53, %54 : vector<28x256xf32>
    %56 = arith.maximumf %51, %55 : vector<28x256xf32>
    %57 = vector.extract_strided_slice %56 {offsets = [0, 0], sizes = [28, 128], strides = [1, 1]} : vector<28x256xf32> to vector<28x128xf32>
    %58 = vector.extract_strided_slice %56 {offsets = [0, 128], sizes = [28, 128], strides = [1, 1]} : vector<28x256xf32> to vector<28x128xf32>
    %59 = arith.maximumf %57, %58 : vector<28x128xf32>
    %c0_30 = arith.constant 0 : index
    %c0_31 = arith.constant 0 : index
    %60 = vector.load %arg9[%c0_30, %c0_31] : memref<28x128xf32, #tpu.memory_space<vmem>>, vector<28x128xf32>
    tpu.vector_store %arg9[%c0_30, %c0_31], %59 {strides = array<i32>} : memref<28x128xf32, #tpu.memory_space<vmem>>, vector<28x128xf32>,
    return
  }
  func.func @transform_0(%arg0: i32) -> (i32, i32) {
    %c0_i32 = arith.constant 0 : i32
    %c0_i32_0 = arith.constant 0 : i32
    %c0_i32_1 = arith.constant 0 : i32
    return %c0_i32, %c0_i32_0 : i32, i32
  }
  func.func @transform_1(%arg0: i32) -> (i32, i32) {
    %c0_i32 = arith.constant 0 : i32
    %c0_i32_0 = arith.constant 0 : i32
    %c0_i32_1 = arith.constant 0 : i32
    return %c0_i32, %c0_i32_0 : i32, i32
  }
  func.func @transform_2(%arg0: i32) -> (i32, i32) {
    %c0_i32 = arith.constant 0 : i32
    %c0_i32_0 = arith.constant 0 : i32
    %c0_i32_1 = arith.constant 0 : i32
    return %c0_i32, %c0_i32_0 : i32, i32
  }
  func.func @transform_3(%arg0: i32) -> (i32, i32) {
    %c0_i32 = arith.constant 0 : i32
    %c0_i32_0 = arith.constant 0 : i32
    %c0_i32_1 = arith.constant 0 : i32
    return %c0_i32, %c0_i32_0 : i32, i32
  }
  func.func @transform_4(%arg0: i32) -> (i32, i32) {
    %c0_i32 = arith.constant 0 : i32
    %c0_i32_0 = arith.constant 0 : i32
    %c0_i32_1 = arith.constant 0 : i32
    return %c0_i32, %c0_i32_0 : i32, i32
  }
  func.func @transform_5(%arg0: i32) -> (i32, i32) {
    %c0_i32 = arith.constant 0 : i32
    %c0_i32_0 = arith.constant 0 : i32
    %c0_i32_1 = arith.constant 0 : i32
    return %c0_i32, %c0_i32_0 : i32, i32
  }
  func.func @transform_6(%arg0: i32) -> (i32, i32) {
    %c0_i32 = arith.constant 0 : i32
    %c0_i32_0 = arith.constant 0 : i32
    %c0_i32_1 = arith.constant 0 : i32
    return %c0_i32, %c0_i32_0 : i32, i32
  }
  func.func @transform_7(%arg0: i32) -> (i32, i32) {
    %c0_i32 = arith.constant 0 : i32
    %c0_i32_0 = arith.constant 0 : i32
    %c0_i32_1 = arith.constant 0 : i32
    return %c0_i32, %c0_i32_0 : i32, i32
  }
  func.func @transform_8(%arg0: i32) -> (i32, i32) {
    %c0_i32 = arith.constant 0 : i32
    %c0_i32_0 = arith.constant 0 : i32
    %c0_i32_1 = arith.constant 0 : i32
    return %c0_i32, %c0_i32_0 : i32, i32
  }
}

module attributes {stable_mosaic.version = 11 : i64} {
  func.func @_conv_stage_kernel(%arg0: i32, %arg1: memref<14x384xf32, #tpu.memory_space<vmem>>, %arg2: memref<14x384xf32, #tpu.memory_space<vmem>>, %arg3: memref<384x256xf32, #tpu.memory_space<vmem>>, %arg4: memref<1x256xf32, #tpu.memory_space<vmem>>, %arg5: memref<1x16xf32, #tpu.memory_space<vmem>>, %arg6: memref<1x16xf32, #tpu.memory_space<vmem>>, %arg7: memref<256x16xf32, #tpu.memory_space<vmem>>, %arg8: memref<16x256xf32, #tpu.memory_space<vmem>>, %arg9: memref<14x128xf32, #tpu.memory_space<vmem>>) attributes {dimension_semantics = [#tpu.dimension_semantics<arbitrary>], iteration_bounds = array<i64: 1>, scalar_prefetch = 0 : i64, scratch_operands = 0 : i64, tpu.core_type = #tpu.core_type<tc>, window_params = [{pipeline_mode = #tpu.pipeline_mode<synchronous>, transform_indices = @transform_0, window_bounds = array<i64: 14, 384>}, {pipeline_mode = #tpu.pipeline_mode<synchronous>, transform_indices = @transform_1, window_bounds = array<i64: 14, 384>}, {pipeline_mode = #tpu.pipeline_mode<synchronous>, transform_indices = @transform_2, window_bounds = array<i64: 384, 256>}, {pipeline_mode = #tpu.pipeline_mode<synchronous>, transform_indices = @transform_3, window_bounds = array<i64: 1, 256>}, {pipeline_mode = #tpu.pipeline_mode<synchronous>, transform_indices = @transform_4, window_bounds = array<i64: 1, 16>}, {pipeline_mode = #tpu.pipeline_mode<synchronous>, transform_indices = @transform_5, window_bounds = array<i64: 1, 16>}, {pipeline_mode = #tpu.pipeline_mode<synchronous>, transform_indices = @transform_6, window_bounds = array<i64: 256, 16>}, {pipeline_mode = #tpu.pipeline_mode<synchronous>, transform_indices = @transform_7, window_bounds = array<i64: 16, 256>}, {pipeline_mode = #tpu.pipeline_mode<synchronous>, transform_indices = @transform_8, window_bounds = array<i64: 14, 128>}]} {
    %c0 = arith.constant 0 : index
    %c0_0 = arith.constant 0 : index
    %0 = vector.load %arg3[%c0, %c0_0] : memref<384x256xf32, #tpu.memory_space<vmem>>, vector<384x256xf32>
    %c0_1 = arith.constant 0 : index
    %c0_2 = arith.constant 0 : index
    %1 = vector.load %arg4[%c0_1, %c0_2] : memref<1x256xf32, #tpu.memory_space<vmem>>, vector<1x256xf32>
    %c0_3 = arith.constant 0 : index
    %c0_4 = arith.constant 0 : index
    %2 = vector.load %arg1[%c0_3, %c0_4] : memref<14x384xf32, #tpu.memory_space<vmem>>, vector<14x384xf32>
    %cst = arith.constant dense<0.000000e+00> : vector<14x256xf32>
    %3 = tpu.matmul %2, %0, %cst {dimension_numbers = #tpu.dot_dimension_numbers<[1], [0], [0], [1], [0, 0, 1, 1], [], []>} : vector<14x384xf32>, vector<384x256xf32>, vector<14x256xf32> -> vector<14x256xf32>
    %4 = vector.broadcast %1 : vector<1x256xf32> to vector<14x256xf32>
    %5 = arith.addf %3, %4 : vector<14x256xf32>
    %cst_5 = arith.constant 0.000000e+00 : f32
    %6 = vector.broadcast %cst_5 : f32 to vector<14x256xf32>
    %7 = arith.maximumf %5, %6 : vector<14x256xf32>
    %c0_6 = arith.constant 0 : index
    %c0_7 = arith.constant 0 : index
    %8 = vector.load %arg2[%c0_6, %c0_7] : memref<14x384xf32, #tpu.memory_space<vmem>>, vector<14x384xf32>
    %cst_8 = arith.constant dense<0.000000e+00> : vector<14x256xf32>
    %9 = tpu.matmul %8, %0, %cst_8 {dimension_numbers = #tpu.dot_dimension_numbers<[1], [0], [0], [1], [0, 0, 1, 1], [], []>} : vector<14x384xf32>, vector<384x256xf32>, vector<14x256xf32> -> vector<14x256xf32>
    %10 = vector.broadcast %1 : vector<1x256xf32> to vector<14x256xf32>
    %11 = arith.addf %9, %10 : vector<14x256xf32>
    %cst_9 = arith.constant 0.000000e+00 : f32
    %12 = vector.broadcast %cst_9 : f32 to vector<14x256xf32>
    %13 = arith.maximumf %11, %12 : vector<14x256xf32>
    %cst_10 = arith.constant dense<0.000000e+00> : vector<256xf32>
    %14 = vector.multi_reduction <add>, %7, %cst_10 [0] : vector<14x256xf32> to vector<256xf32>
    %15 = vector.shape_cast %14 : vector<256xf32> to vector<1x256xf32>
    %cst_11 = arith.constant dense<0.000000e+00> : vector<256xf32>
    %16 = vector.multi_reduction <add>, %13, %cst_11 [0] : vector<14x256xf32> to vector<256xf32>
    %17 = vector.shape_cast %16 : vector<256xf32> to vector<1x256xf32>
    %18 = arith.addf %15, %17 : vector<1x256xf32>
    %19 = arith.mulf %7, %7 : vector<14x256xf32>
    %cst_12 = arith.constant dense<0.000000e+00> : vector<256xf32>
    %20 = vector.multi_reduction <add>, %19, %cst_12 [0] : vector<14x256xf32> to vector<256xf32>
    %21 = vector.shape_cast %20 : vector<256xf32> to vector<1x256xf32>
    %22 = arith.mulf %13, %13 : vector<14x256xf32>
    %cst_13 = arith.constant dense<0.000000e+00> : vector<256xf32>
    %23 = vector.multi_reduction <add>, %22, %cst_13 [0] : vector<14x256xf32> to vector<256xf32>
    %24 = vector.shape_cast %23 : vector<256xf32> to vector<1x256xf32>
    %25 = arith.addf %21, %24 : vector<1x256xf32>
    %c0_14 = arith.constant 0 : index
    %c0_15 = arith.constant 0 : index
    %26 = vector.load %arg7[%c0_14, %c0_15] : memref<256x16xf32, #tpu.memory_space<vmem>>, vector<256x16xf32>
    %cst_16 = arith.constant dense<0.000000e+00> : vector<1x16xf32>
    %27 = tpu.matmul %18, %26, %cst_16 {dimension_numbers = #tpu.dot_dimension_numbers<[1], [0], [0], [1], [0, 0, 1, 1], [], []>} : vector<1x256xf32>, vector<256x16xf32>, vector<1x16xf32> -> vector<1x16xf32>
    %cst_17 = arith.constant 0.00255102036 : f32
    %28 = vector.broadcast %cst_17 : f32 to vector<1x16xf32>
    %29 = arith.mulf %27, %28 : vector<1x16xf32>
    %cst_18 = arith.constant dense<0.000000e+00> : vector<1x16xf32>
    %30 = tpu.matmul %25, %26, %cst_18 {dimension_numbers = #tpu.dot_dimension_numbers<[1], [0], [0], [1], [0, 0, 1, 1], [], []>} : vector<1x256xf32>, vector<256x16xf32>, vector<1x16xf32> -> vector<1x16xf32>
    %cst_19 = arith.constant 0.00255102036 : f32
    %31 = vector.broadcast %cst_19 : f32 to vector<1x16xf32>
    %32 = arith.mulf %30, %31 : vector<1x16xf32>
    %33 = arith.mulf %29, %29 : vector<1x16xf32>
    %34 = arith.subf %32, %33 : vector<1x16xf32>
    %cst_20 = arith.constant 0.000000e+00 : f32
    %35 = vector.broadcast %cst_20 : f32 to vector<1x16xf32>
    %36 = arith.maximumf %34, %35 : vector<1x16xf32>
    %c0_21 = arith.constant 0 : index
    %c0_22 = arith.constant 0 : index
    %37 = vector.load %arg5[%c0_21, %c0_22] : memref<1x16xf32, #tpu.memory_space<vmem>>, vector<1x16xf32>
    %cst_23 = arith.constant 9.99999974E-6 : f32
    %38 = vector.broadcast %cst_23 : f32 to vector<1x16xf32>
    %39 = arith.addf %36, %38 : vector<1x16xf32>
    %40 = math.rsqrt %39 : vector<1x16xf32>
    %41 = arith.mulf %37, %40 : vector<1x16xf32>
    %c0_24 = arith.constant 0 : index
    %c0_25 = arith.constant 0 : index
    %42 = vector.load %arg6[%c0_24, %c0_25] : memref<1x16xf32, #tpu.memory_space<vmem>>, vector<1x16xf32>
    %43 = arith.mulf %29, %41 : vector<1x16xf32>
    %44 = arith.subf %42, %43 : vector<1x16xf32>
    %c0_26 = arith.constant 0 : index
    %c0_27 = arith.constant 0 : index
    %45 = vector.load %arg8[%c0_26, %c0_27] : memref<16x256xf32, #tpu.memory_space<vmem>>, vector<16x256xf32>
    %cst_28 = arith.constant dense<0.000000e+00> : vector<1x256xf32>
    %46 = tpu.matmul %41, %45, %cst_28 {dimension_numbers = #tpu.dot_dimension_numbers<[1], [0], [0], [1], [0, 0, 1, 1], [], []>} : vector<1x16xf32>, vector<16x256xf32>, vector<1x256xf32> -> vector<1x256xf32>
    %cst_29 = arith.constant dense<0.000000e+00> : vector<1x256xf32>
    %47 = tpu.matmul %44, %45, %cst_29 {dimension_numbers = #tpu.dot_dimension_numbers<[1], [0], [0], [1], [0, 0, 1, 1], [], []>} : vector<1x16xf32>, vector<16x256xf32>, vector<1x256xf32> -> vector<1x256xf32>
    %48 = vector.broadcast %46 : vector<1x256xf32> to vector<14x256xf32>
    %49 = arith.mulf %7, %48 : vector<14x256xf32>
    %50 = vector.broadcast %47 : vector<1x256xf32> to vector<14x256xf32>
    %51 = arith.addf %49, %50 : vector<14x256xf32>
    %52 = vector.broadcast %46 : vector<1x256xf32> to vector<14x256xf32>
    %53 = arith.mulf %13, %52 : vector<14x256xf32>
    %54 = vector.broadcast %47 : vector<1x256xf32> to vector<14x256xf32>
    %55 = arith.addf %53, %54 : vector<14x256xf32>
    %56 = arith.maximumf %51, %55 : vector<14x256xf32>
    %57 = vector.extract_strided_slice %56 {offsets = [0, 0], sizes = [14, 128], strides = [1, 1]} : vector<14x256xf32> to vector<14x128xf32>
    %58 = vector.extract_strided_slice %56 {offsets = [0, 128], sizes = [14, 128], strides = [1, 1]} : vector<14x256xf32> to vector<14x128xf32>
    %59 = arith.maximumf %57, %58 : vector<14x128xf32>
    %c0_30 = arith.constant 0 : index
    %c0_31 = arith.constant 0 : index
    %60 = vector.load %arg9[%c0_30, %c0_31] : memref<14x128xf32, #tpu.memory_space<vmem>>, vector<14x128xf32>
    tpu.vector_store %arg9[%c0_30, %c0_31], %59 {strides = array<i32>} : memref<14x128xf32, #tpu.memory_space<vmem>>, vector<14x128xf32>,
    return
  }
  func.func @transform_0(%arg0: i32) -> (i32, i32) {
    %c0_i32 = arith.constant 0 : i32
    %c0_i32_0 = arith.constant 0 : i32
    %c0_i32_1 = arith.constant 0 : i32
    return %c0_i32, %c0_i32_0 : i32, i32
  }
  func.func @transform_1(%arg0: i32) -> (i32, i32) {
    %c0_i32 = arith.constant 0 : i32
    %c0_i32_0 = arith.constant 0 : i32
    %c0_i32_1 = arith.constant 0 : i32
    return %c0_i32, %c0_i32_0 : i32, i32
  }
  func.func @transform_2(%arg0: i32) -> (i32, i32) {
    %c0_i32 = arith.constant 0 : i32
    %c0_i32_0 = arith.constant 0 : i32
    %c0_i32_1 = arith.constant 0 : i32
    return %c0_i32, %c0_i32_0 : i32, i32
  }
  func.func @transform_3(%arg0: i32) -> (i32, i32) {
    %c0_i32 = arith.constant 0 : i32
    %c0_i32_0 = arith.constant 0 : i32
    %c0_i32_1 = arith.constant 0 : i32
    return %c0_i32, %c0_i32_0 : i32, i32
  }
  func.func @transform_4(%arg0: i32) -> (i32, i32) {
    %c0_i32 = arith.constant 0 : i32
    %c0_i32_0 = arith.constant 0 : i32
    %c0_i32_1 = arith.constant 0 : i32
    return %c0_i32, %c0_i32_0 : i32, i32
  }
  func.func @transform_5(%arg0: i32) -> (i32, i32) {
    %c0_i32 = arith.constant 0 : i32
    %c0_i32_0 = arith.constant 0 : i32
    %c0_i32_1 = arith.constant 0 : i32
    return %c0_i32, %c0_i32_0 : i32, i32
  }
  func.func @transform_6(%arg0: i32) -> (i32, i32) {
    %c0_i32 = arith.constant 0 : i32
    %c0_i32_0 = arith.constant 0 : i32
    %c0_i32_1 = arith.constant 0 : i32
    return %c0_i32, %c0_i32_0 : i32, i32
  }
  func.func @transform_7(%arg0: i32) -> (i32, i32) {
    %c0_i32 = arith.constant 0 : i32
    %c0_i32_0 = arith.constant 0 : i32
    %c0_i32_1 = arith.constant 0 : i32
    return %c0_i32, %c0_i32_0 : i32, i32
  }
  func.func @transform_8(%arg0: i32) -> (i32, i32) {
    %c0_i32 = arith.constant 0 : i32
    %c0_i32_0 = arith.constant 0 : i32
    %c0_i32_1 = arith.constant 0 : i32
    return %c0_i32, %c0_i32_0 : i32, i32
  }
}

module attributes {stable_mosaic.version = 11 : i64} {
  func.func @_conv_stage_kernel(%arg0: i32, %arg1: memref<6x432xf32, #tpu.memory_space<vmem>>, %arg2: memref<6x432xf32, #tpu.memory_space<vmem>>, %arg3: memref<2x432xf32, #tpu.memory_space<vmem>>, %arg4: memref<432x288xf32, #tpu.memory_space<vmem>>, %arg5: memref<1x288xf32, #tpu.memory_space<vmem>>, %arg6: memref<1x32xf32, #tpu.memory_space<vmem>>, %arg7: memref<1x32xf32, #tpu.memory_space<vmem>>, %arg8: memref<288x32xf32, #tpu.memory_space<vmem>>, %arg9: memref<32x288xf32, #tpu.memory_space<vmem>>, %arg10: memref<6x128xf32, #tpu.memory_space<vmem>>) attributes {dimension_semantics = [#tpu.dimension_semantics<arbitrary>], iteration_bounds = array<i64: 1>, scalar_prefetch = 0 : i64, scratch_operands = 0 : i64, tpu.core_type = #tpu.core_type<tc>, window_params = [{pipeline_mode = #tpu.pipeline_mode<synchronous>, transform_indices = @transform_0, window_bounds = array<i64: 6, 432>}, {pipeline_mode = #tpu.pipeline_mode<synchronous>, transform_indices = @transform_1, window_bounds = array<i64: 6, 432>}, {pipeline_mode = #tpu.pipeline_mode<synchronous>, transform_indices = @transform_2, window_bounds = array<i64: 2, 432>}, {pipeline_mode = #tpu.pipeline_mode<synchronous>, transform_indices = @transform_3, window_bounds = array<i64: 432, 288>}, {pipeline_mode = #tpu.pipeline_mode<synchronous>, transform_indices = @transform_4, window_bounds = array<i64: 1, 288>}, {pipeline_mode = #tpu.pipeline_mode<synchronous>, transform_indices = @transform_5, window_bounds = array<i64: 1, 32>}, {pipeline_mode = #tpu.pipeline_mode<synchronous>, transform_indices = @transform_6, window_bounds = array<i64: 1, 32>}, {pipeline_mode = #tpu.pipeline_mode<synchronous>, transform_indices = @transform_7, window_bounds = array<i64: 288, 32>}, {pipeline_mode = #tpu.pipeline_mode<synchronous>, transform_indices = @transform_8, window_bounds = array<i64: 32, 288>}, {pipeline_mode = #tpu.pipeline_mode<synchronous>, transform_indices = @transform_9, window_bounds = array<i64: 6, 128>}]} {
    %c0 = arith.constant 0 : index
    %c0_0 = arith.constant 0 : index
    %0 = vector.load %arg4[%c0, %c0_0] : memref<432x288xf32, #tpu.memory_space<vmem>>, vector<432x288xf32>
    %c0_1 = arith.constant 0 : index
    %c0_2 = arith.constant 0 : index
    %1 = vector.load %arg5[%c0_1, %c0_2] : memref<1x288xf32, #tpu.memory_space<vmem>>, vector<1x288xf32>
    %c0_3 = arith.constant 0 : index
    %c0_4 = arith.constant 0 : index
    %2 = vector.load %arg1[%c0_3, %c0_4] : memref<6x432xf32, #tpu.memory_space<vmem>>, vector<6x432xf32>
    %cst = arith.constant dense<0.000000e+00> : vector<6x288xf32>
    %3 = tpu.matmul %2, %0, %cst {dimension_numbers = #tpu.dot_dimension_numbers<[1], [0], [0], [1], [0, 0, 1, 1], [], []>} : vector<6x432xf32>, vector<432x288xf32>, vector<6x288xf32> -> vector<6x288xf32>
    %4 = vector.broadcast %1 : vector<1x288xf32> to vector<6x288xf32>
    %5 = arith.addf %3, %4 : vector<6x288xf32>
    %cst_5 = arith.constant 0.000000e+00 : f32
    %6 = vector.broadcast %cst_5 : f32 to vector<6x288xf32>
    %7 = arith.maximumf %5, %6 : vector<6x288xf32>
    %c0_6 = arith.constant 0 : index
    %c0_7 = arith.constant 0 : index
    %8 = vector.load %arg2[%c0_6, %c0_7] : memref<6x432xf32, #tpu.memory_space<vmem>>, vector<6x432xf32>
    %cst_8 = arith.constant dense<0.000000e+00> : vector<6x288xf32>
    %9 = tpu.matmul %8, %0, %cst_8 {dimension_numbers = #tpu.dot_dimension_numbers<[1], [0], [0], [1], [0, 0, 1, 1], [], []>} : vector<6x432xf32>, vector<432x288xf32>, vector<6x288xf32> -> vector<6x288xf32>
    %10 = vector.broadcast %1 : vector<1x288xf32> to vector<6x288xf32>
    %11 = arith.addf %9, %10 : vector<6x288xf32>
    %cst_9 = arith.constant 0.000000e+00 : f32
    %12 = vector.broadcast %cst_9 : f32 to vector<6x288xf32>
    %13 = arith.maximumf %11, %12 : vector<6x288xf32>
    %cst_10 = arith.constant dense<0.000000e+00> : vector<288xf32>
    %14 = vector.multi_reduction <add>, %7, %cst_10 [0] : vector<6x288xf32> to vector<288xf32>
    %15 = vector.shape_cast %14 : vector<288xf32> to vector<1x288xf32>
    %cst_11 = arith.constant dense<0.000000e+00> : vector<288xf32>
    %16 = vector.multi_reduction <add>, %13, %cst_11 [0] : vector<6x288xf32> to vector<288xf32>
    %17 = vector.shape_cast %16 : vector<288xf32> to vector<1x288xf32>
    %18 = arith.addf %15, %17 : vector<1x288xf32>
    %19 = arith.mulf %7, %7 : vector<6x288xf32>
    %cst_12 = arith.constant dense<0.000000e+00> : vector<288xf32>
    %20 = vector.multi_reduction <add>, %19, %cst_12 [0] : vector<6x288xf32> to vector<288xf32>
    %21 = vector.shape_cast %20 : vector<288xf32> to vector<1x288xf32>
    %22 = arith.mulf %13, %13 : vector<6x288xf32>
    %cst_13 = arith.constant dense<0.000000e+00> : vector<288xf32>
    %23 = vector.multi_reduction <add>, %22, %cst_13 [0] : vector<6x288xf32> to vector<288xf32>
    %24 = vector.shape_cast %23 : vector<288xf32> to vector<1x288xf32>
    %25 = arith.addf %21, %24 : vector<1x288xf32>
    %c0_14 = arith.constant 0 : index
    %c0_15 = arith.constant 0 : index
    %26 = vector.load %arg3[%c0_14, %c0_15] : memref<2x432xf32, #tpu.memory_space<vmem>>, vector<2x432xf32>
    %cst_16 = arith.constant dense<0.000000e+00> : vector<2x288xf32>
    %27 = tpu.matmul %26, %0, %cst_16 {dimension_numbers = #tpu.dot_dimension_numbers<[1], [0], [0], [1], [0, 0, 1, 1], [], []>} : vector<2x432xf32>, vector<432x288xf32>, vector<2x288xf32> -> vector<2x288xf32>
    %28 = vector.broadcast %1 : vector<1x288xf32> to vector<2x288xf32>
    %29 = arith.addf %27, %28 : vector<2x288xf32>
    %cst_17 = arith.constant 0.000000e+00 : f32
    %30 = vector.broadcast %cst_17 : f32 to vector<2x288xf32>
    %31 = arith.maximumf %29, %30 : vector<2x288xf32>
    %cst_18 = arith.constant dense<0.000000e+00> : vector<288xf32>
    %32 = vector.multi_reduction <add>, %31, %cst_18 [0] : vector<2x288xf32> to vector<288xf32>
    %33 = vector.shape_cast %32 : vector<288xf32> to vector<1x288xf32>
    %34 = arith.addf %18, %33 : vector<1x288xf32>
    %35 = arith.mulf %31, %31 : vector<2x288xf32>
    %cst_19 = arith.constant dense<0.000000e+00> : vector<288xf32>
    %36 = vector.multi_reduction <add>, %35, %cst_19 [0] : vector<2x288xf32> to vector<288xf32>
    %37 = vector.shape_cast %36 : vector<288xf32> to vector<1x288xf32>
    %38 = arith.addf %25, %37 : vector<1x288xf32>
    %c0_20 = arith.constant 0 : index
    %c0_21 = arith.constant 0 : index
    %39 = vector.load %arg8[%c0_20, %c0_21] : memref<288x32xf32, #tpu.memory_space<vmem>>, vector<288x32xf32>
    %cst_22 = arith.constant dense<0.000000e+00> : vector<1x32xf32>
    %40 = tpu.matmul %34, %39, %cst_22 {dimension_numbers = #tpu.dot_dimension_numbers<[1], [0], [0], [1], [0, 0, 1, 1], [], []>} : vector<1x288xf32>, vector<288x32xf32>, vector<1x32xf32> -> vector<1x32xf32>
    %cst_23 = arith.constant 0.0102040814 : f32
    %41 = vector.broadcast %cst_23 : f32 to vector<1x32xf32>
    %42 = arith.mulf %40, %41 : vector<1x32xf32>
    %cst_24 = arith.constant dense<0.000000e+00> : vector<1x32xf32>
    %43 = tpu.matmul %38, %39, %cst_24 {dimension_numbers = #tpu.dot_dimension_numbers<[1], [0], [0], [1], [0, 0, 1, 1], [], []>} : vector<1x288xf32>, vector<288x32xf32>, vector<1x32xf32> -> vector<1x32xf32>
    %cst_25 = arith.constant 0.0102040814 : f32
    %44 = vector.broadcast %cst_25 : f32 to vector<1x32xf32>
    %45 = arith.mulf %43, %44 : vector<1x32xf32>
    %46 = arith.mulf %42, %42 : vector<1x32xf32>
    %47 = arith.subf %45, %46 : vector<1x32xf32>
    %cst_26 = arith.constant 0.000000e+00 : f32
    %48 = vector.broadcast %cst_26 : f32 to vector<1x32xf32>
    %49 = arith.maximumf %47, %48 : vector<1x32xf32>
    %c0_27 = arith.constant 0 : index
    %c0_28 = arith.constant 0 : index
    %50 = vector.load %arg6[%c0_27, %c0_28] : memref<1x32xf32, #tpu.memory_space<vmem>>, vector<1x32xf32>
    %cst_29 = arith.constant 9.99999974E-6 : f32
    %51 = vector.broadcast %cst_29 : f32 to vector<1x32xf32>
    %52 = arith.addf %49, %51 : vector<1x32xf32>
    %53 = math.rsqrt %52 : vector<1x32xf32>
    %54 = arith.mulf %50, %53 : vector<1x32xf32>
    %c0_30 = arith.constant 0 : index
    %c0_31 = arith.constant 0 : index
    %55 = vector.load %arg7[%c0_30, %c0_31] : memref<1x32xf32, #tpu.memory_space<vmem>>, vector<1x32xf32>
    %56 = arith.mulf %42, %54 : vector<1x32xf32>
    %57 = arith.subf %55, %56 : vector<1x32xf32>
    %c0_32 = arith.constant 0 : index
    %c0_33 = arith.constant 0 : index
    %58 = vector.load %arg9[%c0_32, %c0_33] : memref<32x288xf32, #tpu.memory_space<vmem>>, vector<32x288xf32>
    %cst_34 = arith.constant dense<0.000000e+00> : vector<1x288xf32>
    %59 = tpu.matmul %54, %58, %cst_34 {dimension_numbers = #tpu.dot_dimension_numbers<[1], [0], [0], [1], [0, 0, 1, 1], [], []>} : vector<1x32xf32>, vector<32x288xf32>, vector<1x288xf32> -> vector<1x288xf32>
    %cst_35 = arith.constant dense<0.000000e+00> : vector<1x288xf32>
    %60 = tpu.matmul %57, %58, %cst_35 {dimension_numbers = #tpu.dot_dimension_numbers<[1], [0], [0], [1], [0, 0, 1, 1], [], []>} : vector<1x32xf32>, vector<32x288xf32>, vector<1x288xf32> -> vector<1x288xf32>
    %61 = vector.broadcast %59 : vector<1x288xf32> to vector<6x288xf32>
    %62 = arith.mulf %7, %61 : vector<6x288xf32>
    %63 = vector.broadcast %60 : vector<1x288xf32> to vector<6x288xf32>
    %64 = arith.addf %62, %63 : vector<6x288xf32>
    %65 = vector.broadcast %59 : vector<1x288xf32> to vector<6x288xf32>
    %66 = arith.mulf %13, %65 : vector<6x288xf32>
    %67 = vector.broadcast %60 : vector<1x288xf32> to vector<6x288xf32>
    %68 = arith.addf %66, %67 : vector<6x288xf32>
    %69 = arith.maximumf %64, %68 : vector<6x288xf32>
    %70 = vector.extract_strided_slice %69 {offsets = [0, 0], sizes = [6, 128], strides = [1, 1]} : vector<6x288xf32> to vector<6x128xf32>
    %71 = vector.extract_strided_slice %69 {offsets = [0, 128], sizes = [6, 128], strides = [1, 1]} : vector<6x288xf32> to vector<6x128xf32>
    %72 = arith.maximumf %70, %71 : vector<6x128xf32>
    %c0_36 = arith.constant 0 : index
    %c0_37 = arith.constant 0 : index
    %73 = vector.load %arg10[%c0_36, %c0_37] : memref<6x128xf32, #tpu.memory_space<vmem>>, vector<6x128xf32>
    tpu.vector_store %arg10[%c0_36, %c0_37], %72 {strides = array<i32>} : memref<6x128xf32, #tpu.memory_space<vmem>>, vector<6x128xf32>,
    return
  }
  func.func @transform_0(%arg0: i32) -> (i32, i32) {
    %c0_i32 = arith.constant 0 : i32
    %c0_i32_0 = arith.constant 0 : i32
    %c0_i32_1 = arith.constant 0 : i32
    return %c0_i32, %c0_i32_0 : i32, i32
  }
  func.func @transform_1(%arg0: i32) -> (i32, i32) {
    %c0_i32 = arith.constant 0 : i32
    %c0_i32_0 = arith.constant 0 : i32
    %c0_i32_1 = arith.constant 0 : i32
    return %c0_i32, %c0_i32_0 : i32, i32
  }
  func.func @transform_2(%arg0: i32) -> (i32, i32) {
    %c0_i32 = arith.constant 0 : i32
    %c0_i32_0 = arith.constant 0 : i32
    %c0_i32_1 = arith.constant 0 : i32
    return %c0_i32, %c0_i32_0 : i32, i32
  }
  func.func @transform_3(%arg0: i32) -> (i32, i32) {
    %c0_i32 = arith.constant 0 : i32
    %c0_i32_0 = arith.constant 0 : i32
    %c0_i32_1 = arith.constant 0 : i32
    return %c0_i32, %c0_i32_0 : i32, i32
  }
  func.func @transform_4(%arg0: i32) -> (i32, i32) {
    %c0_i32 = arith.constant 0 : i32
    %c0_i32_0 = arith.constant 0 : i32
    %c0_i32_1 = arith.constant 0 : i32
    return %c0_i32, %c0_i32_0 : i32, i32
  }
  func.func @transform_5(%arg0: i32) -> (i32, i32) {
    %c0_i32 = arith.constant 0 : i32
    %c0_i32_0 = arith.constant 0 : i32
    %c0_i32_1 = arith.constant 0 : i32
    return %c0_i32, %c0_i32_0 : i32, i32
  }
  func.func @transform_6(%arg0: i32) -> (i32, i32) {
    %c0_i32 = arith.constant 0 : i32
    %c0_i32_0 = arith.constant 0 : i32
    %c0_i32_1 = arith.constant 0 : i32
    return %c0_i32, %c0_i32_0 : i32, i32
  }
  func.func @transform_7(%arg0: i32) -> (i32, i32) {
    %c0_i32 = arith.constant 0 : i32
    %c0_i32_0 = arith.constant 0 : i32
    %c0_i32_1 = arith.constant 0 : i32
    return %c0_i32, %c0_i32_0 : i32, i32
  }
  func.func @transform_8(%arg0: i32) -> (i32, i32) {
    %c0_i32 = arith.constant 0 : i32
    %c0_i32_0 = arith.constant 0 : i32
    %c0_i32_1 = arith.constant 0 : i32
    return %c0_i32, %c0_i32_0 : i32, i32
  }
  func.func @transform_9(%arg0: i32) -> (i32, i32) {
    %c0_i32 = arith.constant 0 : i32
    %c0_i32_0 = arith.constant 0 : i32
    %c0_i32_1 = arith.constant 0 : i32
    return %c0_i32, %c0_i32_0 : i32, i32
  }
}

module attributes {stable_mosaic.version = 11 : i64} {
  func.func @_head_kernel(%arg0: i32, %arg1: memref<2x288xf32, #tpu.memory_space<vmem>>, %arg2: memref<288x128xf32, #tpu.memory_space<vmem>>, %arg3: memref<1x128xf32, #tpu.memory_space<vmem>>, %arg4: memref<128x128xf32, #tpu.memory_space<vmem>>, %arg5: memref<1x128xf32, #tpu.memory_space<vmem>>, %arg6: memref<2x128xf32, #tpu.memory_space<vmem>>) attributes {dimension_semantics = [#tpu.dimension_semantics<arbitrary>], iteration_bounds = array<i64: 1>, scalar_prefetch = 0 : i64, scratch_operands = 0 : i64, tpu.core_type = #tpu.core_type<tc>, window_params = [{pipeline_mode = #tpu.pipeline_mode<synchronous>, transform_indices = @transform_0, window_bounds = array<i64: 2, 288>}, {pipeline_mode = #tpu.pipeline_mode<synchronous>, transform_indices = @transform_1, window_bounds = array<i64: 288, 128>}, {pipeline_mode = #tpu.pipeline_mode<synchronous>, transform_indices = @transform_2, window_bounds = array<i64: 1, 128>}, {pipeline_mode = #tpu.pipeline_mode<synchronous>, transform_indices = @transform_3, window_bounds = array<i64: 128, 128>}, {pipeline_mode = #tpu.pipeline_mode<synchronous>, transform_indices = @transform_4, window_bounds = array<i64: 1, 128>}, {pipeline_mode = #tpu.pipeline_mode<synchronous>, transform_indices = @transform_5, window_bounds = array<i64: 2, 128>}]} {
    %c0 = arith.constant 0 : index
    %c0_0 = arith.constant 0 : index
    %0 = vector.load %arg1[%c0, %c0_0] : memref<2x288xf32, #tpu.memory_space<vmem>>, vector<2x288xf32>
    %c0_1 = arith.constant 0 : index
    %c0_2 = arith.constant 0 : index
    %1 = vector.load %arg2[%c0_1, %c0_2] : memref<288x128xf32, #tpu.memory_space<vmem>>, vector<288x128xf32>
    %cst = arith.constant dense<0.000000e+00> : vector<2x128xf32>
    %2 = tpu.matmul %0, %1, %cst {dimension_numbers = #tpu.dot_dimension_numbers<[1], [0], [0], [1], [0, 0, 1, 1], [], []>} : vector<2x288xf32>, vector<288x128xf32>, vector<2x128xf32> -> vector<2x128xf32>
    %c0_3 = arith.constant 0 : index
    %c0_4 = arith.constant 0 : index
    %3 = vector.load %arg3[%c0_3, %c0_4] : memref<1x128xf32, #tpu.memory_space<vmem>>, vector<1x128xf32>
    %4 = vector.broadcast %3 : vector<1x128xf32> to vector<2x128xf32>
    %5 = arith.addf %2, %4 : vector<2x128xf32>
    %cst_5 = arith.constant 0.000000e+00 : f32
    %6 = vector.broadcast %cst_5 : f32 to vector<2x128xf32>
    %7 = arith.maximumf %5, %6 : vector<2x128xf32>
    %c0_6 = arith.constant 0 : index
    %c0_7 = arith.constant 0 : index
    %8 = vector.load %arg4[%c0_6, %c0_7] : memref<128x128xf32, #tpu.memory_space<vmem>>, vector<128x128xf32>
    %cst_8 = arith.constant dense<0.000000e+00> : vector<2x128xf32>
    %9 = tpu.matmul %7, %8, %cst_8 {dimension_numbers = #tpu.dot_dimension_numbers<[1], [0], [0], [1], [0, 0, 1, 1], [], []>} : vector<2x128xf32>, vector<128x128xf32>, vector<2x128xf32> -> vector<2x128xf32>
    %c0_9 = arith.constant 0 : index
    %c0_10 = arith.constant 0 : index
    %10 = vector.load %arg5[%c0_9, %c0_10] : memref<1x128xf32, #tpu.memory_space<vmem>>, vector<1x128xf32>
    %11 = vector.broadcast %10 : vector<1x128xf32> to vector<2x128xf32>
    %12 = arith.addf %9, %11 : vector<2x128xf32>
    %cst_11 = arith.constant dense<0xFF800000> : vector<2xf32>
    %13 = vector.multi_reduction <maximumf>, %12, %cst_11 [1] : vector<2x128xf32> to vector<2xf32>
    %14 = vector.shape_cast %13 : vector<2xf32> to vector<2x1xf32>
    %15 = vector.broadcast %14 : vector<2x1xf32> to vector<2x128xf32>
    %16 = arith.subf %12, %15 : vector<2x128xf32>
    %17 = math.exp %16 : vector<2x128xf32>
    %cst_12 = arith.constant dense<0.000000e+00> : vector<2xf32>
    %18 = vector.multi_reduction <add>, %17, %cst_12 [1] : vector<2x128xf32> to vector<2xf32>
    %19 = vector.shape_cast %18 : vector<2xf32> to vector<2x1xf32>
    %20 = math.log %19 : vector<2x1xf32>
    %21 = vector.broadcast %20 : vector<2x1xf32> to vector<2x128xf32>
    %22 = arith.subf %16, %21 : vector<2x128xf32>
    %c0_13 = arith.constant 0 : index
    %c0_14 = arith.constant 0 : index
    %23 = vector.load %arg6[%c0_13, %c0_14] : memref<2x128xf32, #tpu.memory_space<vmem>>, vector<2x128xf32>
    tpu.vector_store %arg6[%c0_13, %c0_14], %22 {strides = array<i32>} : memref<2x128xf32, #tpu.memory_space<vmem>>, vector<2x128xf32>,
    return
  }
  func.func @transform_0(%arg0: i32) -> (i32, i32) {
    %c0_i32 = arith.constant 0 : i32
    %c0_i32_0 = arith.constant 0 : i32
    %c0_i32_1 = arith.constant 0 : i32
    return %c0_i32, %c0_i32_0 : i32, i32
  }
  func.func @transform_1(%arg0: i32) -> (i32, i32) {
    %c0_i32 = arith.constant 0 : i32
    %c0_i32_0 = arith.constant 0 : i32
    %c0_i32_1 = arith.constant 0 : i32
    return %c0_i32, %c0_i32_0 : i32, i32
  }
  func.func @transform_2(%arg0: i32) -> (i32, i32) {
    %c0_i32 = arith.constant 0 : i32
    %c0_i32_0 = arith.constant 0 : i32
    %c0_i32_1 = arith.constant 0 : i32
    return %c0_i32, %c0_i32_0 : i32, i32
  }
  func.func @transform_3(%arg0: i32) -> (i32, i32) {
    %c0_i32 = arith.constant 0 : i32
    %c0_i32_0 = arith.constant 0 : i32
    %c0_i32_1 = arith.constant 0 : i32
    return %c0_i32, %c0_i32_0 : i32, i32
  }
  func.func @transform_4(%arg0: i32) -> (i32, i32) {
    %c0_i32 = arith.constant 0 : i32
    %c0_i32_0 = arith.constant 0 : i32
    %c0_i32_1 = arith.constant 0 : i32
    return %c0_i32, %c0_i32_0 : i32, i32
  }
  func.func @transform_5(%arg0: i32) -> (i32, i32) {
    %c0_i32 = arith.constant 0 : i32
    %c0_i32_0 = arith.constant 0 : i32
    %c0_i32_1 = arith.constant 0 : i32
    return %c0_i32, %c0_i32_0 : i32, i32
  }
}

</mosaic_0001>

<llo_original>
// kernel: forward.4
$region0: #{forward.4}
  #allocation0 [shape = 'u32[]', space=smem, size = 0x4, offset = 0x4, fixed_abs, tag = 'smem constant byte address 0x4 - core index']
  #allocation1 [shape = 'u32[72,128]{1,0:T(1,128)}', space=vmem, size = 0x9000, scoped, tag = 'internal scratch']
  %s0 = inlined_call_operand.vmem [shape: f32[28,90], index: 0, kind: input, shape index: {}]
  %s1 = inlined_call_operand.vmem [shape: f32[28,90], index: 1, kind: input, shape index: {}]
  %s2 = inlined_call_operand.vmem [shape: f32[90,256], index: 2, kind: input, shape index: {}]
  %s3 = inlined_call_operand.vmem [shape: f32[1,256], index: 3, kind: input, shape index: {}]
  %s4 = inlined_call_operand.vmem [shape: f32[1,8], index: 4, kind: input, shape index: {}]
  %s5 = inlined_call_operand.vmem [shape: f32[1,8], index: 5, kind: input, shape index: {}]
  %s6 = inlined_call_operand.vmem [shape: f32[256,8], index: 6, kind: input, shape index: {}]
  %s7 = inlined_call_operand.vmem [shape: f32[8,256], index: 7, kind: input, shape index: {}]
  %s8 = inlined_call_operand.vmem [shape: f32[28,128], index: 8, kind: output, shape index: {}]
  %s9 = sld [smem:[#allocation0]]
  $region42: #{forward.4} parent=0
    _
  %s11 = ssub.s32 1, %s9
  %s12 = scalar_select 0, %s11, %s9
  // Predicated region
  $region2: #{forward.4} parent=0 // pred_check
    _
  $region3: #{forward.4} parent=0 // pred_check_branch
    %14 = sbr.rel (0) target = $region5
  $region4: #{forward.4} parent=0 // pred_region
    _
  $region5: #{forward.4} parent=0 // pred_fallthru
    _
  // Predicated region
  $region6: #{forward.4} parent=0 // pred_check
    _
  $region7: #{forward.4} parent=0 // pred_check_branch
    %16 = sbr.rel (0) target = $region9
  $region8: #{forward.4} parent=0 // pred_region
    _
  $region9: #{forward.4} parent=0 // pred_fallthru
    _
  // Predicated region
  $region10: #{forward.4} parent=0 // pred_check
    _
  $region11: #{forward.4} parent=0 // pred_check_branch
    %18 = sbr.rel (0) target = $region13
  $region12: #{forward.4} parent=0 // pred_region
    _
  $region13: #{forward.4} parent=0 // pred_fallthru
    _
  // Predicated region
  $region14: #{forward.4} parent=0 // pred_check
    _
  $region15: #{forward.4} parent=0 // pred_check_branch
    %20 = sbr.rel (0) target = $region17
  $region16: #{forward.4} parent=0 // pred_region
    _
  $region17: #{forward.4} parent=0 // pred_fallthru
    _
  // Predicated region
  $region18: #{forward.4} parent=0 // pred_check
    _
  $region19: #{forward.4} parent=0 // pred_check_branch
    %22 = sbr.rel (0) target = $region21
  $region20: #{forward.4} parent=0 // pred_region
    _
  $region21: #{forward.4} parent=0 // pred_fallthru
    _
  // Predicated region
  $region22: #{forward.4} parent=0 // pred_check
    _
  $region23: #{forward.4} parent=0 // pred_check_branch
    %24 = sbr.rel (0) target = $region25
  $region24: #{forward.4} parent=0 // pred_region
    _
  $region25: #{forward.4} parent=0 // pred_fallthru
    _
  // Predicated region
  $region26: #{forward.4} parent=0 // pred_check
    _
  $region27: #{forward.4} parent=0 // pred_check_branch
    %26 = sbr.rel (0) target = $region29
  $region28: #{forward.4} parent=0 // pred_region
    _
  $region29: #{forward.4} parent=0 // pred_fallthru
    _
  // Predicated region
  $region30: #{forward.4} parent=0 // pred_check
    _
  $region31: #{forward.4} parent=0 // pred_check_branch
    %28 = sbr.rel (0) target = $region33
  $region32: #{forward.4} parent=0 // pred_region
    _
  $region33: #{forward.4} parent=0 // pred_fallthru
    _
  %v29 = vld [vmem:[%s2] sm:$0xff]
  %v30 = vld [vmem:[%s2 + $0x8] sm:$0xff]
  %v31 = vld [vmem:[%s2 + $0x10] sm:$0xff]
  %v32 = vld [vmem:[%s2 + $0x18] sm:$0xff]
  %v33 = vld [vmem:[%s2 + $0x20] sm:$0xff]
  %v34 = vld [vmem:[%s2 + $0x28] sm:$0xff]
  %v35 = vld [vmem:[%s2 + $0x30] sm:$0xff]
  %v36 = vld [vmem:[%s2 + $0x38] sm:$0xff]
  %v37 = vld [vmem:[%s2 + $0x40] sm:$0xff]
  %v38 = vld [vmem:[%s2 + $0x48] sm:$0xff]
  %v39 = vld [vmem:[%s2 + $0x50] sm:$0xff]
  %v40 = vld [vmem:[%s2 + $0x58] sm:$0xff]
  %v41 = vld [vmem:[%s2 + $0x60] sm:$0xff]
  %v42 = vld [vmem:[%s2 + $0x68] sm:$0xff]
  %v43 = vld [vmem:[%s2 + $0x70] sm:$0xff]
  %v44 = vld [vmem:[%s2 + $0x78] sm:$0xff]
  %v45 = vld [vmem:[%s2 + $0x80] sm:$0xff]
  %v46 = vld [vmem:[%s2 + $0x88] sm:$0xff]
  %v47 = vld [vmem:[%s2 + $0x90] sm:$0xff]
  %v48 = vld [vmem:[%s2 + $0x98] sm:$0xff]
  %v49 = vld [vmem:[%s2 + $0xa0] sm:$0xff]
  %v50 = vld [vmem:[%s2 + $0xa8] sm:$0xff]
  %v51 = vld [vmem:[%s2 + $0xb0] sm:$0x3]
  %v52 = vld [vmem:[%s2 + $0xb8] sm:$0x3]
  %v53 = vld [vmem:[%s3] sm:$0x3]
  %v54 = vld [vmem:[%s0] sm:$0xff]
  %v55 = vld [vmem:[%s0 + $0x8] sm:$0xff]
  %v56 = vld [vmem:[%s0 + $0x10] sm:$0xff]
  %v57 = vld [vmem:[%s0 + $0x18] sm:$0xf]
  %v59 = vperm.slane %v53, 0
  %v60 = vperm.slane %v53, 1
  %vm63 = vcmask 736256
  %v65 = vsel %vm63, %v54, 0
  %v68 = vsel %vm63, %v55, 0
  %v71 = vsel %vm63, %v56, 0
  %v74 = vsel %vm63, %v57, 0
  %vm76 = vcmask 1041408
  %v78 = vsel %vm76, %v51, 0
  %v81 = vsel %vm76, %v52, 0
  %83 = vmatpush.msra.mxu0 0.0
  %84 = vmatpush.msra.mxu0 0.0
  %85 = vmatpush.msra.mxu0 0.0
  %86 = vmatpush.msra.mxu0 0.0
  %87 = vmatpush.msra.mxu0 %v78
  %88 = vmatpush.msra.mxu0 %v49
  %89 = vmatpush.msra.mxu0 %v47
  %90 = vmatpush.msra.mxu0 %v45
  %91 = vmatpush.msra.mxu0 %v43
  %92 = vmatpush.msra.mxu0 %v41
  %93 = vmatpush.msra.mxu0 %v39
  %94 = vmatpush.msra.mxu0 %v37
  %95 = vmatpush.msra.mxu0 %v35
  %96 = vmatpush.msra.mxu0 %v33
  %97 = vmatpush.msra.mxu0 %v31
  %98 = vmatpush.msra.mxu0 %v29
  %99 = vmatmul.f32.gmra.mxu0 %v65
  %v100 = vpop.f32.mrf.mxu0
  %v101 = vadd.f32 %v59, %v100
  %102 = vmatmul.f32.gmra.mxu0 %v68
  %v103 = vpop.f32.mrf.mxu0
  %v104 = vadd.f32 %v59, %v103
  %105 = vmatmul.f32.gmra.mxu0 %v71
  %v106 = vpop.f32.mrf.mxu0
  %v107 = vadd.f32 %v59, %v106
  %108 = vmatmul.f32.gmra.mxu0 %v74
  %v109 = vpop.f32.mrf.mxu0
  %v110 = vadd.f32 %v59, %v109
  %111 = vdwg.mxu0
  %112 = vmatpush.msra.mxu0 0.0
  %113 = vmatpush.msra.mxu0 0.0
  %114 = vmatpush.msra.mxu0 0.0
  %115 = vmatpush.msra.mxu0 0.0
  %116 = vmatpush.msra.mxu0 %v81
  %117 = vmatpush.msra.mxu0 %v50
  %118 = vmatpush.msra.mxu0 %v48
  %119 = vmatpush.msra.mxu0 %v46
  %120 = vmatpush.msra.mxu0 %v44
  %121 = vmatpush.msra.mxu0 %v42
  %122 = vmatpush.msra.mxu0 %v40
  %123 = vmatpush.msra.mxu0 %v38
  %124 = vmatpush.msra.mxu0 %v36
  %125 = vmatpush.msra.mxu0 %v34
  %126 = vmatpush.msra.mxu0 %v32
  %127 = vmatpush.msra.mxu0 %v30
  %128 = vmatmul.f32.gmra.mxu0 %v65
  %v129 = vpop.f32.mrf.mxu0
  %v130 = vadd.f32 %v60, %v129
  %131 = vmatmul.f32.gmra.mxu0 %v68
  %v132 = vpop.f32.mrf.mxu0
  %v133 = vadd.f32 %v60, %v132
  %134 = vmatmul.f32.gmra.mxu0 %v71
  %v135 = vpop.f32.mrf.mxu0
  %v136 = vadd.f32 %v60, %v135
  %137 = vmatmul.f32.gmra.mxu0 %v74
  %v138 = vpop.f32.mrf.mxu0
  %v139 = vadd.f32 %v60, %v138
  %140 = vdwg.mxu0
  %v141 = vmax.f32 %v101, 0.0
  %v142 = vmax.f32 %v130, 0.0
  %v143 = vmax.f32 %v104, 0.0
  %v144 = vmax.f32 %v133, 0.0
  %v145 = vmax.f32 %v107, 0.0
  %v146 = vmax.f32 %v136, 0.0
  %v147 = vmax.f32 %v110, 0.0
  %v148 = vmax.f32 %v139, 0.0
  %v149 = vld [vmem:[%s1] sm:$0xff]
  %v150 = vld [vmem:[%s1 + $0x8] sm:$0xff]
  %v151 = vld [vmem:[%s1 + $0x10] sm:$0xff]
  %v152 = vld [vmem:[%s1 + $0x18] sm:$0xf]
  %v154 = vsel %vm63, %v149, 0
  %v157 = vsel %vm63, %v150, 0
  %v160 = vsel %vm63, %v151, 0
  %v163 = vsel %vm63, %v152, 0
  %165 = vmatpush.msra.mxu0 0.0
  %166 = vmatpush.msra.mxu0 0.0
  %167 = vmatpush.msra.mxu0 0.0
  %168 = vmatpush.msra.mxu0 0.0
  %169 = vmatpush.msra.mxu0 %v78
  %170 = vmatpush.msra.mxu0 %v49
  %171 = vmatpush.msra.mxu0 %v47
  %172 = vmatpush.msra.mxu0 %v45
  %173 = vmatpush.msra.mxu0 %v43
  %174 = vmatpush.msra.mxu0 %v41
  %175 = vmatpush.msra.mxu0 %v39
  %176 = vmatpush.msra.mxu0 %v37
  %177 = vmatpush.msra.mxu0 %v35
  %178 = vmatpush.msra.mxu0 %v33
  %179 = vmatpush.msra.mxu0 %v31
  %180 = vmatpush.msra.mxu0 %v29
  %181 = vmatmul.f32.gmra.mxu0 %v154
  %v182 = vpop.f32.mrf.mxu0
  %v183 = vadd.f32 %v59, %v182
  %184 = vmatmul.f32.gmra.mxu0 %v157
  %v185 = vpop.f32.mrf.mxu0
  %v186 = vadd.f32 %v59, %v185
  %187 = vmatmul.f32.gmra.mxu0 %v160
  %v188 = vpop.f32.mrf.mxu0
  %v189 = vadd.f32 %v59, %v188
  %190 = vmatmul.f32.gmra.mxu0 %v163
  %v191 = vpop.f32.mrf.mxu0
  %v192 = vadd.f32 %v59, %v191
  %193 = vdwg.mxu0
  %194 = vmatpush.msra.mxu0 0.0
  %195 = vmatpush.msra.mxu0 0.0
  %196 = vmatpush.msra.mxu0 0.0
  %197 = vmatpush.msra.mxu0 0.0
  %198 = vmatpush.msra.mxu0 %v81
  %199 = vmatpush.msra.mxu0 %v50
  %200 = vmatpush.msra.mxu0 %v48
  %201 = vmatpush.msra.mxu0 %v46
  %202 = vmatpush.msra.mxu0 %v44
  %203 = vmatpush.msra.mxu0 %v42
  %204 = vmatpush.msra.mxu0 %v40
  %205 = vmatpush.msra.mxu0 %v38
  %206 = vmatpush.msra.mxu0 %v36
  %207 = vmatpush.msra.mxu0 %v34
  %208 = vmatpush.msra.mxu0 %v32
  %209 = vmatpush.msra.mxu0 %v30
  %210 = vmatmul.f32.gmra.mxu0 %v154
  %v211 = vpop.f32.mrf.mxu0
  %v212 = vadd.f32 %v60, %v211
  %213 = vmatmul.f32.gmra.mxu0 %v157
  %v214 = vpop.f32.mrf.mxu0
  %v215 = vadd.f32 %v60, %v214
  %216 = vmatmul.f32.gmra.mxu0 %v160
  %v217 = vpop.f32.mrf.mxu0
  %v218 = vadd.f32 %v60, %v217
  %219 = vmatmul.f32.gmra.mxu0 %v163
  %v220 = vpop.f32.mrf.mxu0
  %v221 = vadd.f32 %v60, %v220
  %222 = vdwg.mxu0
  %v223 = vmax.f32 %v183, 0.0
  %v224 = vmax.f32 %v212, 0.0
  %v225 = vmax.f32 %v186, 0.0
  %v226 = vmax.f32 %v215, 0.0
  %v227 = vmax.f32 %v189, 0.0
  %v228 = vmax.f32 %v218, 0.0
  %v229 = vmax.f32 %v192, 0.0
  %v230 = vmax.f32 %v221, 0.0
  %v231 = vadd.f32 %v141, %v143
  %v232 = vadd.f32 %v231, %v145
  %vm233 = vcmask 1043456
  %v234 = vsel %vm233, %v147, 0.0
  %v235 = vadd.f32 %v232, %v234
  %v236 = vrot.slane %v235, 4
  %v237 = vadd.f32 %v235, %v236
  %v238 = vrot.slane %v237, 2
  %v239 = vadd.f32 %v237, %v238
  %v240 = vrot.slane %v239, 1
  %v241 = vadd.f32 %v239, %v240
  %v242 = vadd.f32 %v142, %v144
  %v243 = vadd.f32 %v242, %v146
  %v244 = vsel %vm233, %v148, 0.0
  %v245 = vadd.f32 %v243, %v244
  %v246 = vrot.slane %v245, 4
  %v247 = vadd.f32 %v245, %v246
  %v248 = vrot.slane %v247, 2
  %v249 = vadd.f32 %v247, %v248
  %v250 = vrot.slane %v249, 1
  %v251 = vadd.f32 %v249, %v250
  %v252 = vadd.f32 %v223, %v225
  %v253 = vadd.f32 %v252, %v227
  %v254 = vsel %vm233, %v229, 0.0
  %v255 = vadd.f32 %v253, %v254
  %v256 = vrot.slane %v255, 4
  %v257 = vadd.f32 %v255, %v256
  %v258 = vrot.slane %v257, 2
  %v259 = vadd.f32 %v257, %v258
  %v260 = vrot.slane %v259, 1
  %v261 = vadd.f32 %v259, %v260
  %v262 = vadd.f32 %v224, %v226
  %v263 = vadd.f32 %v262, %v228
  %v264 = vsel %vm233, %v230, 0.0
  %v265 = vadd.f32 %v263, %v264
  %v266 = vrot.slane %v265, 4
  %v267 = vadd.f32 %v265, %v266
  %v268 = vrot.slane %v267, 2
  %v269 = vadd.f32 %v267, %v268
  %v270 = vrot.slane %v269, 1
  %v271 = vadd.f32 %v269, %v270
  %v272 = vadd.f32 %v241, %v261
  %v273 = vadd.f32 %v251, %v271
  %v274 = vmul.f32 %v141, %v141
  %v275 = vmul.f32 %v142, %v142
  %v276 = vmul.f32 %v143, %v143
  %v277 = vmul.f32 %v144, %v144
  %v278 = vmul.f32 %v145, %v145
  %v279 = vmul.f32 %v146, %v146
  %v280 = vmul.f32 %v147, %v147
  %v281 = vmul.f32 %v148, %v148
  %v282 = vadd.f32 %v274, %v276
  %v283 = vadd.f32 %v282, %v278
  %v284 = vsel %vm233, %v280, 0.0
  %v285 = vadd.f32 %v283, %v284
  %v286 = vrot.slane %v285, 4
  %v287 = vadd.f32 %v285, %v286
  %v288 = vrot.slane %v287, 2
  %v289 = vadd.f32 %v287, %v288
  %v290 = vrot.slane %v289, 1
  %v291 = vadd.f32 %v289, %v290
  %v292 = vadd.f32 %v275, %v277
  %v293 = vadd.f32 %v292, %v279
  %v294 = vsel %vm233, %v281, 0.0
  %v295 = vadd.f32 %v293, %v294
  %v296 = vrot.slane %v295, 4
  %v297 = vadd.f32 %v295, %v296
  %v298 = vrot.slane %v297, 2
  %v299 = vadd.f32 %v297, %v298
  %v300 = vrot.slane %v299, 1
  %v301 = vadd.f32 %v299, %v300
  %v302 = vmul.f32 %v223, %v223
  %v303 = vmul.f32 %v224, %v224
  %v304 = vmul.f32 %v225, %v225
  %v305 = vmul.f32 %v226, %v226
  %v306 = vmul.f32 %v227, %v227
  %v307 = vmul.f32 %v228, %v228
  %v308 = vmul.f32 %v229, %v229
  %v309 = vmul.f32 %v230, %v230
  %v310 = vadd.f32 %v302, %v304
  %v311 = vadd.f32 %v310, %v306
  %v312 = vsel %vm233, %v308, 0.0
  %v313 = vadd.f32 %v311, %v312
  %v314 = vrot.slane %v313, 4
  %v315 = vadd.f32 %v313, %v314
  %v316 = vrot.slane %v315, 2
  %v317 = vadd.f32 %v315, %v316
  %v318 = vrot.slane %v317, 1
  %v319 = vadd.f32 %v317, %v318
  %v320 = vadd.f32 %v303, %v305
  %v321 = vadd.f32 %v320, %v307
  %v322 = vsel %vm233, %v309, 0.0
  %v323 = vadd.f32 %v321, %v322
  %v324 = vrot.slane %v323, 4
  %v325 = vadd.f32 %v323, %v324
  %v326 = vrot.slane %v325, 2
  %v327 = vadd.f32 %v325, %v326
  %v328 = vrot.slane %v327, 1
  %v329 = vadd.f32 %v327, %v328
  %v330 = vadd.f32 %v291, %v319
  %v331 = vadd.f32 %v301, %v329
  %v332 = vld [vmem:[%s6] sm:$0xff]
  %v333 = vld [vmem:[%s6 + $0x8] sm:$0xff]
  %v334 = vld [vmem:[%s6 + $0x10] sm:$0xff]
  %v335 = vld [vmem:[%s6 + $0x18] sm:$0xff]
  %v336 = vld [vmem:[%s6 + $0x20] sm:$0xff]
  %v337 = vld [vmem:[%s6 + $0x28] sm:$0xff]
  %v338 = vld [vmem:[%s6 + $0x30] sm:$0xff]
  %v339 = vld [vmem:[%s6 + $0x38] sm:$0xff]
  %v340 = vld [vmem:[%s6 + $0x40] sm:$0xff]
  %v341 = vld [vmem:[%s6 + $0x48] sm:$0xff]
  %v342 = vld [vmem:[%s6 + $0x50] sm:$0xff]
  %v343 = vld [vmem:[%s6 + $0x58] sm:$0xff]
  %v344 = vld [vmem:[%s6 + $0x60] sm:$0xff]
  %v345 = vld [vmem:[%s6 + $0x68] sm:$0xff]
  %v346 = vld [vmem:[%s6 + $0x70] sm:$0xff]
  %v347 = vld [vmem:[%s6 + $0x78] sm:$0xff]
  %v348 = vld [vmem:[%s6 + $0x80] sm:$0xff]
  %v349 = vld [vmem:[%s6 + $0x88] sm:$0xff]
  %v350 = vld [vmem:[%s6 + $0x90] sm:$0xff]
  %v351 = vld [vmem:[%s6 + $0x98] sm:$0xff]
  %v352 = vld [vmem:[%s6 + $0xa0] sm:$0xff]
  %v353 = vld [vmem:[%s6 + $0xa8] sm:$0xff]
  %v354 = vld [vmem:[%s6 + $0xb0] sm:$0xff]
  %v355 = vld [vmem:[%s6 + $0xb8] sm:$0xff]
  %v356 = vld [vmem:[%s6 + $0xc0] sm:$0xff]
  %v357 = vld [vmem:[%s6 + $0xc8] sm:$0xff]
  %v358 = vld [vmem:[%s6 + $0xd0] sm:$0xff]
  %v359 = vld [vmem:[%s6 + $0xd8] sm:$0xff]
  %v360 = vld [vmem:[%s6 + $0xe0] sm:$0xff]
  %v361 = vld [vmem:[%s6 + $0xe8] sm:$0xff]
  %v362 = vld [vmem:[%s6 + $0xf0] sm:$0xff]
  %v363 = vld [vmem:[%s6 + $0xf8] sm:$0xff]
  %364 = vmatpush.msra.mxu0 %v347
  %365 = vmatpush.msra.mxu0 %v346
  %366 = vmatpush.msra.mxu0 %v345
  %367 = vmatpush.msra.mxu0 %v344
  %368 = vmatpush.msra.mxu0 %v343
  %369 = vmatpush.msra.mxu0 %v342
  %370 = vmatpush.msra.mxu0 %v341
  %371 = vmatpush.msra.mxu0 %v340
  %372 = vmatpush.msra.mxu0 %v339
  %373 = vmatpush.msra.mxu0 %v338
  %374 = vmatpush.msra.mxu0 %v337
  %375 = vmatpush.msra.mxu0 %v336
  %376 = vmatpush.msra.mxu0 %v335
  %377 = vmatpush.msra.mxu0 %v334
  %378 = vmatpush.msra.mxu0 %v333
  %379 = vmatpush.msra.mxu0 %v332
  %380 = vmatmul.f32.gmra.mxu0 %v272
  %v381 = vpop.f32.mrf.mxu0
  %v382 = vadd.f32 0.0, %v381
  %383 = vdwg.mxu0
  %384 = vmatpush.msra.mxu0 %v363
  %385 = vmatpush.msra.mxu0 %v362
  %386 = vmatpush.msra.mxu0 %v361
  %387 = vmatpush.msra.mxu0 %v360
  %388 = vmatpush.msra.mxu0 %v359
  %389 = vmatpush.msra.mxu0 %v358
  %390 = vmatpush.msra.mxu0 %v357
  %391 = vmatpush.msra.mxu0 %v356
  %392 = vmatpush.msra.mxu0 %v355
  %393 = vmatpush.msra.mxu0 %v354
  %394 = vmatpush.msra.mxu0 %v353
  %395 = vmatpush.msra.mxu0 %v352
  %396 = vmatpush.msra.mxu0 %v351
  %397 = vmatpush.msra.mxu0 %v350
  %398 = vmatpush.msra.mxu0 %v349
  %399 = vmatpush.msra.mxu0 %v348
  %400 = vmatmul.f32.gmra.mxu0 %v273
  %v401 = vpop.f32.mrf.mxu0
  %v402 = vadd.f32 %v382, %v401
  %403 = vdwg.mxu0
  %v404 = vmul.f32 %v402, 0.0006377551
  %405 = vmatpush.msra.mxu0 %v347
  %406 = vmatpush.msra.mxu0 %v346
  %407 = vmatpush.msra.mxu0 %v345
  %408 = vmatpush.msra.mxu0 %v344
  %409 = vmatpush.msra.mxu0 %v343
  %410 = vmatpush.msra.mxu0 %v342
  %411 = vmatpush.msra.mxu0 %v341
  %412 = vmatpush.msra.mxu0 %v340
  %413 = vmatpush.msra.mxu0 %v339
  %414 = vmatpush.msra.mxu0 %v338
  %415 = vmatpush.msra.mxu0 %v337
  %416 = vmatpush.msra.mxu0 %v336
  %417 = vmatpush.msra.mxu0 %v335
  %418 = vmatpush.msra.mxu0 %v334
  %419 = vmatpush.msra.mxu0 %v333
  %420 = vmatpush.msra.mxu0 %v332
  %421 = vmatmul.f32.gmra.mxu0 %v330
  %v422 = vpop.f32.mrf.mxu0
  %v423 = vadd.f32 0.0, %v422
  %424 = vdwg.mxu0
  %425 = vmatpush.msra.mxu0 %v363
  %426 = vmatpush.msra.mxu0 %v362
  %427 = vmatpush.msra.mxu0 %v361
  %428 = vmatpush.msra.mxu0 %v360
  %429 = vmatpush.msra.mxu0 %v359
  %430 = vmatpush.msra.mxu0 %v358
  %431 = vmatpush.msra.mxu0 %v357
  %432 = vmatpush.msra.mxu0 %v356
  %433 = vmatpush.msra.mxu0 %v355
  %434 = vmatpush.msra.mxu0 %v354
  %435 = vmatpush.msra.mxu0 %v353
  %436 = vmatpush.msra.mxu0 %v352
  %437 = vmatpush.msra.mxu0 %v351
  %438 = vmatpush.msra.mxu0 %v350
  %439 = vmatpush.msra.mxu0 %v349
  %440 = vmatpush.msra.mxu0 %v348
  %441 = vmatmul.f32.gmra.mxu0 %v331
  %v442 = vpop.f32.mrf.mxu0
  %v443 = vadd.f32 %v423, %v442
  %444 = vdwg.mxu0
  %v445 = vmul.f32 %v443, 0.0006377551
  %v446 = vmul.f32 %v404, %v404
  %v447 = vsub.f32 %v445, %v446
  %v448 = vmax.f32 %v447, 0.0
  %v449 = vld [vmem:[%s4] sm:$0x1]
  %v450 = vadd.f32 %v448, 1e-05
  %v451 = vrsqrt.pop %v450
  %v452 = vmul.f32 %v451, %v450
  %v453 = vmul.f32 %v452, %v451
  %v454 = vmul.f32 0.5, %v453
  %v455 = vsub.f32 1.5, %v454
  %v456 = vmul.f32 %v451, %v455
  %vm457 = vweird.f32 %v450
  %vm458 = vweird.f32 %v451
  %vm459 = vmor %vm457, %vm458
  %v460 = vsel %vm459, %v451, %v456
  %v461 = vmul.f32 %v449, %v460
  %v462 = vld [vmem:[%s5] sm:$0x1]
  %v463 = vmul.f32 %v404, %v461
  %v464 = vsub.f32 %v462, %v463
  %v465 = vld [vmem:[%s7] sm:$0xff]
  %v466 = vld [vmem:[%s7 + $0x8] sm:$0xff]
  %vm467 = vcmask 64512
  %v469 = vsel %vm467, %v461, 0
  %471 = vmatpush.msra.mxu0 0.0
  %472 = vmatpush.msra.mxu0 0.0
  %473 = vmatpush.msra.mxu0 0.0
  %474 = vmatpush.msra.mxu0 0.0
  %475 = vmatpush.msra.mxu0 0.0
  %476 = vmatpush.msra.mxu0 0.0
  %477 = vmatpush.msra.mxu0 0.0
  %478 = vmatpush.msra.mxu0 0.0
  %479 = vmatpush.msra.mxu0 0.0
  %480 = vmatpush.msra.mxu0 0.0
  %481 = vmatpush.msra.mxu0 0.0
  %482 = vmatpush.msra.mxu0 0.0
  %483 = vmatpush.msra.mxu0 0.0
  %484 = vmatpush.msra.mxu0 0.0
  %485 = vmatpush.msra.mxu0 0.0
  %486 = vmatpush.msra.mxu0 %v465
  %487 = vmatmul.f32.gmra.mxu0 %v469
  %v488 = vpop.f32.mrf.mxu0
  %v489 = vadd.f32 0.0, %v488
  %490 = vdwg.mxu0
  %491 = vmatpush.msra.mxu0 0.0
  %492 = vmatpush.msra.mxu0 0.0
  %493 = vmatpush.msra.mxu0 0.0
  %494 = vmatpush.msra.mxu0 0.0
  %495 = vmatpush.msra.mxu0 0.0
  %496 = vmatpush.msra.mxu0 0.0
  %497 = vmatpush.msra.mxu0 0.0
  %498 = vmatpush.msra.mxu0 0.0
  %499 = vmatpush.msra.mxu0 0.0
  %500 = vmatpush.msra.mxu0 0.0
  %501 = vmatpush.msra.mxu0 0.0
  %502 = vmatpush.msra.mxu0 0.0
  %503 = vmatpush.msra.mxu0 0.0
  %504 = vmatpush.msra.mxu0 0.0
  %505 = vmatpush.msra.mxu0 0.0
  %506 = vmatpush.msra.mxu0 %v466
  %507 = vmatmul.f32.gmra.mxu0 %v469
  %v508 = vpop.f32.mrf.mxu0
  %v509 = vadd.f32 0.0, %v508
  %510 = vdwg.mxu0
  %v512 = vsel %vm467, %v464, 0
  %514 = vmatpush.msra.mxu0 0.0
  %515 = vmatpush.msra.mxu0 0.0
  %516 = vmatpush.msra.mxu0 0.0
  %517 = vmatpush.msra.mxu0 0.0
  %518 = vmatpush.msra.mxu0 0.0
  %519 = vmatpush.msra.mxu0 0.0
  %520 = vmatpush.msra.mxu0 0.0
  %521 = vmatpush.msra.mxu0 0.0
  %522 = vmatpush.msra.mxu0 0.0
  %523 = vmatpush.msra.mxu0 0.0
  %524 = vmatpush.msra.mxu0 0.0
  %525 = vmatpush.msra.mxu0 0.0
  %526 = vmatpush.msra.mxu0 0.0
  %527 = vmatpush.msra.mxu0 0.0
  %528 = vmatpush.msra.mxu0 0.0
  %529 = vmatpush.msra.mxu0 %v465
  %530 = vmatmul.f32.gmra.mxu0 %v512
  %v531 = vpop.f32.mrf.mxu0
  %v532 = vadd.f32 0.0, %v531
  %533 = vdwg.mxu0
  %534 = vmatpush.msra.mxu0 0.0
  %535 = vmatpush.msra.mxu0 0.0
  %536 = vmatpush.msra.mxu0 0.0
  %537 = vmatpush.msra.mxu0 0.0
  %538 = vmatpush.msra.mxu0 0.0
  %539 = vmatpush.msra.mxu0 0.0
  %540 = vmatpush.msra.mxu0 0.0
  %541 = vmatpush.msra.mxu0 0.0
  %542 = vmatpush.msra.mxu0 0.0
  %543 = vmatpush.msra.mxu0 0.0
  %544 = vmatpush.msra.mxu0 0.0
  %545 = vmatpush.msra.mxu0 0.0
  %546 = vmatpush.msra.mxu0 0.0
  %547 = vmatpush.msra.mxu0 0.0
  %548 = vmatpush.msra.mxu0 0.0
  %549 = vmatpush.msra.mxu0 %v466
  %550 = vmatmul.f32.gmra.mxu0 %v512
  %v551 = vpop.f32.mrf.mxu0
  %v552 = vadd.f32 0.0, %v551
  %553 = vdwg.mxu0
  %v554 = vperm.slane %v489, 0
  %v555 = vperm.slane %v509, 0
  %v556 = vmul.f32 %v141, %v554
  %v557 = vmul.f32 %v142, %v555
  %v558 = vmul.f32 %v143, %v554
  %v559 = vmul.f32 %v144, %v555
  %v560 = vmul.f32 %v145, %v554
  %v561 = vmul.f32 %v146, %v555
  %v562 = vmul.f32 %v147, %v554
  %v563 = vmul.f32 %v148, %v555
  %v564 = vperm.slane %v532, 0
  %v565 = vperm.slane %v552, 0
  %v566 = vadd.f32 %v556, %v564
  %v567 = vadd.f32 %v557, %v565
  %v568 = vadd.f32 %v558, %v564
  %v569 = vadd.f32 %v559, %v565
  %v570 = vadd.f32 %v560, %v564
  %v571 = vadd.f32 %v561, %v565
  %v572 = vadd.f32 %v562, %v564
  %v573 = vadd.f32 %v563, %v565
  %v574 = vmul.f32 %v223, %v554
  %v575 = vmul.f32 %v224, %v555
  %v576 = vmul.f32 %v225, %v554
  %v577 = vmul.f32 %v226, %v555
  %v578 = vmul.f32 %v227, %v554
  %v579 = vmul.f32 %v228, %v555
  %v580 = vmul.f32 %v229, %v554
  %v581 = vmul.f32 %v230, %v555
  %v582 = vadd.f32 %v574, %v564
  %v583 = vadd.f32 %v575, %v565
  %v584 = vadd.f32 %v576, %v564
  %v585 = vadd.f32 %v577, %v565
  %v586 = vadd.f32 %v578, %v564
  %v587 = vadd.f32 %v579, %v565
  %v588 = vadd.f32 %v580, %v564
  %v589 = vadd.f32 %v581, %v565
  %v590 = vmax.f32 %v566, %v582
  %v591 = vmax.f32 %v567, %v583
  %v592 = vmax.f32 %v568, %v584
  %v593 = vmax.f32 %v569, %v585
  %v594 = vmax.f32 %v570, %v586
  %v595 = vmax.f32 %v571, %v587
  %v596 = vmax.f32 %v572, %v588
  %v597 = vmax.f32 %v573, %v589
  %v598 = vmax.f32 %v590, %v591
  %v599 = vmax.f32 %v592, %v593
  %v600 = vmax.f32 %v594, %v595
  %v601 = vmax.f32 %v596, %v597
  %602 = vst [vmem:[%s8] sm:$0xff] %v598
  %603 = vst [vmem:[%s8 + $0x8] sm:$0xff] %v599
  %604 = vst [vmem:[%s8 + $0x10] sm:$0xff] %v600
  %605 = vst [vmem:[%s8 + $0x18] sm:$0xf] %v601
  // Predicated region
  $region34: #{forward.4} parent=0 // pred_check
    _
  $region35: #{forward.4} parent=0 // pred_check_branch
    %607 = sbr.rel (0) target = $region37
  $region36: #{forward.4} parent=0 // pred_region
    _
  $region37: #{forward.4} parent=0 // pred_fallthru
    _
  // Predicated region
  $region38: #{forward.4} parent=0 // pred_check
    _
  $region39: #{forward.4} parent=0 // pred_check_branch
    %609 = sbr.rel (0) target = $region41
  $region40: #{forward.4} parent=0 // pred_region
    _
  $region41: #{forward.4} parent=0 // pred_fallthru
    _

// kernel: forward.5
$region0: #{forward.5}
  #allocation0 [shape = 'u32[]', space=smem, size = 0x4, offset = 0x4, fixed_abs, tag = 'smem constant byte address 0x4 - core index']
  #allocation1 [shape = 'u32[72,128]{1,0:T(1,128)}', space=vmem, size = 0x9000, scoped, tag = 'internal scratch']
  %s0 = inlined_call_operand.vmem [shape: f32[14,384], index: 0, kind: input, shape index: {}]
  %s1 = inlined_call_operand.vmem [shape: f32[14,384], index: 1, kind: input, shape index: {}]
  %s2 = inlined_call_operand.vmem [shape: f32[384,256], index: 2, kind: input, shape index: {}]
  %s3 = inlined_call_operand.vmem [shape: f32[1,256], index: 3, kind: input, shape index: {}]
  %s4 = inlined_call_operand.vmem [shape: f32[1,16], index: 4, kind: input, shape index: {}]
  %s5 = inlined_call_operand.vmem [shape: f32[1,16], index: 5, kind: input, shape index: {}]
  %s6 = inlined_call_operand.vmem [shape: f32[256,16], index: 6, kind: input, shape index: {}]
  %s7 = inlined_call_operand.vmem [shape: f32[16,256], index: 7, kind: input, shape index: {}]
  %s8 = inlined_call_operand.vmem [shape: f32[14,128], index: 8, kind: output, shape index: {}]
  %s9 = sld [smem:[#allocation0]]
  $region42: #{forward.5} parent=0
    _
  %s11 = ssub.s32 1, %s9
  %s12 = scalar_select 0, %s11, %s9
  // Predicated region
  $region2: #{forward.5} parent=0 // pred_check
    _
  $region3: #{forward.5} parent=0 // pred_check_branch
    %14 = sbr.rel (0) target = $region5
  $region4: #{forward.5} parent=0 // pred_region
    _
  $region5: #{forward.5} parent=0 // pred_fallthru
    _
  // Predicated region
  $region6: #{forward.5} parent=0 // pred_check
    _
  $region7: #{forward.5} parent=0 // pred_check_branch
    %16 = sbr.rel (0) target = $region9
  $region8: #{forward.5} parent=0 // pred_region
    _
  $region9: #{forward.5} parent=0 // pred_fallthru
    _
  // Predicated region
  $region10: #{forward.5} parent=0 // pred_check
    _
  $region11: #{forward.5} parent=0 // pred_check_branch
    %18 = sbr.rel (0) target = $region13
  $region12: #{forward.5} parent=0 // pred_region
    _
  $region13: #{forward.5} parent=0 // pred_fallthru
    _
  // Predicated region
  $region14: #{forward.5} parent=0 // pred_check
    _
  $region15: #{forward.5} parent=0 // pred_check_branch
    %20 = sbr.rel (0) target = $region17
  $region16: #{forward.5} parent=0 // pred_region
    _
  $region17: #{forward.5} parent=0 // pred_fallthru
    _
  // Predicated region
  $region18: #{forward.5} parent=0 // pred_check
    _
  $region19: #{forward.5} parent=0 // pred_check_branch
    %22 = sbr.rel (0) target = $region21
  $region20: #{forward.5} parent=0 // pred_region
    _
  $region21: #{forward.5} parent=0 // pred_fallthru
    _
  // Predicated region
  $region22: #{forward.5} parent=0 // pred_check
    _
  $region23: #{forward.5} parent=0 // pred_check_branch
    %24 = sbr.rel (0) target = $region25
  $region24: #{forward.5} parent=0 // pred_region
    _
  $region25: #{forward.5} parent=0 // pred_fallthru
    _
  // Predicated region
  $region26: #{forward.5} parent=0 // pred_check
    _
  $region27: #{forward.5} parent=0 // pred_check_branch
    %26 = sbr.rel (0) target = $region29
  $region28: #{forward.5} parent=0 // pred_region
    _
  $region29: #{forward.5} parent=0 // pred_fallthru
    _
  // Predicated region
  $region30: #{forward.5} parent=0 // pred_check
    _
  $region31: #{forward.5} parent=0 // pred_check_branch
    %28 = sbr.rel (0) target = $region33
  $region32: #{forward.5} parent=0 // pred_region
    _
  $region33: #{forward.5} parent=0 // pred_fallthru
    _
  %v29 = vld [vmem:[%s2] sm:$0xff]
  %v30 = vld [vmem:[%s2 + $0x8] sm:$0xff]
  %v31 = vld [vmem:[%s2 + $0x10] sm:$0xff]
  %v32 = vld [vmem:[%s2 + $0x18] sm:$0xff]
  %v33 = vld [vmem:[%s2 + $0x20] sm:$0xff]
  %v34 = vld [vmem:[%s2 + $0x28] sm:$0xff]
  %v35 = vld [vmem:[%s2 + $0x30] sm:$0xff]
  %v36 = vld [vmem:[%s2 + $0x38] sm:$0xff]
  %v37 = vld [vmem:[%s2 + $0x40] sm:$0xff]
  %v38 = vld [vmem:[%s2 + $0x48] sm:$0xff]
  %v39 = vld [vmem:[%s2 + $0x50] sm:$0xff]
  %v40 = vld [vmem:[%s2 + $0x58] sm:$0xff]
  %v41 = vld [vmem:[%s2 + $0x60] sm:$0xff]
  %v42 = vld [vmem:[%s2 + $0x68] sm:$0xff]
  %v43 = vld [vmem:[%s2 + $0x70] sm:$0xff]
  %v44 = vld [vmem:[%s2 + $0x78] sm:$0xff]
  %v45 = vld [vmem:[%s2 + $0x80] sm:$0xff]
  %v46 = vld [vmem:[%s2 + $0x88] sm:$0xff]
  %v47 = vld [vmem:[%s2 + $0x90] sm:$0xff]
  %v48 = vld [vmem:[%s2 + $0x98] sm:$0xff]
  %v49 = vld [vmem:[%s2 + $0xa0] sm:$0xff]
  %v50 = vld [vmem:[%s2 + $0xa8] sm:$0xff]
  %v51 = vld [vmem:[%s2 + $0xb0] sm:$0xff]
  %v52 = vld [vmem:[%s2 + $0xb8] sm:$0xff]
  %v53 = vld [vmem:[%s2 + $0xc0] sm:$0xff]
  %v54 = vld [vmem:[%s2 + $0xc8] sm:$0xff]
  %v55 = vld [vmem:[%s2 + $0xd0] sm:$0xff]
  %v56 = vld [vmem:[%s2 + $0xd8] sm:$0xff]
  %v57 = vld [vmem:[%s2 + $0xe0] sm:$0xff]
  %v58 = vld [vmem:[%s2 + $0xe8] sm:$0xff]
  %v59 = vld [vmem:[%s2 + $0xf0] sm:$0xff]
  %v60 = vld [vmem:[%s2 + $0xf8] sm:$0xff]
  %v61 = vld [vmem:[%s2 + $0x100] sm:$0xff]
  %v62 = vld [vmem:[%s2 + $0x108] sm:$0xff]
  %v63 = vld [vmem:[%s2 + $0x110] sm:$0xff]
  %v64 = vld [vmem:[%s2 + $0x118] sm:$0xff]
  %v65 = vld [vmem:[%s2 + $0x120] sm:$0xff]
  %v66 = vld [vmem:[%s2 + $0x128] sm:$0xff]
  %v67 = vld [vmem:[%s2 + $0x130] sm:$0xff]
  %v68 = vld [vmem:[%s2 + $0x138] sm:$0xff]
  %v69 = vld [vmem:[%s2 + $0x140] sm:$0xff]
  %v70 = vld [vmem:[%s2 + $0x148] sm:$0xff]
  %v71 = vld [vmem:[%s2 + $0x150] sm:$0xff]
  %v72 = vld [vmem:[%s2 + $0x158] sm:$0xff]
  %v73 = vld [vmem:[%s2 + $0x160] sm:$0xff]
  %v74 = vld [vmem:[%s2 + $0x168] sm:$0xff]
  %v75 = vld [vmem:[%s2 + $0x170] sm:$0xff]
  %v76 = vld [vmem:[%s2 + $0x178] sm:$0xff]
  %v77 = vld [vmem:[%s2 + $0x180] sm:$0xff]
  %v78 = vld [vmem:[%s2 + $0x188] sm:$0xff]
  %v79 = vld [vmem:[%s2 + $0x190] sm:$0xff]
  %v80 = vld [vmem:[%s2 + $0x198] sm:$0xff]
  %v81 = vld [vmem:[%s2 + $0x1a0] sm:$0xff]
  %v82 = vld [vmem:[%s2 + $0x1a8] sm:$0xff]
  %v83 = vld [vmem:[%s2 + $0x1b0] sm:$0xff]
  %v84 = vld [vmem:[%s2 + $0x1b8] sm:$0xff]
  %v85 = vld [vmem:[%s2 + $0x1c0] sm:$0xff]
  %v86 = vld [vmem:[%s2 + $0x1c8] sm:$0xff]
  %v87 = vld [vmem:[%s2 + $0x1d0] sm:$0xff]
  %v88 = vld [vmem:[%s2 + $0x1d8] sm:$0xff]
  %v89 = vld [vmem:[%s2 + $0x1e0] sm:$0xff]
  %v90 = vld [vmem:[%s2 + $0x1e8] sm:$0xff]
  %v91 = vld [vmem:[%s2 + $0x1f0] sm:$0xff]
  %v92 = vld [vmem:[%s2 + $0x1f8] sm:$0xff]
  %v93 = vld [vmem:[%s2 + $0x200] sm:$0xff]
  %v94 = vld [vmem:[%s2 + $0x208] sm:$0xff]
  %v95 = vld [vmem:[%s2 + $0x210] sm:$0xff]
  %v96 = vld [vmem:[%s2 + $0x218] sm:$0xff]
  %v97 = vld [vmem:[%s2 + $0x220] sm:$0xff]
  %v98 = vld [vmem:[%s2 + $0x228] sm:$0xff]
  %v99 = vld [vmem:[%s2 + $0x230] sm:$0xff]
  %v100 = vld [vmem:[%s2 + $0x238] sm:$0xff]
  %v101 = vld [vmem:[%s2 + $0x240] sm:$0xff]
  %v102 = vld [vmem:[%s2 + $0x248] sm:$0xff]
  %v103 = vld [vmem:[%s2 + $0x250] sm:$0xff]
  %v104 = vld [vmem:[%s2 + $0x258] sm:$0xff]
  %v105 = vld [vmem:[%s2 + $0x260] sm:$0xff]
  %v106 = vld [vmem:[%s2 + $0x268] sm:$0xff]
  %v107 = vld [vmem:[%s2 + $0x270] sm:$0xff]
  %v108 = vld [vmem:[%s2 + $0x278] sm:$0xff]
  %v109 = vld [vmem:[%s2 + $0x280] sm:$0xff]
  %v110 = vld [vmem:[%s2 + $0x288] sm:$0xff]
  %v111 = vld [vmem:[%s2 + $0x290] sm:$0xff]
  %v112 = vld [vmem:[%s2 + $0x298] sm:$0xff]
  %v113 = vld [vmem:[%s2 + $0x2a0] sm:$0xff]
  %v114 = vld [vmem:[%s2 + $0x2a8] sm:$0xff]
  %v115 = vld [vmem:[%s2 + $0x2b0] sm:$0xff]
  %v116 = vld [vmem:[%s2 + $0x2b8] sm:$0xff]
  %v117 = vld [vmem:[%s2 + $0x2c0] sm:$0xff]
  %v118 = vld [vmem:[%s2 + $0x2c8] sm:$0xff]
  %v119 = vld [vmem:[%s2 + $0x2d0] sm:$0xff]
  %v120 = vld [vmem:[%s2 + $0x2d8] sm:$0xff]
  %v121 = vld [vmem:[%s2 + $0x2e0] sm:$0xff]
  %v122 = vld [vmem:[%s2 + $0x2e8] sm:$0xff]
  %v123 = vld [vmem:[%s2 + $0x2f0] sm:$0xff]
  %v124 = vld [vmem:[%s2 + $0x2f8] sm:$0xff]
  %v125 = vld [vmem:[%s3] sm:$0x3]
  %v126 = vld [vmem:[%s0] sm:$0xff]
  %v127 = vld [vmem:[%s0 + $0x8] sm:$0xff]
  %v128 = vld [vmem:[%s0 + $0x10] sm:$0xff]
  %v129 = vld [vmem:[%s0 + $0x18] sm:$0x3f]
  %v130 = vld [vmem:[%s0 + $0x20] sm:$0x3f]
  %v131 = vld [vmem:[%s0 + $0x28] sm:$0x3f]
  %v133 = vperm.slane %v125, 0
  %v134 = vperm.slane %v125, 1
  %137 = vmatpush.msra.mxu0 %v59
  %138 = vmatpush.msra.mxu0 %v57
  %139 = vmatpush.msra.mxu0 %v55
  %140 = vmatpush.msra.mxu0 %v53
  %141 = vmatpush.msra.mxu0 %v51
  %142 = vmatpush.msra.mxu0 %v49
  %143 = vmatpush.msra.mxu0 %v47
  %144 = vmatpush.msra.mxu0 %v45
  %145 = vmatpush.msra.mxu0 %v43
  %146 = vmatpush.msra.mxu0 %v41
  %147 = vmatpush.msra.mxu0 %v39
  %148 = vmatpush.msra.mxu0 %v37
  %149 = vmatpush.msra.mxu0 %v35
  %150 = vmatpush.msra.mxu0 %v33
  %151 = vmatpush.msra.mxu0 %v31
  %152 = vmatpush.msra.mxu0 %v29
  %153 = vmatmul.f32.gmra.mxu0 %v126
  %v154 = vpop.f32.mrf.mxu0
  %v155 = vadd.f32 %v133, %v154
  %156 = vmatmul.f32.gmra.mxu0 %v129
  %v157 = vpop.f32.mrf.mxu0
  %v158 = vadd.f32 %v133, %v157
  %159 = vdwg.mxu0
  %160 = vmatpush.msra.mxu0 %v91
  %161 = vmatpush.msra.mxu0 %v89
  %162 = vmatpush.msra.mxu0 %v87
  %163 = vmatpush.msra.mxu0 %v85
  %164 = vmatpush.msra.mxu0 %v83
  %165 = vmatpush.msra.mxu0 %v81
  %166 = vmatpush.msra.mxu0 %v79
  %167 = vmatpush.msra.mxu0 %v77
  %168 = vmatpush.msra.mxu0 %v75
  %169 = vmatpush.msra.mxu0 %v73
  %170 = vmatpush.msra.mxu0 %v71
  %171 = vmatpush.msra.mxu0 %v69
  %172 = vmatpush.msra.mxu0 %v67
  %173 = vmatpush.msra.mxu0 %v65
  %174 = vmatpush.msra.mxu0 %v63
  %175 = vmatpush.msra.mxu0 %v61
  %176 = vmatmul.f32.gmra.mxu0 %v127
  %v177 = vpop.f32.mrf.mxu0
  %v178 = vadd.f32 %v155, %v177
  %179 = vmatmul.f32.gmra.mxu0 %v130
  %v180 = vpop.f32.mrf.mxu0
  %v181 = vadd.f32 %v158, %v180
  %182 = vdwg.mxu0
  %183 = vmatpush.msra.mxu0 %v123
  %184 = vmatpush.msra.mxu0 %v121
  %185 = vmatpush.msra.mxu0 %v119
  %186 = vmatpush.msra.mxu0 %v117
  %187 = vmatpush.msra.mxu0 %v115
  %188 = vmatpush.msra.mxu0 %v113
  %189 = vmatpush.msra.mxu0 %v111
  %190 = vmatpush.msra.mxu0 %v109
  %191 = vmatpush.msra.mxu0 %v107
  %192 = vmatpush.msra.mxu0 %v105
  %193 = vmatpush.msra.mxu0 %v103
  %194 = vmatpush.msra.mxu0 %v101
  %195 = vmatpush.msra.mxu0 %v99
  %196 = vmatpush.msra.mxu0 %v97
  %197 = vmatpush.msra.mxu0 %v95
  %198 = vmatpush.msra.mxu0 %v93
  %199 = vmatmul.f32.gmra.mxu0 %v128
  %v200 = vpop.f32.mrf.mxu0
  %v201 = vadd.f32 %v178, %v200
  %202 = vmatmul.f32.gmra.mxu0 %v131
  %v203 = vpop.f32.mrf.mxu0
  %v204 = vadd.f32 %v181, %v203
  %205 = vdwg.mxu0
  %206 = vmatpush.msra.mxu0 %v60
  %207 = vmatpush.msra.mxu0 %v58
  %208 = vmatpush.msra.mxu0 %v56
  %209 = vmatpush.msra.mxu0 %v54
  %210 = vmatpush.msra.mxu0 %v52
  %211 = vmatpush.msra.mxu0 %v50
  %212 = vmatpush.msra.mxu0 %v48
  %213 = vmatpush.msra.mxu0 %v46
  %214 = vmatpush.msra.mxu0 %v44
  %215 = vmatpush.msra.mxu0 %v42
  %216 = vmatpush.msra.mxu0 %v40
  %217 = vmatpush.msra.mxu0 %v38
  %218 = vmatpush.msra.mxu0 %v36
  %219 = vmatpush.msra.mxu0 %v34
  %220 = vmatpush.msra.mxu0 %v32
  %221 = vmatpush.msra.mxu0 %v30
  %222 = vmatmul.f32.gmra.mxu0 %v126
  %v223 = vpop.f32.mrf.mxu0
  %v224 = vadd.f32 %v134, %v223
  %225 = vmatmul.f32.gmra.mxu0 %v129
  %v226 = vpop.f32.mrf.mxu0
  %v227 = vadd.f32 %v134, %v226
  %228 = vdwg.mxu0
  %229 = vmatpush.msra.mxu0 %v92
  %230 = vmatpush.msra.mxu0 %v90
  %231 = vmatpush.msra.mxu0 %v88
  %232 = vmatpush.msra.mxu0 %v86
  %233 = vmatpush.msra.mxu0 %v84
  %234 = vmatpush.msra.mxu0 %v82
  %235 = vmatpush.msra.mxu0 %v80
  %236 = vmatpush.msra.mxu0 %v78
  %237 = vmatpush.msra.mxu0 %v76
  %238 = vmatpush.msra.mxu0 %v74
  %239 = vmatpush.msra.mxu0 %v72
  %240 = vmatpush.msra.mxu0 %v70
  %241 = vmatpush.msra.mxu0 %v68
  %242 = vmatpush.msra.mxu0 %v66
  %243 = vmatpush.msra.mxu0 %v64
  %244 = vmatpush.msra.mxu0 %v62
  %245 = vmatmul.f32.gmra.mxu0 %v127
  %v246 = vpop.f32.mrf.mxu0
  %v247 = vadd.f32 %v224, %v246
  %248 = vmatmul.f32.gmra.mxu0 %v130
  %v249 = vpop.f32.mrf.mxu0
  %v250 = vadd.f32 %v227, %v249
  %251 = vdwg.mxu0
  %252 = vmatpush.msra.mxu0 %v124
  %253 = vmatpush.msra.mxu0 %v122
  %254 = vmatpush.msra.mxu0 %v120
  %255 = vmatpush.msra.mxu0 %v118
  %256 = vmatpush.msra.mxu0 %v116
  %257 = vmatpush.msra.mxu0 %v114
  %258 = vmatpush.msra.mxu0 %v112
  %259 = vmatpush.msra.mxu0 %v110
  %260 = vmatpush.msra.mxu0 %v108
  %261 = vmatpush.msra.mxu0 %v106
  %262 = vmatpush.msra.mxu0 %v104
  %263 = vmatpush.msra.mxu0 %v102
  %264 = vmatpush.msra.mxu0 %v100
  %265 = vmatpush.msra.mxu0 %v98
  %266 = vmatpush.msra.mxu0 %v96
  %267 = vmatpush.msra.mxu0 %v94
  %268 = vmatmul.f32.gmra.mxu0 %v128
  %v269 = vpop.f32.mrf.mxu0
  %v270 = vadd.f32 %v247, %v269
  %271 = vmatmul.f32.gmra.mxu0 %v131
  %v272 = vpop.f32.mrf.mxu0
  %v273 = vadd.f32 %v250, %v272
  %274 = vdwg.mxu0
  %v275 = vmax.f32 %v201, 0.0
  %v276 = vmax.f32 %v270, 0.0
  %v277 = vmax.f32 %v204, 0.0
  %v278 = vmax.f32 %v273, 0.0
  %v279 = vld [vmem:[%s1] sm:$0xff]
  %v280 = vld [vmem:[%s1 + $0x8] sm:$0xff]
  %v281 = vld [vmem:[%s1 + $0x10] sm:$0xff]
  %v282 = vld [vmem:[%s1 + $0x18] sm:$0x3f]
  %v283 = vld [vmem:[%s1 + $0x20] sm:$0x3f]
  %v284 = vld [vmem:[%s1 + $0x28] sm:$0x3f]
  %285 = vmatpush.msra.mxu0 %v59
  %286 = vmatpush.msra.mxu0 %v57
  %287 = vmatpush.msra.mxu0 %v55
  %288 = vmatpush.msra.mxu0 %v53
  %289 = vmatpush.msra.mxu0 %v51
  %290 = vmatpush.msra.mxu0 %v49
  %291 = vmatpush.msra.mxu0 %v47
  %292 = vmatpush.msra.mxu0 %v45
  %293 = vmatpush.msra.mxu0 %v43
  %294 = vmatpush.msra.mxu0 %v41
  %295 = vmatpush.msra.mxu0 %v39
  %296 = vmatpush.msra.mxu0 %v37
  %297 = vmatpush.msra.mxu0 %v35
  %298 = vmatpush.msra.mxu0 %v33
  %299 = vmatpush.msra.mxu0 %v31
  %300 = vmatpush.msra.mxu0 %v29
  %301 = vmatmul.f32.gmra.mxu0 %v279
  %v302 = vpop.f32.mrf.mxu0
  %v303 = vadd.f32 %v133, %v302
  %304 = vmatmul.f32.gmra.mxu0 %v282
  %v305 = vpop.f32.mrf.mxu0
  %v306 = vadd.f32 %v133, %v305
  %307 = vdwg.mxu0
  %308 = vmatpush.msra.mxu0 %v91
  %309 = vmatpush.msra.mxu0 %v89
  %310 = vmatpush.msra.mxu0 %v87
  %311 = vmatpush.msra.mxu0 %v85
  %312 = vmatpush.msra.mxu0 %v83
  %313 = vmatpush.msra.mxu0 %v81
  %314 = vmatpush.msra.mxu0 %v79
  %315 = vmatpush.msra.mxu0 %v77
  %316 = vmatpush.msra.mxu0 %v75
  %317 = vmatpush.msra.mxu0 %v73
  %318 = vmatpush.msra.mxu0 %v71
  %319 = vmatpush.msra.mxu0 %v69
  %320 = vmatpush.msra.mxu0 %v67
  %321 = vmatpush.msra.mxu0 %v65
  %322 = vmatpush.msra.mxu0 %v63
  %323 = vmatpush.msra.mxu0 %v61
  %324 = vmatmul.f32.gmra.mxu0 %v280
  %v325 = vpop.f32.mrf.mxu0
  %v326 = vadd.f32 %v303, %v325
  %327 = vmatmul.f32.gmra.mxu0 %v283
  %v328 = vpop.f32.mrf.mxu0
  %v329 = vadd.f32 %v306, %v328
  %330 = vdwg.mxu0
  %331 = vmatpush.msra.mxu0 %v123
  %332 = vmatpush.msra.mxu0 %v121
  %333 = vmatpush.msra.mxu0 %v119
  %334 = vmatpush.msra.mxu0 %v117
  %335 = vmatpush.msra.mxu0 %v115
  %336 = vmatpush.msra.mxu0 %v113
  %337 = vmatpush.msra.mxu0 %v111
  %338 = vmatpush.msra.mxu0 %v109
  %339 = vmatpush.msra.mxu0 %v107
  %340 = vmatpush.msra.mxu0 %v105
  %341 = vmatpush.msra.mxu0 %v103
  %342 = vmatpush.msra.mxu0 %v101
  %343 = vmatpush.msra.mxu0 %v99
  %344 = vmatpush.msra.mxu0 %v97
  %345 = vmatpush.msra.mxu0 %v95
  %346 = vmatpush.msra.mxu0 %v93
  %347 = vmatmul.f32.gmra.mxu0 %v281
  %v348 = vpop.f32.mrf.mxu0
  %v349 = vadd.f32 %v326, %v348
  %350 = vmatmul.f32.gmra.mxu0 %v284
  %v351 = vpop.f32.mrf.mxu0
  %v352 = vadd.f32 %v329, %v351
  %353 = vdwg.mxu0
  %354 = vmatpush.msra.mxu0 %v60
  %355 = vmatpush.msra.mxu0 %v58
  %356 = vmatpush.msra.mxu0 %v56
  %357 = vmatpush.msra.mxu0 %v54
  %358 = vmatpush.msra.mxu0 %v52
  %359 = vmatpush.msra.mxu0 %v50
  %360 = vmatpush.msra.mxu0 %v48
  %361 = vmatpush.msra.mxu0 %v46
  %362 = vmatpush.msra.mxu0 %v44
  %363 = vmatpush.msra.mxu0 %v42
  %364 = vmatpush.msra.mxu0 %v40
  %365 = vmatpush.msra.mxu0 %v38
  %366 = vmatpush.msra.mxu0 %v36
  %367 = vmatpush.msra.mxu0 %v34
  %368 = vmatpush.msra.mxu0 %v32
  %369 = vmatpush.msra.mxu0 %v30
  %370 = vmatmul.f32.gmra.mxu0 %v279
  %v371 = vpop.f32.mrf.mxu0
  %v372 = vadd.f32 %v134, %v371
  %373 = vmatmul.f32.gmra.mxu0 %v282
  %v374 = vpop.f32.mrf.mxu0
  %v375 = vadd.f32 %v134, %v374
  %376 = vdwg.mxu0
  %377 = vmatpush.msra.mxu0 %v92
  %378 = vmatpush.msra.mxu0 %v90
  %379 = vmatpush.msra.mxu0 %v88
  %380 = vmatpush.msra.mxu0 %v86
  %381 = vmatpush.msra.mxu0 %v84
  %382 = vmatpush.msra.mxu0 %v82
  %383 = vmatpush.msra.mxu0 %v80
  %384 = vmatpush.msra.mxu0 %v78
  %385 = vmatpush.msra.mxu0 %v76
  %386 = vmatpush.msra.mxu0 %v74
  %387 = vmatpush.msra.mxu0 %v72
  %388 = vmatpush.msra.mxu0 %v70
  %389 = vmatpush.msra.mxu0 %v68
  %390 = vmatpush.msra.mxu0 %v66
  %391 = vmatpush.msra.mxu0 %v64
  %392 = vmatpush.msra.mxu0 %v62
  %393 = vmatmul.f32.gmra.mxu0 %v280
  %v394 = vpop.f32.mrf.mxu0
  %v395 = vadd.f32 %v372, %v394
  %396 = vmatmul.f32.gmra.mxu0 %v283
  %v397 = vpop.f32.mrf.mxu0
  %v398 = vadd.f32 %v375, %v397
  %399 = vdwg.mxu0
  %400 = vmatpush.msra.mxu0 %v124
  %401 = vmatpush.msra.mxu0 %v122
  %402 = vmatpush.msra.mxu0 %v120
  %403 = vmatpush.msra.mxu0 %v118
  %404 = vmatpush.msra.mxu0 %v116
  %405 = vmatpush.msra.mxu0 %v114
  %406 = vmatpush.msra.mxu0 %v112
  %407 = vmatpush.msra.mxu0 %v110
  %408 = vmatpush.msra.mxu0 %v108
  %409 = vmatpush.msra.mxu0 %v106
  %410 = vmatpush.msra.mxu0 %v104
  %411 = vmatpush.msra.mxu0 %v102
  %412 = vmatpush.msra.mxu0 %v100
  %413 = vmatpush.msra.mxu0 %v98
  %414 = vmatpush.msra.mxu0 %v96
  %415 = vmatpush.msra.mxu0 %v94
  %416 = vmatmul.f32.gmra.mxu0 %v281
  %v417 = vpop.f32.mrf.mxu0
  %v418 = vadd.f32 %v395, %v417
  %419 = vmatmul.f32.gmra.mxu0 %v284
  %v420 = vpop.f32.mrf.mxu0
  %v421 = vadd.f32 %v398, %v420
  %422 = vdwg.mxu0
  %v423 = vmax.f32 %v349, 0.0
  %v424 = vmax.f32 %v418, 0.0
  %v425 = vmax.f32 %v352, 0.0
  %v426 = vmax.f32 %v421, 0.0
  %vm427 = vcmask 1045504
  %v428 = vsel %vm427, %v277, 0.0
  %v429 = vadd.f32 %v275, %v428
  %v430 = vrot.slane %v429, 4
  %v431 = vadd.f32 %v429, %v430
  %v432 = vrot.slane %v431, 2
  %v433 = vadd.f32 %v431, %v432
  %v434 = vrot.slane %v433, 1
  %v435 = vadd.f32 %v433, %v434
  %v436 = vsel %vm427, %v278, 0.0
  %v437 = vadd.f32 %v276, %v436
  %v438 = vrot.slane %v437, 4
  %v439 = vadd.f32 %v437, %v438
  %v440 = vrot.slane %v439, 2
  %v441 = vadd.f32 %v439, %v440
  %v442 = vrot.slane %v441, 1
  %v443 = vadd.f32 %v441, %v442
  %v444 = vsel %vm427, %v425, 0.0
  %v445 = vadd.f32 %v423, %v444
  %v446 = vrot.slane %v445, 4
  %v447 = vadd.f32 %v445, %v446
  %v448 = vrot.slane %v447, 2
  %v449 = vadd.f32 %v447, %v448
  %v450 = vrot.slane %v449, 1
  %v451 = vadd.f32 %v449, %v450
  %v452 = vsel %vm427, %v426, 0.0
  %v453 = vadd.f32 %v424, %v452
  %v454 = vrot.slane %v453, 4
  %v455 = vadd.f32 %v453, %v454
  %v456 = vrot.slane %v455, 2
  %v457 = vadd.f32 %v455, %v456
  %v458 = vrot.slane %v457, 1
  %v459 = vadd.f32 %v457, %v458
  %v460 = vadd.f32 %v435, %v451
  %v461 = vadd.f32 %v443, %v459
  %v462 = vmul.f32 %v275, %v275
  %v463 = vmul.f32 %v276, %v276
  %v464 = vmul.f32 %v277, %v277
  %v465 = vmul.f32 %v278, %v278
  %v466 = vsel %vm427, %v464, 0.0
  %v467 = vadd.f32 %v462, %v466
  %v468 = vrot.slane %v467, 4
  %v469 = vadd.f32 %v467, %v468
  %v470 = vrot.slane %v469, 2
  %v471 = vadd.f32 %v469, %v470
  %v472 = vrot.slane %v471, 1
  %v473 = vadd.f32 %v471, %v472
  %v474 = vsel %vm427, %v465, 0.0
  %v475 = vadd.f32 %v463, %v474
  %v476 = vrot.slane %v475, 4
  %v477 = vadd.f32 %v475, %v476
  %v478 = vrot.slane %v477, 2
  %v479 = vadd.f32 %v477, %v478
  %v480 = vrot.slane %v479, 1
  %v481 = vadd.f32 %v479, %v480
  %v482 = vmul.f32 %v423, %v423
  %v483 = vmul.f32 %v424, %v424
  %v484 = vmul.f32 %v425, %v425
  %v485 = vmul.f32 %v426, %v426
  %v486 = vsel %vm427, %v484, 0.0
  %v487 = vadd.f32 %v482, %v486
  %v488 = vrot.slane %v487, 4
  %v489 = vadd.f32 %v487, %v488
  %v490 = vrot.slane %v489, 2
  %v491 = vadd.f32 %v489, %v490
  %v492 = vrot.slane %v491, 1
  %v493 = vadd.f32 %v491, %v492
  %v494 = vsel %vm427, %v485, 0.0
  %v495 = vadd.f32 %v483, %v494
  %v496 = vrot.slane %v495, 4
  %v497 = vadd.f32 %v495, %v496
  %v498 = vrot.slane %v497, 2
  %v499 = vadd.f32 %v497, %v498
  %v500 = vrot.slane %v499, 1
  %v501 = vadd.f32 %v499, %v500
  %v502 = vadd.f32 %v473, %v493
  %v503 = vadd.f32 %v481, %v501
  %v504 = vld [vmem:[%s6] sm:$0xff]
  %v505 = vld [vmem:[%s6 + $0x8] sm:$0xff]
  %v506 = vld [vmem:[%s6 + $0x10] sm:$0xff]
  %v507 = vld [vmem:[%s6 + $0x18] sm:$0xff]
  %v508 = vld [vmem:[%s6 + $0x20] sm:$0xff]
  %v509 = vld [vmem:[%s6 + $0x28] sm:$0xff]
  %v510 = vld [vmem:[%s6 + $0x30] sm:$0xff]
  %v511 = vld [vmem:[%s6 + $0x38] sm:$0xff]
  %v512 = vld [vmem:[%s6 + $0x40] sm:$0xff]
  %v513 = vld [vmem:[%s6 + $0x48] sm:$0xff]
  %v514 = vld [vmem:[%s6 + $0x50] sm:$0xff]
  %v515 = vld [vmem:[%s6 + $0x58] sm:$0xff]
  %v516 = vld [vmem:[%s6 + $0x60] sm:$0xff]
  %v517 = vld [vmem:[%s6 + $0x68] sm:$0xff]
  %v518 = vld [vmem:[%s6 + $0x70] sm:$0xff]
  %v519 = vld [vmem:[%s6 + $0x78] sm:$0xff]
  %v520 = vld [vmem:[%s6 + $0x80] sm:$0xff]
  %v521 = vld [vmem:[%s6 + $0x88] sm:$0xff]
  %v522 = vld [vmem:[%s6 + $0x90] sm:$0xff]
  %v523 = vld [vmem:[%s6 + $0x98] sm:$0xff]
  %v524 = vld [vmem:[%s6 + $0xa0] sm:$0xff]
  %v525 = vld [vmem:[%s6 + $0xa8] sm:$0xff]
  %v526 = vld [vmem:[%s6 + $0xb0] sm:$0xff]
  %v527 = vld [vmem:[%s6 + $0xb8] sm:$0xff]
  %v528 = vld [vmem:[%s6 + $0xc0] sm:$0xff]
  %v529 = vld [vmem:[%s6 + $0xc8] sm:$0xff]
  %v530 = vld [vmem:[%s6 + $0xd0] sm:$0xff]
  %v531 = vld [vmem:[%s6 + $0xd8] sm:$0xff]
  %v532 = vld [vmem:[%s6 + $0xe0] sm:$0xff]
  %v533 = vld [vmem:[%s6 + $0xe8] sm:$0xff]
  %v534 = vld [vmem:[%s6 + $0xf0] sm:$0xff]
  %v535 = vld [vmem:[%s6 + $0xf8] sm:$0xff]
  %536 = vmatpush.msra.mxu0 %v519
  %537 = vmatpush.msra.mxu0 %v518
  %538 = vmatpush.msra.mxu0 %v517
  %539 = vmatpush.msra.mxu0 %v516
  %540 = vmatpush.msra.mxu0 %v515
  %541 = vmatpush.msra.mxu0 %v514
  %542 = vmatpush.msra.mxu0 %v513
  %543 = vmatpush.msra.mxu0 %v512
  %544 = vmatpush.msra.mxu0 %v511
  %545 = vmatpush.msra.mxu0 %v510
  %546 = vmatpush.msra.mxu0 %v509
  %547 = vmatpush.msra.mxu0 %v508
  %548 = vmatpush.msra.mxu0 %v507
  %549 = vmatpush.msra.mxu0 %v506
  %550 = vmatpush.msra.mxu0 %v505
  %551 = vmatpush.msra.mxu0 %v504
  %552 = vmatmul.f32.gmra.mxu0 %v460
  %v553 = vpop.f32.mrf.mxu0
  %v554 = vadd.f32 0.0, %v553
  %555 = vdwg.mxu0
  %556 = vmatpush.msra.mxu0 %v535
  %557 = vmatpush.msra.mxu0 %v534
  %558 = vmatpush.msra.mxu0 %v533
  %559 = vmatpush.msra.mxu0 %v532
  %560 = vmatpush.msra.mxu0 %v531
  %561 = vmatpush.msra.mxu0 %v530
  %562 = vmatpush.msra.mxu0 %v529
  %563 = vmatpush.msra.mxu0 %v528
  %564 = vmatpush.msra.mxu0 %v527
  %565 = vmatpush.msra.mxu0 %v526
  %566 = vmatpush.msra.mxu0 %v525
  %567 = vmatpush.msra.mxu0 %v524
  %568 = vmatpush.msra.mxu0 %v523
  %569 = vmatpush.msra.mxu0 %v522
  %570 = vmatpush.msra.mxu0 %v521
  %571 = vmatpush.msra.mxu0 %v520
  %572 = vmatmul.f32.gmra.mxu0 %v461
  %v573 = vpop.f32.mrf.mxu0
  %v574 = vadd.f32 %v554, %v573
  %575 = vdwg.mxu0
  %v576 = vmul.f32 %v574, 0.0025510204
  %577 = vmatpush.msra.mxu0 %v519
  %578 = vmatpush.msra.mxu0 %v518
  %579 = vmatpush.msra.mxu0 %v517
  %580 = vmatpush.msra.mxu0 %v516
  %581 = vmatpush.msra.mxu0 %v515
  %582 = vmatpush.msra.mxu0 %v514
  %583 = vmatpush.msra.mxu0 %v513
  %584 = vmatpush.msra.mxu0 %v512
  %585 = vmatpush.msra.mxu0 %v511
  %586 = vmatpush.msra.mxu0 %v510
  %587 = vmatpush.msra.mxu0 %v509
  %588 = vmatpush.msra.mxu0 %v508
  %589 = vmatpush.msra.mxu0 %v507
  %590 = vmatpush.msra.mxu0 %v506
  %591 = vmatpush.msra.mxu0 %v505
  %592 = vmatpush.msra.mxu0 %v504
  %593 = vmatmul.f32.gmra.mxu0 %v502
  %v594 = vpop.f32.mrf.mxu0
  %v595 = vadd.f32 0.0, %v594
  %596 = vdwg.mxu0
  %597 = vmatpush.msra.mxu0 %v535
  %598 = vmatpush.msra.mxu0 %v534
  %599 = vmatpush.msra.mxu0 %v533
  %600 = vmatpush.msra.mxu0 %v532
  %601 = vmatpush.msra.mxu0 %v531
  %602 = vmatpush.msra.mxu0 %v530
  %603 = vmatpush.msra.mxu0 %v529
  %604 = vmatpush.msra.mxu0 %v528
  %605 = vmatpush.msra.mxu0 %v527
  %606 = vmatpush.msra.mxu0 %v526
  %607 = vmatpush.msra.mxu0 %v525
  %608 = vmatpush.msra.mxu0 %v524
  %609 = vmatpush.msra.mxu0 %v523
  %610 = vmatpush.msra.mxu0 %v522
  %611 = vmatpush.msra.mxu0 %v521
  %612 = vmatpush.msra.mxu0 %v520
  %613 = vmatmul.f32.gmra.mxu0 %v503
  %v614 = vpop.f32.mrf.mxu0
  %v615 = vadd.f32 %v595, %v614
  %616 = vdwg.mxu0
  %v617 = vmul.f32 %v615, 0.0025510204
  %v618 = vmul.f32 %v576, %v576
  %v619 = vsub.f32 %v617, %v618
  %v620 = vmax.f32 %v619, 0.0
  %v621 = vld [vmem:[%s4] sm:$0x1]
  %v622 = vadd.f32 %v620, 1e-05
  %v623 = vrsqrt.pop %v622
  %v624 = vmul.f32 %v623, %v622
  %v625 = vmul.f32 %v624, %v623
  %v626 = vmul.f32 0.5, %v625
  %v627 = vsub.f32 1.5, %v626
  %v628 = vmul.f32 %v623, %v627
  %vm629 = vweird.f32 %v622
  %vm630 = vweird.f32 %v623
  %vm631 = vmor %vm629, %vm630
  %v632 = vsel %vm631, %v623, %v628
  %v633 = vmul.f32 %v621, %v632
  %v634 = vld [vmem:[%s5] sm:$0x1]
  %v635 = vmul.f32 %v576, %v633
  %v636 = vsub.f32 %v634, %v635
  %v637 = vld [vmem:[%s7] sm:$0xff]
  %v638 = vld [vmem:[%s7 + $0x8] sm:$0xff]
  %v639 = vld [vmem:[%s7 + $0x10] sm:$0xff]
  %v640 = vld [vmem:[%s7 + $0x18] sm:$0xff]
  %vm641 = vcmask 130048
  %v643 = vsel %vm641, %v633, 0
  %645 = vmatpush.msra.mxu0 0.0
  %646 = vmatpush.msra.mxu0 0.0
  %647 = vmatpush.msra.mxu0 0.0
  %648 = vmatpush.msra.mxu0 0.0
  %649 = vmatpush.msra.mxu0 0.0
  %650 = vmatpush.msra.mxu0 0.0
  %651 = vmatpush.msra.mxu0 0.0
  %652 = vmatpush.msra.mxu0 0.0
  %653 = vmatpush.msra.mxu0 0.0
  %654 = vmatpush.msra.mxu0 0.0
  %655 = vmatpush.msra.mxu0 0.0
  %656 = vmatpush.msra.mxu0 0.0
  %657 = vmatpush.msra.mxu0 0.0
  %658 = vmatpush.msra.mxu0 0.0
  %659 = vmatpush.msra.mxu0 %v639
  %660 = vmatpush.msra.mxu0 %v637
  %661 = vmatmul.f32.gmra.mxu0 %v643
  %v662 = vpop.f32.mrf.mxu0
  %v663 = vadd.f32 0.0, %v662
  %664 = vdwg.mxu0
  %665 = vmatpush.msra.mxu0 0.0
  %666 = vmatpush.msra.mxu0 0.0
  %667 = vmatpush.msra.mxu0 0.0
  %668 = vmatpush.msra.mxu0 0.0
  %669 = vmatpush.msra.mxu0 0.0
  %670 = vmatpush.msra.mxu0 0.0
  %671 = vmatpush.msra.mxu0 0.0
  %672 = vmatpush.msra.mxu0 0.0
  %673 = vmatpush.msra.mxu0 0.0
  %674 = vmatpush.msra.mxu0 0.0
  %675 = vmatpush.msra.mxu0 0.0
  %676 = vmatpush.msra.mxu0 0.0
  %677 = vmatpush.msra.mxu0 0.0
  %678 = vmatpush.msra.mxu0 0.0
  %679 = vmatpush.msra.mxu0 %v640
  %680 = vmatpush.msra.mxu0 %v638
  %681 = vmatmul.f32.gmra.mxu0 %v643
  %v682 = vpop.f32.mrf.mxu0
  %v683 = vadd.f32 0.0, %v682
  %684 = vdwg.mxu0
  %v686 = vsel %vm641, %v636, 0
  %688 = vmatpush.msra.mxu0 0.0
  %689 = vmatpush.msra.mxu0 0.0
  %690 = vmatpush.msra.mxu0 0.0
  %691 = vmatpush.msra.mxu0 0.0
  %692 = vmatpush.msra.mxu0 0.0
  %693 = vmatpush.msra.mxu0 0.0
  %694 = vmatpush.msra.mxu0 0.0
  %695 = vmatpush.msra.mxu0 0.0
  %696 = vmatpush.msra.mxu0 0.0
  %697 = vmatpush.msra.mxu0 0.0
  %698 = vmatpush.msra.mxu0 0.0
  %699 = vmatpush.msra.mxu0 0.0
  %700 = vmatpush.msra.mxu0 0.0
  %701 = vmatpush.msra.mxu0 0.0
  %702 = vmatpush.msra.mxu0 %v639
  %703 = vmatpush.msra.mxu0 %v637
  %704 = vmatmul.f32.gmra.mxu0 %v686
  %v705 = vpop.f32.mrf.mxu0
  %v706 = vadd.f32 0.0, %v705
  %707 = vdwg.mxu0
  %708 = vmatpush.msra.mxu0 0.0
  %709 = vmatpush.msra.mxu0 0.0
  %710 = vmatpush.msra.mxu0 0.0
  %711 = vmatpush.msra.mxu0 0.0
  %712 = vmatpush.msra.mxu0 0.0
  %713 = vmatpush.msra.mxu0 0.0
  %714 = vmatpush.msra.mxu0 0.0
  %715 = vmatpush.msra.mxu0 0.0
  %716 = vmatpush.msra.mxu0 0.0
  %717 = vmatpush.msra.mxu0 0.0
  %718 = vmatpush.msra.mxu0 0.0
  %719 = vmatpush.msra.mxu0 0.0
  %720 = vmatpush.msra.mxu0 0.0
  %721 = vmatpush.msra.mxu0 0.0
  %722 = vmatpush.msra.mxu0 %v640
  %723 = vmatpush.msra.mxu0 %v638
  %724 = vmatmul.f32.gmra.mxu0 %v686
  %v725 = vpop.f32.mrf.mxu0
  %v726 = vadd.f32 0.0, %v725
  %727 = vdwg.mxu0
  %v728 = vperm.slane %v663, 0
  %v729 = vperm.slane %v683, 0
  %v730 = vmul.f32 %v275, %v728
  %v731 = vmul.f32 %v276, %v729
  %v732 = vmul.f32 %v277, %v728
  %v733 = vmul.f32 %v278, %v729
  %v734 = vperm.slane %v706, 0
  %v735 = vperm.slane %v726, 0
  %v736 = vadd.f32 %v730, %v734
  %v737 = vadd.f32 %v731, %v735
  %v738 = vadd.f32 %v732, %v734
  %v739 = vadd.f32 %v733, %v735
  %v740 = vmul.f32 %v423, %v728
  %v741 = vmul.f32 %v424, %v729
  %v742 = vmul.f32 %v425, %v728
  %v743 = vmul.f32 %v426, %v729
  %v744 = vadd.f32 %v740, %v734
  %v745 = vadd.f32 %v741, %v735
  %v746 = vadd.f32 %v742, %v734
  %v747 = vadd.f32 %v743, %v735
  %v748 = vmax.f32 %v736, %v744
  %v749 = vmax.f32 %v737, %v745
  %v750 = vmax.f32 %v738, %v746
  %v751 = vmax.f32 %v739, %v747
  %v752 = vmax.f32 %v748, %v749
  %v753 = vmax.f32 %v750, %v751
  %754 = vst [vmem:[%s8] sm:$0xff] %v752
  %755 = vst [vmem:[%s8 + $0x8] sm:$0x3f] %v753
  // Predicated region
  $region34: #{forward.5} parent=0 // pred_check
    _
  $region35: #{forward.5} parent=0 // pred_check_branch
    %757 = sbr.rel (0) target = $region37
  $region36: #{forward.5} parent=0 // pred_region
    _
  $region37: #{forward.5} parent=0 // pred_fallthru
    _
  // Predicated region
  $region38: #{forward.5} parent=0 // pred_check
    _
  $region39: #{forward.5} parent=0 // pred_check_branch
    %759 = sbr.rel (0) target = $region41
  $region40: #{forward.5} parent=0 // pred_region
    _
  $region41: #{forward.5} parent=0 // pred_fallthru
    _

// kernel: forward.7
$region0: #{forward.7}
  #allocation0 [shape = 'u32[]', space=smem, size = 0x4, offset = 0x4, fixed_abs, tag = 'smem constant byte address 0x4 - core index']
  #allocation1 [shape = 'u32[72,128]{1,0:T(1,128)}', space=vmem, size = 0x9000, scoped, tag = 'internal scratch']
  %s0 = inlined_call_operand.vmem [shape: f32[2,288], index: 0, kind: input, shape index: {}]
  %s1 = inlined_call_operand.vmem [shape: f32[288,128], index: 1, kind: input, shape index: {}]
  %s2 = inlined_call_operand.vmem [shape: f32[1,128], index: 2, kind: input, shape index: {}]
  %s3 = inlined_call_operand.vmem [shape: f32[128,128], index: 3, kind: input, shape index: {}]
  %s4 = inlined_call_operand.vmem [shape: f32[1,128], index: 4, kind: input, shape index: {}]
  %s5 = inlined_call_operand.hbm [shape: f32[2,128], index: 5, kind: output, shape index: {}]
  %s6 = sld [smem:[#allocation0]]
  $region30: #{forward.7} parent=0
    _
  %s8 = ssub.s32 1, %s6
  %s9 = scalar_select 0, %s8, %s6
  $region1: #{forward.7} parent=0
    #allocation2 [shape = 'u8[1024]{0}', space=vmem, size = 0x400, scoped, tag = 'output window, operand 0, single buffered']
    #allocation3 [shape = 's32[1]{0}', space=sflag, size = 0x4, scoped, tag = 'scoped memory for forward.7']
    %10 = vsyncpa [#allocation3], 0
    // Predicated region
    $region2: #{forward.7} parent=1 // pred_check
      _
    $region3: #{forward.7} parent=1 // pred_check_branch
      %12 = sbr.rel (0) target = $region5
    $region4: #{forward.7} parent=1 // pred_region
      _
    $region5: #{forward.7} parent=1 // pred_fallthru
      _
    // Predicated region
    $region6: #{forward.7} parent=1 // pred_check
      _
    $region7: #{forward.7} parent=1 // pred_check_branch
      %14 = sbr.rel (0) target = $region9
    $region8: #{forward.7} parent=1 // pred_region
      _
    $region9: #{forward.7} parent=1 // pred_fallthru
      _
    // Predicated region
    $region10: #{forward.7} parent=1 // pred_check
      _
    $region11: #{forward.7} parent=1 // pred_check_branch
      %16 = sbr.rel (0) target = $region13
    $region12: #{forward.7} parent=1 // pred_region
      _
    $region13: #{forward.7} parent=1 // pred_fallthru
      _
    // Predicated region
    $region14: #{forward.7} parent=1 // pred_check
      _
    $region15: #{forward.7} parent=1 // pred_check_branch
      %18 = sbr.rel (0) target = $region17
    $region16: #{forward.7} parent=1 // pred_region
      _
    $region17: #{forward.7} parent=1 // pred_fallthru
      _
    // Predicated region
    $region18: #{forward.7} parent=1 // pred_check
      _
    $region19: #{forward.7} parent=1 // pred_check_branch
      %20 = sbr.rel (0) target = $region21
    $region20: #{forward.7} parent=1 // pred_region
      _
    $region21: #{forward.7} parent=1 // pred_fallthru
      _
    %v21 = vld [vmem:[%s0] sm:$0x3f]
    %v22 = vld [vmem:[%s1] sm:$0xff]
    %v23 = vld [vmem:[%s1 + $0x8] sm:$0xff]
    %v24 = vld [vmem:[%s1 + $0x10] sm:$0xff]
    %v25 = vld [vmem:[%s1 + $0x18] sm:$0xff]
    %v26 = vld [vmem:[%s1 + $0x20] sm:$0xff]
    %v27 = vld [vmem:[%s1 + $0x28] sm:$0xff]
    %v28 = vld [vmem:[%s1 + $0x30] sm:$0xff]
    %v29 = vld [vmem:[%s1 + $0x38] sm:$0xff]
    %v30 = vld [vmem:[%s1 + $0x40] sm:$0xff]
    %v31 = vld [vmem:[%s1 + $0x48] sm:$0xff]
    %v32 = vld [vmem:[%s1 + $0x50] sm:$0xff]
    %v33 = vld [vmem:[%s1 + $0x58] sm:$0xff]
    %v34 = vld [vmem:[%s1 + $0x60] sm:$0xff]
    %v35 = vld [vmem:[%s1 + $0x68] sm:$0xff]
    %v36 = vld [vmem:[%s1 + $0x70] sm:$0xff]
    %v37 = vld [vmem:[%s1 + $0x78] sm:$0xff]
    %v38 = vld [vmem:[%s1 + $0x80] sm:$0xff]
    %v39 = vld [vmem:[%s1 + $0x88] sm:$0xff]
    %v40 = vld [vmem:[%s1 + $0x90] sm:$0xff]
    %v41 = vld [vmem:[%s1 + $0x98] sm:$0xff]
    %v42 = vld [vmem:[%s1 + $0xa0] sm:$0xff]
    %v43 = vld [vmem:[%s1 + $0xa8] sm:$0xff]
    %v44 = vld [vmem:[%s1 + $0xb0] sm:$0xff]
    %v45 = vld [vmem:[%s1 + $0xb8] sm:$0xff]
    %v46 = vld [vmem:[%s1 + $0xc0] sm:$0xff]
    %v47 = vld [vmem:[%s1 + $0xc8] sm:$0xff]
    %v48 = vld [vmem:[%s1 + $0xd0] sm:$0xff]
    %v49 = vld [vmem:[%s1 + $0xd8] sm:$0xff]
    %v50 = vld [vmem:[%s1 + $0xe0] sm:$0xff]
    %v51 = vld [vmem:[%s1 + $0xe8] sm:$0xff]
    %v52 = vld [vmem:[%s1 + $0xf0] sm:$0xff]
    %v53 = vld [vmem:[%s1 + $0xf8] sm:$0xff]
    %v54 = vld [vmem:[%s1 + $0x100] sm:$0xff]
    %v55 = vld [vmem:[%s1 + $0x108] sm:$0xff]
    %v56 = vld [vmem:[%s1 + $0x110] sm:$0xff]
    %v57 = vld [vmem:[%s1 + $0x118] sm:$0xff]
    %v58 = vld [vmem:[%s2] sm:$0x1]
    %v60 = vperm.slane %v58, 0
    %63 = vst [vmem:[#allocation1] ss:$4 sm:$0xff] %v21
    %v64 = vld.sshfl [vmem:[#allocation1] sm:$0xff pattern:$0x73625140]
    %v65 = vld.sshfl [vmem:[#allocation1 + $0x8] sm:$0xff pattern:$0x73625140]
    %v66 = vld.sshfl [vmem:[#allocation1 + $0x10] sm:$0xff pattern:$0x73625140]
    %vm69 = vcmask 261120
    %v70 = vsel %vm69, %v66, 0
    %72 = vmatpush.msra.mxu0 %v37
    %73 = vmatpush.msra.mxu0 %v36
    %74 = vmatpush.msra.mxu0 %v35
    %75 = vmatpush.msra.mxu0 %v34
    %76 = vmatpush.msra.mxu0 %v33
    %77 = vmatpush.msra.mxu0 %v32
    %78 = vmatpush.msra.mxu0 %v31
    %79 = vmatpush.msra.mxu0 %v30
    %80 = vmatpush.msra.mxu0 %v29
    %81 = vmatpush.msra.mxu0 %v28
    %82 = vmatpush.msra.mxu0 %v27
    %83 = vmatpush.msra.mxu0 %v26
    %84 = vmatpush.msra.mxu0 %v25
    %85 = vmatpush.msra.mxu0 %v24
    %86 = vmatpush.msra.mxu0 %v23
    %87 = vmatpush.msra.mxu0 %v22
    %88 = vmatmul.f32.gmra.mxu0 %v64
    %v89 = vpop.f32.mrf.mxu0
    %v90 = vadd.f32 %v60, %v89
    %91 = vdwg.mxu0
    %92 = vmatpush.msra.mxu0 %v53
    %93 = vmatpush.msra.mxu0 %v52
    %94 = vmatpush.msra.mxu0 %v51
    %95 = vmatpush.msra.mxu0 %v50
    %96 = vmatpush.msra.mxu0 %v49
    %97 = vmatpush.msra.mxu0 %v48
    %98 = vmatpush.msra.mxu0 %v47
    %99 = vmatpush.msra.mxu0 %v46
    %100 = vmatpush.msra.mxu0 %v45
    %101 = vmatpush.msra.mxu0 %v44
    %102 = vmatpush.msra.mxu0 %v43
    %103 = vmatpush.msra.mxu0 %v42
    %104 = vmatpush.msra.mxu0 %v41
    %105 = vmatpush.msra.mxu0 %v40
    %106 = vmatpush.msra.mxu0 %v39
    %107 = vmatpush.msra.mxu0 %v38
    %108 = vmatmul.f32.gmra.mxu0 %v65
    %v109 = vpop.f32.mrf.mxu0
    %v110 = vadd.f32 %v90, %v109
    %111 = vdwg.mxu0
    %112 = vmatpush.msra.mxu0 0.0
    %113 = vmatpush.msra.mxu0 0.0
    %114 = vmatpush.msra.mxu0 0.0
    %115 = vmatpush.msra.mxu0 0.0
    %116 = vmatpush.msra.mxu0 0.0
    %117 = vmatpush.msra.mxu0 0.0
    %118 = vmatpush.msra.mxu0 0.0
    %119 = vmatpush.msra.mxu0 0.0
    %120 = vmatpush.msra.mxu0 0.0
    %121 = vmatpush.msra.mxu0 0.0
    %122 = vmatpush.msra.mxu0 0.0
    %123 = vmatpush.msra.mxu0 0.0
    %124 = vmatpush.msra.mxu0 %v57
    %125 = vmatpush.msra.mxu0 %v56
    %126 = vmatpush.msra.mxu0 %v55
    %127 = vmatpush.msra.mxu0 %v54
    %128 = vmatmul.f32.gmra.mxu0 %v70
    %v129 = vpop.f32.mrf.mxu0
    %v130 = vadd.f32 %v110, %v129
    %131 = vdwg.mxu0
    %v132 = vmax.f32 %v130, 0.0
    %v133 = vld [vmem:[%s3] sm:$0xff]
    %v134 = vld [vmem:[%s3 + $0x8] sm:$0xff]
    %v135 = vld [vmem:[%s3 + $0x10] sm:$0xff]
    %v136 = vld [vmem:[%s3 + $0x18] sm:$0xff]
    %v137 = vld [vmem:[%s3 + $0x20] sm:$0xff]
    %v138 = vld [vmem:[%s3 + $0x28] sm:$0xff]
    %v139 = vld [vmem:[%s3 + $0x30] sm:$0xff]
    %v140 = vld [vmem:[%s3 + $0x38] sm:$0xff]
    %v141 = vld [vmem:[%s3 + $0x40] sm:$0xff]
    %v142 = vld [vmem:[%s3 + $0x48] sm:$0xff]
    %v143 = vld [vmem:[%s3 + $0x50] sm:$0xff]
    %v144 = vld [vmem:[%s3 + $0x58] sm:$0xff]
    %v145 = vld [vmem:[%s3 + $0x60] sm:$0xff]
    %v146 = vld [vmem:[%s3 + $0x68] sm:$0xff]
    %v147 = vld [vmem:[%s3 + $0x70] sm:$0xff]
    %v148 = vld [vmem:[%s3 + $0x78] sm:$0xff]
    %v149 = vld [vmem:[%s4] sm:$0x1]
    %v151 = vperm.slane %v149, 0
    %153 = vmatpush.msra.mxu0 %v148
    %154 = vmatpush.msra.mxu0 %v147
    %155 = vmatpush.msra.mxu0 %v146
    %156 = vmatpush.msra.mxu0 %v145
    %157 = vmatpush.msra.mxu0 %v144
    %158 = vmatpush.msra.mxu0 %v143
    %159 = vmatpush.msra.mxu0 %v142
    %160 = vmatpush.msra.mxu0 %v141
    %161 = vmatpush.msra.mxu0 %v140
    %162 = vmatpush.msra.mxu0 %v139
    %163 = vmatpush.msra.mxu0 %v138
    %164 = vmatpush.msra.mxu0 %v137
    %165 = vmatpush.msra.mxu0 %v136
    %166 = vmatpush.msra.mxu0 %v135
    %167 = vmatpush.msra.mxu0 %v134
    %168 = vmatpush.msra.mxu0 %v133
    %169 = vmatmul.f32.gmra.mxu0 %v132
    %v170 = vpop.f32.mrf.mxu0
    %v171 = vadd.f32 %v151, %v170
    %172 = vdwg.mxu0
    %vm173 = vcmask 1041408
    %v174 = vsel %vm173, %v171, -inf
    %175 = vmax.xlane.f32.xlu0 %v174
    %v176 = vpop.xlane.xlu0 %175
    %v177 = vsub.f32 %v171, %v176
    %v178 = vmul.f32 %v177, 1.442695
    %v179 = vpow.pop %v178
    %v180 = vsel %vm173, %v179, 0.0
    %181 = vadd.xlane.f32.xlu0 %v180
    %v182 = vpop.xlane.xlu0 %181
    %v183 = vlog2.pop %v182
    %v184 = vmul.f32 %v183, 0.6931472
    %v185 = vsub.f32 %v177, %v184
    %186 = vst [vmem:[#allocation2] sm:$0x3] %v185
    // Predicated region
    $region22: #{forward.7} parent=1 // pred_check
      _
    $region23: #{forward.7} parent=1 // pred_check_branch
      %188 = sbr.rel (0) target = $region25
    $region24: #{forward.7} parent=1 // pred_region
      %190 = vsyncadd [#allocation3], 0
      %s192 = sshll.u32 [#allocation2], 4
      %s193 = int_to_ptr.vmem [resolvable:$true] %s192
      %s194 = sshll.u32 %s5, 4
      %s195 = int_to_ptr.hbm [resolvable:$true] %s194
      %197 = dma.vmem_to_hbm [thread:$0]  %s193, 32, %s195, [#allocation3]
    $region25: #{forward.7} parent=1 // pred_fallthru
      _
    // Predicated region
    $region26: #{forward.7} parent=1 // pred_check
      _
    $region27: #{forward.7} parent=1 // pred_check_branch
      %199 = sbr.rel (0) target = $region29
    $region28: #{forward.7} parent=1 // pred_region
      %201 = dma.done [#allocation3], 32
    $region29: #{forward.7} parent=1 // pred_fallthru
      _
    %202 = vsyncpa [#allocation3], 1

// kernel: forward.6
$region0: #{forward.6}
  #allocation0 [shape = 'u32[]', space=smem, size = 0x4, offset = 0x4, fixed_abs, tag = 'smem constant byte address 0x4 - core index']
  #allocation1 [shape = 'u32[72,128]{1,0:T(1,128)}', space=vmem, size = 0x9000, scoped, tag = 'internal scratch']
  %s0 = inlined_call_operand.vmem [shape: f32[6,432], index: 0, kind: input, shape index: {}]
  %s1 = inlined_call_operand.vmem [shape: f32[6,432], index: 1, kind: input, shape index: {}]
  %s2 = inlined_call_operand.vmem [shape: f32[2,432], index: 2, kind: input, shape index: {}]
  %s3 = inlined_call_operand.vmem [shape: f32[432,288], index: 3, kind: input, shape index: {}]
  %s4 = inlined_call_operand.vmem [shape: f32[1,288], index: 4, kind: input, shape index: {}]
  %s5 = inlined_call_operand.vmem [shape: f32[1,32], index: 5, kind: input, shape index: {}]
  %s6 = inlined_call_operand.vmem [shape: f32[1,32], index: 6, kind: input, shape index: {}]
  %s7 = inlined_call_operand.vmem [shape: f32[288,32], index: 7, kind: input, shape index: {}]
  %s8 = inlined_call_operand.vmem [shape: f32[32,288], index: 8, kind: input, shape index: {}]
  %s9 = inlined_call_operand.vmem [shape: f32[6,128], index: 9, kind: output, shape index: {}]
  %s10 = sld [smem:[#allocation0]]
  $region46: #{forward.6} parent=0
    _
  %s12 = ssub.s32 1, %s10
  %s13 = scalar_select 0, %s12, %s10
  // Predicated region
  $region2: #{forward.6} parent=0 // pred_check
    _
  $region3: #{forward.6} parent=0 // pred_check_branch
    %15 = sbr.rel (0) target = $region5
  $region4: #{forward.6} parent=0 // pred_region
    _
  $region5: #{forward.6} parent=0 // pred_fallthru
    _
  // Predicated region
  $region6: #{forward.6} parent=0 // pred_check
    _
  $region7: #{forward.6} parent=0 // pred_check_branch
    %17 = sbr.rel (0) target = $region9
  $region8: #{forward.6} parent=0 // pred_region
    _
  $region9: #{forward.6} parent=0 // pred_fallthru
    _
  // Predicated region
  $region10: #{forward.6} parent=0 // pred_check
    _
  $region11: #{forward.6} parent=0 // pred_check_branch
    %19 = sbr.rel (0) target = $region13
  $region12: #{forward.6} parent=0 // pred_region
    _
  $region13: #{forward.6} parent=0 // pred_fallthru
    _
  // Predicated region
  $region14: #{forward.6} parent=0 // pred_check
    _
  $region15: #{forward.6} parent=0 // pred_check_branch
    %21 = sbr.rel (0) target = $region17
  $region16: #{forward.6} parent=0 // pred_region
    _
  $region17: #{forward.6} parent=0 // pred_fallthru
    _
  // Predicated region
  $region18: #{forward.6} parent=0 // pred_check
    _
  $region19: #{forward.6} parent=0 // pred_check_branch
    %23 = sbr.rel (0) target = $region21
  $region20: #{forward.6} parent=0 // pred_region
    _
  $region21: #{forward.6} parent=0 // pred_fallthru
    _
  // Predicated region
  $region22: #{forward.6} parent=0 // pred_check
    _
  $region23: #{forward.6} parent=0 // pred_check_branch
    %25 = sbr.rel (0) target = $region25
  $region24: #{forward.6} parent=0 // pred_region
    _
  $region25: #{forward.6} parent=0 // pred_fallthru
    _
  // Predicated region
  $region26: #{forward.6} parent=0 // pred_check
    _
  $region27: #{forward.6} parent=0 // pred_check_branch
    %27 = sbr.rel (0) target = $region29
  $region28: #{forward.6} parent=0 // pred_region
    _
  $region29: #{forward.6} parent=0 // pred_fallthru
    _
  // Predicated region
  $region30: #{forward.6} parent=0 // pred_check
    _
  $region31: #{forward.6} parent=0 // pred_check_branch
    %29 = sbr.rel (0) target = $region33
  $region32: #{forward.6} parent=0 // pred_region
    _
  $region33: #{forward.6} parent=0 // pred_fallthru
    _
  // Predicated region
  $region34: #{forward.6} parent=0 // pred_check
    _
  $region35: #{forward.6} parent=0 // pred_check_branch
    %31 = sbr.rel (0) target = $region37
  $region36: #{forward.6} parent=0 // pred_region
    _
  $region37: #{forward.6} parent=0 // pred_fallthru
    _
  %v32 = vld [vmem:[%s3] sm:$0xff]
  %v33 = vld [vmem:[%s3 + $0x8] sm:$0xff]
  %v34 = vld [vmem:[%s3 + $0x10] sm:$0xff]
  %v35 = vld [vmem:[%s3 + $0x18] sm:$0xff]
  %v36 = vld [vmem:[%s3 + $0x20] sm:$0xff]
  %v37 = vld [vmem:[%s3 + $0x28] sm:$0xff]
  %v38 = vld [vmem:[%s3 + $0x30] sm:$0xff]
  %v39 = vld [vmem:[%s3 + $0x38] sm:$0xff]
  %v40 = vld [vmem:[%s3 + $0x40] sm:$0xff]
  %v41 = vld [vmem:[%s3 + $0x48] sm:$0xff]
  %v42 = vld [vmem:[%s3 + $0x50] sm:$0xff]
  %v43 = vld [vmem:[%s3 + $0x58] sm:$0xff]
  %v44 = vld [vmem:[%s3 + $0x60] sm:$0xff]
  %v45 = vld [vmem:[%s3 + $0x68] sm:$0xff]
  %v46 = vld [vmem:[%s3 + $0x70] sm:$0xff]
  %v47 = vld [vmem:[%s3 + $0x78] sm:$0xff]
  %v48 = vld [vmem:[%s3 + $0x80] sm:$0xff]
  %v49 = vld [vmem:[%s3 + $0x88] sm:$0xff]
  %v50 = vld [vmem:[%s3 + $0x90] sm:$0xff]
  %v51 = vld [vmem:[%s3 + $0x98] sm:$0xff]
  %v52 = vld [vmem:[%s3 + $0xa0] sm:$0xff]
  %v53 = vld [vmem:[%s3 + $0xa8] sm:$0xff]
  %v54 = vld [vmem:[%s3 + $0xb0] sm:$0xff]
  %v55 = vld [vmem:[%s3 + $0xb8] sm:$0xff]
  %v56 = vld [vmem:[%s3 + $0xc0] sm:$0xff]
  %v57 = vld [vmem:[%s3 + $0xc8] sm:$0xff]
  %v58 = vld [vmem:[%s3 + $0xd0] sm:$0xff]
  %v59 = vld [vmem:[%s3 + $0xd8] sm:$0xff]
  %v60 = vld [vmem:[%s3 + $0xe0] sm:$0xff]
  %v61 = vld [vmem:[%s3 + $0xe8] sm:$0xff]
  %v62 = vld [vmem:[%s3 + $0xf0] sm:$0xff]
  %v63 = vld [vmem:[%s3 + $0xf8] sm:$0xff]
  %v64 = vld [vmem:[%s3 + $0x100] sm:$0xff]
  %v65 = vld [vmem:[%s3 + $0x108] sm:$0xff]
  %v66 = vld [vmem:[%s3 + $0x110] sm:$0xff]
  %v67 = vld [vmem:[%s3 + $0x118] sm:$0xff]
  %v68 = vld [vmem:[%s3 + $0x120] sm:$0xff]
  %v69 = vld [vmem:[%s3 + $0x128] sm:$0xff]
  %v70 = vld [vmem:[%s3 + $0x130] sm:$0xff]
  %v71 = vld [vmem:[%s3 + $0x138] sm:$0xff]
  %v72 = vld [vmem:[%s3 + $0x140] sm:$0xff]
  %v73 = vld [vmem:[%s3 + $0x148] sm:$0xff]
  %v74 = vld [vmem:[%s3 + $0x150] sm:$0xff]
  %v75 = vld [vmem:[%s3 + $0x158] sm:$0xff]
  %v76 = vld [vmem:[%s3 + $0x160] sm:$0xff]
  %v77 = vld [vmem:[%s3 + $0x168] sm:$0xff]
  %v78 = vld [vmem:[%s3 + $0x170] sm:$0xff]
  %v79 = vld [vmem:[%s3 + $0x178] sm:$0xff]
  %v80 = vld [vmem:[%s3 + $0x180] sm:$0xff]
  %v81 = vld [vmem:[%s3 + $0x188] sm:$0xff]
  %v82 = vld [vmem:[%s3 + $0x190] sm:$0xff]
  %v83 = vld [vmem:[%s3 + $0x198] sm:$0xff]
  %v84 = vld [vmem:[%s3 + $0x1a0] sm:$0xff]
  %v85 = vld [vmem:[%s3 + $0x1a8] sm:$0xff]
  %v86 = vld [vmem:[%s3 + $0x1b0] sm:$0xff]
  %v87 = vld [vmem:[%s3 + $0x1b8] sm:$0xff]
  %v88 = vld [vmem:[%s3 + $0x1c0] sm:$0xff]
  %v89 = vld [vmem:[%s3 + $0x1c8] sm:$0xff]
  %v90 = vld [vmem:[%s3 + $0x1d0] sm:$0xff]
  %v91 = vld [vmem:[%s3 + $0x1d8] sm:$0xff]
  %v92 = vld [vmem:[%s3 + $0x1e0] sm:$0xff]
  %v93 = vld [vmem:[%s3 + $0x1e8] sm:$0xff]
  %v94 = vld [vmem:[%s3 + $0x1f0] sm:$0xff]
  %v95 = vld [vmem:[%s3 + $0x1f8] sm:$0xff]
  %v96 = vld [vmem:[%s3 + $0x200] sm:$0xff]
  %v97 = vld [vmem:[%s3 + $0x208] sm:$0xff]
  %v98 = vld [vmem:[%s3 + $0x210] sm:$0xff]
  %v99 = vld [vmem:[%s3 + $0x218] sm:$0xff]
  %v100 = vld [vmem:[%s3 + $0x220] sm:$0xff]
  %v101 = vld [vmem:[%s3 + $0x228] sm:$0xff]
  %v102 = vld [vmem:[%s3 + $0x230] sm:$0xff]
  %v103 = vld [vmem:[%s3 + $0x238] sm:$0xff]
  %v104 = vld [vmem:[%s3 + $0x240] sm:$0xff]
  %v105 = vld [vmem:[%s3 + $0x248] sm:$0xff]
  %v106 = vld [vmem:[%s3 + $0x250] sm:$0xff]
  %v107 = vld [vmem:[%s3 + $0x258] sm:$0xff]
  %v108 = vld [vmem:[%s3 + $0x260] sm:$0xff]
  %v109 = vld [vmem:[%s3 + $0x268] sm:$0xff]
  %v110 = vld [vmem:[%s3 + $0x270] sm:$0xff]
  %v111 = vld [vmem:[%s3 + $0x278] sm:$0xff]
  %v112 = vld [vmem:[%s3 + $0x280] sm:$0xff]
  %v113 = vld [vmem:[%s3 + $0x288] sm:$0xff]
  %v114 = vld [vmem:[%s3 + $0x290] sm:$0xff]
  %v115 = vld [vmem:[%s3 + $0x298] sm:$0xff]
  %v116 = vld [vmem:[%s3 + $0x2a0] sm:$0xff]
  %v117 = vld [vmem:[%s3 + $0x2a8] sm:$0xff]
  %v118 = vld [vmem:[%s3 + $0x2b0] sm:$0xff]
  %v119 = vld [vmem:[%s3 + $0x2b8] sm:$0xff]
  %v120 = vld [vmem:[%s3 + $0x2c0] sm:$0xff]
  %v121 = vld [vmem:[%s3 + $0x2c8] sm:$0xff]
  %v122 = vld [vmem:[%s3 + $0x2d0] sm:$0xff]
  %v123 = vld [vmem:[%s3 + $0x2d8] sm:$0xff]
  %v124 = vld [vmem:[%s3 + $0x2e0] sm:$0xff]
  %v125 = vld [vmem:[%s3 + $0x2e8] sm:$0xff]
  %v126 = vld [vmem:[%s3 + $0x2f0] sm:$0xff]
  %v127 = vld [vmem:[%s3 + $0x2f8] sm:$0xff]
  %v128 = vld [vmem:[%s3 + $0x300] sm:$0xff]
  %v129 = vld [vmem:[%s3 + $0x308] sm:$0xff]
  %v130 = vld [vmem:[%s3 + $0x310] sm:$0xff]
  %v131 = vld [vmem:[%s3 + $0x318] sm:$0xff]
  %v132 = vld [vmem:[%s3 + $0x320] sm:$0xff]
  %v133 = vld [vmem:[%s3 + $0x328] sm:$0xff]
  %v134 = vld [vmem:[%s3 + $0x330] sm:$0xff]
  %v135 = vld [vmem:[%s3 + $0x338] sm:$0xff]
  %v136 = vld [vmem:[%s3 + $0x340] sm:$0xff]
  %v137 = vld [vmem:[%s3 + $0x348] sm:$0xff]
  %v138 = vld [vmem:[%s3 + $0x350] sm:$0xff]
  %v139 = vld [vmem:[%s3 + $0x358] sm:$0xff]
  %v140 = vld [vmem:[%s3 + $0x360] sm:$0xff]
  %v141 = vld [vmem:[%s3 + $0x368] sm:$0xff]
  %v142 = vld [vmem:[%s3 + $0x370] sm:$0xff]
  %v143 = vld [vmem:[%s3 + $0x378] sm:$0xff]
  %v144 = vld [vmem:[%s3 + $0x380] sm:$0xff]
  %v145 = vld [vmem:[%s3 + $0x388] sm:$0xff]
  %v146 = vld [vmem:[%s3 + $0x390] sm:$0xff]
  %v147 = vld [vmem:[%s3 + $0x398] sm:$0xff]
  %v148 = vld [vmem:[%s3 + $0x3a0] sm:$0xff]
  %v149 = vld [vmem:[%s3 + $0x3a8] sm:$0xff]
  %v150 = vld [vmem:[%s3 + $0x3b0] sm:$0xff]
  %v151 = vld [vmem:[%s3 + $0x3b8] sm:$0xff]
  %v152 = vld [vmem:[%s3 + $0x3c0] sm:$0xff]
  %v153 = vld [vmem:[%s3 + $0x3c8] sm:$0xff]
  %v154 = vld [vmem:[%s3 + $0x3d0] sm:$0xff]
  %v155 = vld [vmem:[%s3 + $0x3d8] sm:$0xff]
  %v156 = vld [vmem:[%s3 + $0x3e0] sm:$0xff]
  %v157 = vld [vmem:[%s3 + $0x3e8] sm:$0xff]
  %v158 = vld [vmem:[%s3 + $0x3f0] sm:$0xff]
  %v159 = vld [vmem:[%s3 + $0x3f8] sm:$0xff]
  %v160 = vld [vmem:[%s3 + $0x400] sm:$0xff]
  %v161 = vld [vmem:[%s3 + $0x408] sm:$0xff]
  %v162 = vld [vmem:[%s3 + $0x410] sm:$0xff]
  %v163 = vld [vmem:[%s3 + $0x418] sm:$0xff]
  %v164 = vld [vmem:[%s3 + $0x420] sm:$0xff]
  %v165 = vld [vmem:[%s3 + $0x428] sm:$0xff]
  %v166 = vld [vmem:[%s3 + $0x430] sm:$0xff]
  %v167 = vld [vmem:[%s3 + $0x438] sm:$0xff]
  %v168 = vld [vmem:[%s3 + $0x440] sm:$0xff]
  %v169 = vld [vmem:[%s3 + $0x448] sm:$0xff]
  %v170 = vld [vmem:[%s3 + $0x450] sm:$0xff]
  %v171 = vld [vmem:[%s3 + $0x458] sm:$0xff]
  %v172 = vld [vmem:[%s3 + $0x460] sm:$0xff]
  %v173 = vld [vmem:[%s3 + $0x468] sm:$0xff]
  %v174 = vld [vmem:[%s3 + $0x470] sm:$0xff]
  %v175 = vld [vmem:[%s3 + $0x478] sm:$0xff]
  %v176 = vld [vmem:[%s3 + $0x480] sm:$0xff]
  %v177 = vld [vmem:[%s3 + $0x488] sm:$0xff]
  %v178 = vld [vmem:[%s3 + $0x490] sm:$0xff]
  %v179 = vld [vmem:[%s3 + $0x498] sm:$0xff]
  %v180 = vld [vmem:[%s3 + $0x4a0] sm:$0xff]
  %v181 = vld [vmem:[%s3 + $0x4a8] sm:$0xff]
  %v182 = vld [vmem:[%s3 + $0x4b0] sm:$0xff]
  %v183 = vld [vmem:[%s3 + $0x4b8] sm:$0xff]
  %v184 = vld [vmem:[%s3 + $0x4c0] sm:$0xff]
  %v185 = vld [vmem:[%s3 + $0x4c8] sm:$0xff]
  %v186 = vld [vmem:[%s3 + $0x4d0] sm:$0xff]
  %v187 = vld [vmem:[%s3 + $0x4d8] sm:$0xff]
  %v188 = vld [vmem:[%s3 + $0x4e0] sm:$0xff]
  %v189 = vld [vmem:[%s3 + $0x4e8] sm:$0xff]
  %v190 = vld [vmem:[%s3 + $0x4f0] sm:$0xff]
  %v191 = vld [vmem:[%s3 + $0x4f8] sm:$0xff]
  %v192 = vld [vmem:[%s3 + $0x500] sm:$0xff]
  %v193 = vld [vmem:[%s3 + $0x508] sm:$0xff]
  %v194 = vld [vmem:[%s4] sm:$0x7]
  %v195 = vld [vmem:[%s0] sm:$0x3f]
  %v196 = vld [vmem:[%s0 + $0x8] sm:$0x3f]
  %v197 = vld [vmem:[%s0 + $0x10] sm:$0x3f]
  %v198 = vld [vmem:[%s0 + $0x18] sm:$0x3f]
  %v200 = vperm.slane %v194, 0
  %v201 = vperm.slane %v194, 1
  %v202 = vperm.slane %v194, 2
  %vm206 = vcmask 392192
  %v208 = vsel %vm206, %v198, 0
  %210 = vmatpush.msra.mxu0 %v77
  %211 = vmatpush.msra.mxu0 %v74
  %212 = vmatpush.msra.mxu0 %v71
  %213 = vmatpush.msra.mxu0 %v68
  %214 = vmatpush.msra.mxu0 %v65
  %215 = vmatpush.msra.mxu0 %v62
  %216 = vmatpush.msra.mxu0 %v59
  %217 = vmatpush.msra.mxu0 %v56
  %218 = vmatpush.msra.mxu0 %v53
  %219 = vmatpush.msra.mxu0 %v50
  %220 = vmatpush.msra.mxu0 %v47
  %221 = vmatpush.msra.mxu0 %v44
  %222 = vmatpush.msra.mxu0 %v41
  %223 = vmatpush.msra.mxu0 %v38
  %224 = vmatpush.msra.mxu0 %v35
  %225 = vmatpush.msra.mxu0 %v32
  %226 = vmatmul.f32.gmra.mxu0 %v195
  %v227 = vpop.f32.mrf.mxu0
  %v228 = vadd.f32 %v200, %v227
  %229 = vdwg.mxu0
  %230 = vmatpush.msra.mxu0 %v125
  %231 = vmatpush.msra.mxu0 %v122
  %232 = vmatpush.msra.mxu0 %v119
  %233 = vmatpush.msra.mxu0 %v116
  %234 = vmatpush.msra.mxu0 %v113
  %235 = vmatpush.msra.mxu0 %v110
  %236 = vmatpush.msra.mxu0 %v107
  %237 = vmatpush.msra.mxu0 %v104
  %238 = vmatpush.msra.mxu0 %v101
  %239 = vmatpush.msra.mxu0 %v98
  %240 = vmatpush.msra.mxu0 %v95
  %241 = vmatpush.msra.mxu0 %v92
  %242 = vmatpush.msra.mxu0 %v89
  %243 = vmatpush.msra.mxu0 %v86
  %244 = vmatpush.msra.mxu0 %v83
  %245 = vmatpush.msra.mxu0 %v80
  %246 = vmatmul.f32.gmra.mxu0 %v196
  %v247 = vpop.f32.mrf.mxu0
  %v248 = vadd.f32 %v228, %v247
  %249 = vdwg.mxu0
  %250 = vmatpush.msra.mxu0 %v173
  %251 = vmatpush.msra.mxu0 %v170
  %252 = vmatpush.msra.mxu0 %v167
  %253 = vmatpush.msra.mxu0 %v164
  %254 = vmatpush.msra.mxu0 %v161
  %255 = vmatpush.msra.mxu0 %v158
  %256 = vmatpush.msra.mxu0 %v155
  %257 = vmatpush.msra.mxu0 %v152
  %258 = vmatpush.msra.mxu0 %v149
  %259 = vmatpush.msra.mxu0 %v146
  %260 = vmatpush.msra.mxu0 %v143
  %261 = vmatpush.msra.mxu0 %v140
  %262 = vmatpush.msra.mxu0 %v137
  %263 = vmatpush.msra.mxu0 %v134
  %264 = vmatpush.msra.mxu0 %v131
  %265 = vmatpush.msra.mxu0 %v128
  %266 = vmatmul.f32.gmra.mxu0 %v197
  %v267 = vpop.f32.mrf.mxu0
  %v268 = vadd.f32 %v248, %v267
  %269 = vdwg.mxu0
  %270 = vmatpush.msra.mxu0 0.0
  %271 = vmatpush.msra.mxu0 0.0
  %272 = vmatpush.msra.mxu0 0.0
  %273 = vmatpush.msra.mxu0 0.0
  %274 = vmatpush.msra.mxu0 0.0
  %275 = vmatpush.msra.mxu0 0.0
  %276 = vmatpush.msra.mxu0 0.0
  %277 = vmatpush.msra.mxu0 0.0
  %278 = vmatpush.msra.mxu0 0.0
  %279 = vmatpush.msra.mxu0 0.0
  %280 = vmatpush.msra.mxu0 %v191
  %281 = vmatpush.msra.mxu0 %v188
  %282 = vmatpush.msra.mxu0 %v185
  %283 = vmatpush.msra.mxu0 %v182
  %284 = vmatpush.msra.mxu0 %v179
  %285 = vmatpush.msra.mxu0 %v176
  %286 = vmatmul.f32.gmra.mxu0 %v208
  %v287 = vpop.f32.mrf.mxu0
  %v288 = vadd.f32 %v268, %v287
  %289 = vdwg.mxu0
  %290 = vmatpush.msra.mxu0 %v78
  %291 = vmatpush.msra.mxu0 %v75
  %292 = vmatpush.msra.mxu0 %v72
  %293 = vmatpush.msra.mxu0 %v69
  %294 = vmatpush.msra.mxu0 %v66
  %295 = vmatpush.msra.mxu0 %v63
  %296 = vmatpush.msra.mxu0 %v60
  %297 = vmatpush.msra.mxu0 %v57
  %298 = vmatpush.msra.mxu0 %v54
  %299 = vmatpush.msra.mxu0 %v51
  %300 = vmatpush.msra.mxu0 %v48
  %301 = vmatpush.msra.mxu0 %v45
  %302 = vmatpush.msra.mxu0 %v42
  %303 = vmatpush.msra.mxu0 %v39
  %304 = vmatpush.msra.mxu0 %v36
  %305 = vmatpush.msra.mxu0 %v33
  %306 = vmatmul.f32.gmra.mxu0 %v195
  %v307 = vpop.f32.mrf.mxu0
  %v308 = vadd.f32 %v201, %v307
  %309 = vdwg.mxu0
  %310 = vmatpush.msra.mxu0 %v126
  %311 = vmatpush.msra.mxu0 %v123
  %312 = vmatpush.msra.mxu0 %v120
  %313 = vmatpush.msra.mxu0 %v117
  %314 = vmatpush.msra.mxu0 %v114
  %315 = vmatpush.msra.mxu0 %v111
  %316 = vmatpush.msra.mxu0 %v108
  %317 = vmatpush.msra.mxu0 %v105
  %318 = vmatpush.msra.mxu0 %v102
  %319 = vmatpush.msra.mxu0 %v99
  %320 = vmatpush.msra.mxu0 %v96
  %321 = vmatpush.msra.mxu0 %v93
  %322 = vmatpush.msra.mxu0 %v90
  %323 = vmatpush.msra.mxu0 %v87
  %324 = vmatpush.msra.mxu0 %v84
  %325 = vmatpush.msra.mxu0 %v81
  %326 = vmatmul.f32.gmra.mxu0 %v196
  %v327 = vpop.f32.mrf.mxu0
  %v328 = vadd.f32 %v308, %v327
  %329 = vdwg.mxu0
  %330 = vmatpush.msra.mxu0 %v174
  %331 = vmatpush.msra.mxu0 %v171
  %332 = vmatpush.msra.mxu0 %v168
  %333 = vmatpush.msra.mxu0 %v165
  %334 = vmatpush.msra.mxu0 %v162
  %335 = vmatpush.msra.mxu0 %v159
  %336 = vmatpush.msra.mxu0 %v156
  %337 = vmatpush.msra.mxu0 %v153
  %338 = vmatpush.msra.mxu0 %v150
  %339 = vmatpush.msra.mxu0 %v147
  %340 = vmatpush.msra.mxu0 %v144
  %341 = vmatpush.msra.mxu0 %v141
  %342 = vmatpush.msra.mxu0 %v138
  %343 = vmatpush.msra.mxu0 %v135
  %344 = vmatpush.msra.mxu0 %v132
  %345 = vmatpush.msra.mxu0 %v129
  %346 = vmatmul.f32.gmra.mxu0 %v197
  %v347 = vpop.f32.mrf.mxu0
  %v348 = vadd.f32 %v328, %v347
  %349 = vdwg.mxu0
  %350 = vmatpush.msra.mxu0 0.0
  %351 = vmatpush.msra.mxu0 0.0
  %352 = vmatpush.msra.mxu0 0.0
  %353 = vmatpush.msra.mxu0 0.0
  %354 = vmatpush.msra.mxu0 0.0
  %355 = vmatpush.msra.mxu0 0.0
  %356 = vmatpush.msra.mxu0 0.0
  %357 = vmatpush.msra.mxu0 0.0
  %358 = vmatpush.msra.mxu0 0.0
  %359 = vmatpush.msra.mxu0 0.0
  %360 = vmatpush.msra.mxu0 %v192
  %361 = vmatpush.msra.mxu0 %v189
  %362 = vmatpush.msra.mxu0 %v186
  %363 = vmatpush.msra.mxu0 %v183
  %364 = vmatpush.msra.mxu0 %v180
  %365 = vmatpush.msra.mxu0 %v177
  %366 = vmatmul.f32.gmra.mxu0 %v208
  %v367 = vpop.f32.mrf.mxu0
  %v368 = vadd.f32 %v348, %v367
  %369 = vdwg.mxu0
  %370 = vmatpush.msra.mxu0 %v79
  %371 = vmatpush.msra.mxu0 %v76
  %372 = vmatpush.msra.mxu0 %v73
  %373 = vmatpush.msra.mxu0 %v70
  %374 = vmatpush.msra.mxu0 %v67
  %375 = vmatpush.msra.mxu0 %v64
  %376 = vmatpush.msra.mxu0 %v61
  %377 = vmatpush.msra.mxu0 %v58
  %378 = vmatpush.msra.mxu0 %v55
  %379 = vmatpush.msra.mxu0 %v52
  %380 = vmatpush.msra.mxu0 %v49
  %381 = vmatpush.msra.mxu0 %v46
  %382 = vmatpush.msra.mxu0 %v43
  %383 = vmatpush.msra.mxu0 %v40
  %384 = vmatpush.msra.mxu0 %v37
  %385 = vmatpush.msra.mxu0 %v34
  %386 = vmatmul.f32.gmra.mxu0 %v195
  %v387 = vpop.f32.mrf.mxu0
  %v388 = vadd.f32 %v202, %v387
  %389 = vdwg.mxu0
  %390 = vmatpush.msra.mxu0 %v127
  %391 = vmatpush.msra.mxu0 %v124
  %392 = vmatpush.msra.mxu0 %v121
  %393 = vmatpush.msra.mxu0 %v118
  %394 = vmatpush.msra.mxu0 %v115
  %395 = vmatpush.msra.mxu0 %v112
  %396 = vmatpush.msra.mxu0 %v109
  %397 = vmatpush.msra.mxu0 %v106
  %398 = vmatpush.msra.mxu0 %v103
  %399 = vmatpush.msra.mxu0 %v100
  %400 = vmatpush.msra.mxu0 %v97
  %401 = vmatpush.msra.mxu0 %v94
  %402 = vmatpush.msra.mxu0 %v91
  %403 = vmatpush.msra.mxu0 %v88
  %404 = vmatpush.msra.mxu0 %v85
  %405 = vmatpush.msra.mxu0 %v82
  %406 = vmatmul.f32.gmra.mxu0 %v196
  %v407 = vpop.f32.mrf.mxu0
  %v408 = vadd.f32 %v388, %v407
  %409 = vdwg.mxu0
  %410 = vmatpush.msra.mxu0 %v175
  %411 = vmatpush.msra.mxu0 %v172
  %412 = vmatpush.msra.mxu0 %v169
  %413 = vmatpush.msra.mxu0 %v166
  %414 = vmatpush.msra.mxu0 %v163
  %415 = vmatpush.msra.mxu0 %v160
  %416 = vmatpush.msra.mxu0 %v157
  %417 = vmatpush.msra.mxu0 %v154
  %418 = vmatpush.msra.mxu0 %v151
  %419 = vmatpush.msra.mxu0 %v148
  %420 = vmatpush.msra.mxu0 %v145
  %421 = vmatpush.msra.mxu0 %v142
  %422 = vmatpush.msra.mxu0 %v139
  %423 = vmatpush.msra.mxu0 %v136
  %424 = vmatpush.msra.mxu0 %v133
  %425 = vmatpush.msra.mxu0 %v130
  %426 = vmatmul.f32.gmra.mxu0 %v197
  %v427 = vpop.f32.mrf.mxu0
  %v428 = vadd.f32 %v408, %v427
  %429 = vdwg.mxu0
  %430 = vmatpush.msra.mxu0 0.0
  %431 = vmatpush.msra.mxu0 0.0
  %432 = vmatpush.msra.mxu0 0.0
  %433 = vmatpush.msra.mxu0 0.0
  %434 = vmatpush.msra.mxu0 0.0
  %435 = vmatpush.msra.mxu0 0.0
  %436 = vmatpush.msra.mxu0 0.0
  %437 = vmatpush.msra.mxu0 0.0
  %438 = vmatpush.msra.mxu0 0.0
  %439 = vmatpush.msra.mxu0 0.0
  %440 = vmatpush.msra.mxu0 %v193
  %441 = vmatpush.msra.mxu0 %v190
  %442 = vmatpush.msra.mxu0 %v187
  %443 = vmatpush.msra.mxu0 %v184
  %444 = vmatpush.msra.mxu0 %v181
  %445 = vmatpush.msra.mxu0 %v178
  %446 = vmatmul.f32.gmra.mxu0 %v208
  %v447 = vpop.f32.mrf.mxu0
  %v448 = vadd.f32 %v428, %v447
  %449 = vdwg.mxu0
  %v450 = vmax.f32 %v288, 0.0
  %v451 = vmax.f32 %v368, 0.0
  %v452 = vmax.f32 %v448, 0.0
  %v453 = vld [vmem:[%s1] sm:$0x3f]
  %v454 = vld [vmem:[%s1 + $0x8] sm:$0x3f]
  %v455 = vld [vmem:[%s1 + $0x10] sm:$0x3f]
  %v456 = vld [vmem:[%s1 + $0x18] sm:$0x3f]
  %v458 = vsel %vm206, %v456, 0
  %460 = vmatpush.msra.mxu0 %v77
  %461 = vmatpush.msra.mxu0 %v74
  %462 = vmatpush.msra.mxu0 %v71
  %463 = vmatpush.msra.mxu0 %v68
  %464 = vmatpush.msra.mxu0 %v65
  %465 = vmatpush.msra.mxu0 %v62
  %466 = vmatpush.msra.mxu0 %v59
  %467 = vmatpush.msra.mxu0 %v56
  %468 = vmatpush.msra.mxu0 %v53
  %469 = vmatpush.msra.mxu0 %v50
  %470 = vmatpush.msra.mxu0 %v47
  %471 = vmatpush.msra.mxu0 %v44
  %472 = vmatpush.msra.mxu0 %v41
  %473 = vmatpush.msra.mxu0 %v38
  %474 = vmatpush.msra.mxu0 %v35
  %475 = vmatpush.msra.mxu0 %v32
  %476 = vmatmul.f32.gmra.mxu0 %v453
  %v477 = vpop.f32.mrf.mxu0
  %v478 = vadd.f32 %v200, %v477
  %479 = vdwg.mxu0
  %480 = vmatpush.msra.mxu0 %v125
  %481 = vmatpush.msra.mxu0 %v122
  %482 = vmatpush.msra.mxu0 %v119
  %483 = vmatpush.msra.mxu0 %v116
  %484 = vmatpush.msra.mxu0 %v113
  %485 = vmatpush.msra.mxu0 %v110
  %486 = vmatpush.msra.mxu0 %v107
  %487 = vmatpush.msra.mxu0 %v104
  %488 = vmatpush.msra.mxu0 %v101
  %489 = vmatpush.msra.mxu0 %v98
  %490 = vmatpush.msra.mxu0 %v95
  %491 = vmatpush.msra.mxu0 %v92
  %492 = vmatpush.msra.mxu0 %v89
  %493 = vmatpush.msra.mxu0 %v86
  %494 = vmatpush.msra.mxu0 %v83
  %495 = vmatpush.msra.mxu0 %v80
  %496 = vmatmul.f32.gmra.mxu0 %v454
  %v497 = vpop.f32.mrf.mxu0
  %v498 = vadd.f32 %v478, %v497
  %499 = vdwg.mxu0
  %500 = vmatpush.msra.mxu0 %v173
  %501 = vmatpush.msra.mxu0 %v170
  %502 = vmatpush.msra.mxu0 %v167
  %503 = vmatpush.msra.mxu0 %v164
  %504 = vmatpush.msra.mxu0 %v161
  %505 = vmatpush.msra.mxu0 %v158
  %506 = vmatpush.msra.mxu0 %v155
  %507 = vmatpush.msra.mxu0 %v152
  %508 = vmatpush.msra.mxu0 %v149
  %509 = vmatpush.msra.mxu0 %v146
  %510 = vmatpush.msra.mxu0 %v143
  %511 = vmatpush.msra.mxu0 %v140
  %512 = vmatpush.msra.mxu0 %v137
  %513 = vmatpush.msra.mxu0 %v134
  %514 = vmatpush.msra.mxu0 %v131
  %515 = vmatpush.msra.mxu0 %v128
  %516 = vmatmul.f32.gmra.mxu0 %v455
  %v517 = vpop.f32.mrf.mxu0
  %v518 = vadd.f32 %v498, %v517
  %519 = vdwg.mxu0
  %520 = vmatpush.msra.mxu0 0.0
  %521 = vmatpush.msra.mxu0 0.0
  %522 = vmatpush.msra.mxu0 0.0
  %523 = vmatpush.msra.mxu0 0.0
  %524 = vmatpush.msra.mxu0 0.0
  %525 = vmatpush.msra.mxu0 0.0
  %526 = vmatpush.msra.mxu0 0.0
  %527 = vmatpush.msra.mxu0 0.0
  %528 = vmatpush.msra.mxu0 0.0
  %529 = vmatpush.msra.mxu0 0.0
  %530 = vmatpush.msra.mxu0 %v191
  %531 = vmatpush.msra.mxu0 %v188
  %532 = vmatpush.msra.mxu0 %v185
  %533 = vmatpush.msra.mxu0 %v182
  %534 = vmatpush.msra.mxu0 %v179
  %535 = vmatpush.msra.mxu0 %v176
  %536 = vmatmul.f32.gmra.mxu0 %v458
  %v537 = vpop.f32.mrf.mxu0
  %v538 = vadd.f32 %v518, %v537
  %539 = vdwg.mxu0
  %540 = vmatpush.msra.mxu0 %v78
  %541 = vmatpush.msra.mxu0 %v75
  %542 = vmatpush.msra.mxu0 %v72
  %543 = vmatpush.msra.mxu0 %v69
  %544 = vmatpush.msra.mxu0 %v66
  %545 = vmatpush.msra.mxu0 %v63
  %546 = vmatpush.msra.mxu0 %v60
  %547 = vmatpush.msra.mxu0 %v57
  %548 = vmatpush.msra.mxu0 %v54
  %549 = vmatpush.msra.mxu0 %v51
  %550 = vmatpush.msra.mxu0 %v48
  %551 = vmatpush.msra.mxu0 %v45
  %552 = vmatpush.msra.mxu0 %v42
  %553 = vmatpush.msra.mxu0 %v39
  %554 = vmatpush.msra.mxu0 %v36
  %555 = vmatpush.msra.mxu0 %v33
  %556 = vmatmul.f32.gmra.mxu0 %v453
  %v557 = vpop.f32.mrf.mxu0
  %v558 = vadd.f32 %v201, %v557
  %559 = vdwg.mxu0
  %560 = vmatpush.msra.mxu0 %v126
  %561 = vmatpush.msra.mxu0 %v123
  %562 = vmatpush.msra.mxu0 %v120
  %563 = vmatpush.msra.mxu0 %v117
  %564 = vmatpush.msra.mxu0 %v114
  %565 = vmatpush.msra.mxu0 %v111
  %566 = vmatpush.msra.mxu0 %v108
  %567 = vmatpush.msra.mxu0 %v105
  %568 = vmatpush.msra.mxu0 %v102
  %569 = vmatpush.msra.mxu0 %v99
  %570 = vmatpush.msra.mxu0 %v96
  %571 = vmatpush.msra.mxu0 %v93
  %572 = vmatpush.msra.mxu0 %v90
  %573 = vmatpush.msra.mxu0 %v87
  %574 = vmatpush.msra.mxu0 %v84
  %575 = vmatpush.msra.mxu0 %v81
  %576 = vmatmul.f32.gmra.mxu0 %v454
  %v577 = vpop.f32.mrf.mxu0
  %v578 = vadd.f32 %v558, %v577
  %579 = vdwg.mxu0
  %580 = vmatpush.msra.mxu0 %v174
  %581 = vmatpush.msra.mxu0 %v171
  %582 = vmatpush.msra.mxu0 %v168
  %583 = vmatpush.msra.mxu0 %v165
  %584 = vmatpush.msra.mxu0 %v162
  %585 = vmatpush.msra.mxu0 %v159
  %586 = vmatpush.msra.mxu0 %v156
  %587 = vmatpush.msra.mxu0 %v153
  %588 = vmatpush.msra.mxu0 %v150
  %589 = vmatpush.msra.mxu0 %v147
  %590 = vmatpush.msra.mxu0 %v144
  %591 = vmatpush.msra.mxu0 %v141
  %592 = vmatpush.msra.mxu0 %v138
  %593 = vmatpush.msra.mxu0 %v135
  %594 = vmatpush.msra.mxu0 %v132
  %595 = vmatpush.msra.mxu0 %v129
  %596 = vmatmul.f32.gmra.mxu0 %v455
  %v597 = vpop.f32.mrf.mxu0
  %v598 = vadd.f32 %v578, %v597
  %599 = vdwg.mxu0
  %600 = vmatpush.msra.mxu0 0.0
  %601 = vmatpush.msra.mxu0 0.0
  %602 = vmatpush.msra.mxu0 0.0
  %603 = vmatpush.msra.mxu0 0.0
  %604 = vmatpush.msra.mxu0 0.0
  %605 = vmatpush.msra.mxu0 0.0
  %606 = vmatpush.msra.mxu0 0.0
  %607 = vmatpush.msra.mxu0 0.0
  %608 = vmatpush.msra.mxu0 0.0
  %609 = vmatpush.msra.mxu0 0.0
  %610 = vmatpush.msra.mxu0 %v192
  %611 = vmatpush.msra.mxu0 %v189
  %612 = vmatpush.msra.mxu0 %v186
  %613 = vmatpush.msra.mxu0 %v183
  %614 = vmatpush.msra.mxu0 %v180
  %615 = vmatpush.msra.mxu0 %v177
  %616 = vmatmul.f32.gmra.mxu0 %v458
  %v617 = vpop.f32.mrf.mxu0
  %v618 = vadd.f32 %v598, %v617
  %619 = vdwg.mxu0
  %620 = vmatpush.msra.mxu0 %v79
  %621 = vmatpush.msra.mxu0 %v76
  %622 = vmatpush.msra.mxu0 %v73
  %623 = vmatpush.msra.mxu0 %v70
  %624 = vmatpush.msra.mxu0 %v67
  %625 = vmatpush.msra.mxu0 %v64
  %626 = vmatpush.msra.mxu0 %v61
  %627 = vmatpush.msra.mxu0 %v58
  %628 = vmatpush.msra.mxu0 %v55
  %629 = vmatpush.msra.mxu0 %v52
  %630 = vmatpush.msra.mxu0 %v49
  %631 = vmatpush.msra.mxu0 %v46
  %632 = vmatpush.msra.mxu0 %v43
  %633 = vmatpush.msra.mxu0 %v40
  %634 = vmatpush.msra.mxu0 %v37
  %635 = vmatpush.msra.mxu0 %v34
  %636 = vmatmul.f32.gmra.mxu0 %v453
  %v637 = vpop.f32.mrf.mxu0
  %v638 = vadd.f32 %v202, %v637
  %639 = vdwg.mxu0
  %640 = vmatpush.msra.mxu0 %v127
  %641 = vmatpush.msra.mxu0 %v124
  %642 = vmatpush.msra.mxu0 %v121
  %643 = vmatpush.msra.mxu0 %v118
  %644 = vmatpush.msra.mxu0 %v115
  %645 = vmatpush.msra.mxu0 %v112
  %646 = vmatpush.msra.mxu0 %v109
  %647 = vmatpush.msra.mxu0 %v106
  %648 = vmatpush.msra.mxu0 %v103
  %649 = vmatpush.msra.mxu0 %v100
  %650 = vmatpush.msra.mxu0 %v97
  %651 = vmatpush.msra.mxu0 %v94
  %652 = vmatpush.msra.mxu0 %v91
  %653 = vmatpush.msra.mxu0 %v88
  %654 = vmatpush.msra.mxu0 %v85
  %655 = vmatpush.msra.mxu0 %v82
  %656 = vmatmul.f32.gmra.mxu0 %v454
  %v657 = vpop.f32.mrf.mxu0
  %v658 = vadd.f32 %v638, %v657
  %659 = vdwg.mxu0
  %660 = vmatpush.msra.mxu0 %v175
  %661 = vmatpush.msra.mxu0 %v172
  %662 = vmatpush.msra.mxu0 %v169
  %663 = vmatpush.msra.mxu0 %v166
  %664 = vmatpush.msra.mxu0 %v163
  %665 = vmatpush.msra.mxu0 %v160
  %666 = vmatpush.msra.mxu0 %v157
  %667 = vmatpush.msra.mxu0 %v154
  %668 = vmatpush.msra.mxu0 %v151
  %669 = vmatpush.msra.mxu0 %v148
  %670 = vmatpush.msra.mxu0 %v145
  %671 = vmatpush.msra.mxu0 %v142
  %672 = vmatpush.msra.mxu0 %v139
  %673 = vmatpush.msra.mxu0 %v136
  %674 = vmatpush.msra.mxu0 %v133
  %675 = vmatpush.msra.mxu0 %v130
  %676 = vmatmul.f32.gmra.mxu0 %v455
  %v677 = vpop.f32.mrf.mxu0
  %v678 = vadd.f32 %v658, %v677
  %679 = vdwg.mxu0
  %680 = vmatpush.msra.mxu0 0.0
  %681 = vmatpush.msra.mxu0 0.0
  %682 = vmatpush.msra.mxu0 0.0
  %683 = vmatpush.msra.mxu0 0.0
  %684 = vmatpush.msra.mxu0 0.0
  %685 = vmatpush.msra.mxu0 0.0
  %686 = vmatpush.msra.mxu0 0.0
  %687 = vmatpush.msra.mxu0 0.0
  %688 = vmatpush.msra.mxu0 0.0
  %689 = vmatpush.msra.mxu0 0.0
  %690 = vmatpush.msra.mxu0 %v193
  %691 = vmatpush.msra.mxu0 %v190
  %692 = vmatpush.msra.mxu0 %v187
  %693 = vmatpush.msra.mxu0 %v184
  %694 = vmatpush.msra.mxu0 %v181
  %695 = vmatpush.msra.mxu0 %v178
  %696 = vmatmul.f32.gmra.mxu0 %v458
  %v697 = vpop.f32.mrf.mxu0
  %v698 = vadd.f32 %v678, %v697
  %699 = vdwg.mxu0
  %v700 = vmax.f32 %v538, 0.0
  %v701 = vmax.f32 %v618, 0.0
  %v702 = vmax.f32 %v698, 0.0
  %vm703 = vcmask 1045504
  %v704 = vsel %vm703, %v450, 0.0
  %v705 = vrot.slane %v704, 4
  %v706 = vadd.f32 %v704, %v705
  %v707 = vrot.slane %v706, 2
  %v708 = vadd.f32 %v706, %v707
  %v709 = vrot.slane %v708, 1
  %v710 = vadd.f32 %v708, %v709
  %v711 = vsel %vm703, %v451, 0.0
  %v712 = vrot.slane %v711, 4
  %v713 = vadd.f32 %v711, %v712
  %v714 = vrot.slane %v713, 2
  %v715 = vadd.f32 %v713, %v714
  %v716 = vrot.slane %v715, 1
  %v717 = vadd.f32 %v715, %v716
  %vm718 = vcmask 259072
  %v719 = vsel %vm718, %v452, 0.0
  %v720 = vrot.slane %v719, 4
  %v721 = vadd.f32 %v719, %v720
  %v722 = vrot.slane %v721, 2
  %v723 = vadd.f32 %v721, %v722
  %v724 = vrot.slane %v723, 1
  %v725 = vadd.f32 %v723, %v724
  %v726 = vsel %vm703, %v700, 0.0
  %v727 = vrot.slane %v726, 4
  %v728 = vadd.f32 %v726, %v727
  %v729 = vrot.slane %v728, 2
  %v730 = vadd.f32 %v728, %v729
  %v731 = vrot.slane %v730, 1
  %v732 = vadd.f32 %v730, %v731
  %v733 = vsel %vm703, %v701, 0.0
  %v734 = vrot.slane %v733, 4
  %v735 = vadd.f32 %v733, %v734
  %v736 = vrot.slane %v735, 2
  %v737 = vadd.f32 %v735, %v736
  %v738 = vrot.slane %v737, 1
  %v739 = vadd.f32 %v737, %v738
  %v740 = vsel %vm718, %v702, 0.0
  %v741 = vrot.slane %v740, 4
  %v742 = vadd.f32 %v740, %v741
  %v743 = vrot.slane %v742, 2
  %v744 = vadd.f32 %v742, %v743
  %v745 = vrot.slane %v744, 1
  %v746 = vadd.f32 %v744, %v745
  %v747 = vadd.f32 %v710, %v732
  %v748 = vadd.f32 %v717, %v739
  %v749 = vadd.f32 %v725, %v746
  %v750 = vmul.f32 %v450, %v450
  %v751 = vmul.f32 %v451, %v451
  %v752 = vmul.f32 %v452, %v452
  %v753 = vsel %vm703, %v750, 0.0
  %v754 = vrot.slane %v753, 4
  %v755 = vadd.f32 %v753, %v754
  %v756 = vrot.slane %v755, 2
  %v757 = vadd.f32 %v755, %v756
  %v758 = vrot.slane %v757, 1
  %v759 = vadd.f32 %v757, %v758
  %v760 = vsel %vm703, %v751, 0.0
  %v761 = vrot.slane %v760, 4
  %v762 = vadd.f32 %v760, %v761
  %v763 = vrot.slane %v762, 2
  %v764 = vadd.f32 %v762, %v763
  %v765 = vrot.slane %v764, 1
  %v766 = vadd.f32 %v764, %v765
  %v767 = vsel %vm718, %v752, 0.0
  %v768 = vrot.slane %v767, 4
  %v769 = vadd.f32 %v767, %v768
  %v770 = vrot.slane %v769, 2
  %v771 = vadd.f32 %v769, %v770
  %v772 = vrot.slane %v771, 1
  %v773 = vadd.f32 %v771, %v772
  %v774 = vmul.f32 %v700, %v700
  %v775 = vmul.f32 %v701, %v701
  %v776 = vmul.f32 %v702, %v702
  %v777 = vsel %vm703, %v774, 0.0
  %v778 = vrot.slane %v777, 4
  %v779 = vadd.f32 %v777, %v778
  %v780 = vrot.slane %v779, 2
  %v781 = vadd.f32 %v779, %v780
  %v782 = vrot.slane %v781, 1
  %v783 = vadd.f32 %v781, %v782
  %v784 = vsel %vm703, %v775, 0.0
  %v785 = vrot.slane %v784, 4
  %v786 = vadd.f32 %v784, %v785
  %v787 = vrot.slane %v786, 2
  %v788 = vadd.f32 %v786, %v787
  %v789 = vrot.slane %v788, 1
  %v790 = vadd.f32 %v788, %v789
  %v791 = vsel %vm718, %v776, 0.0
  %v792 = vrot.slane %v791, 4
  %v793 = vadd.f32 %v791, %v792
  %v794 = vrot.slane %v793, 2
  %v795 = vadd.f32 %v793, %v794
  %v796 = vrot.slane %v795, 1
  %v797 = vadd.f32 %v795, %v796
  %v798 = vadd.f32 %v759, %v783
  %v799 = vadd.f32 %v766, %v790
  %v800 = vadd.f32 %v773, %v797
  %v801 = vld [vmem:[%s2] sm:$0xff]
  %803 = vst [vmem:[#allocation1] ss:$4 sm:$0xff] %v801
  %v804 = vld.sshfl [vmem:[#allocation1] sm:$0xff pattern:$0x73625140]
  %v805 = vld.sshfl [vmem:[#allocation1 + $0x8] sm:$0xff pattern:$0x73625140]
  %v806 = vld.sshfl [vmem:[#allocation1 + $0x10] sm:$0xff pattern:$0x73625140]
  %v807 = vld.sshfl [vmem:[#allocation1 + $0x18] sm:$0xff pattern:$0x73625140]
  %v811 = vsel %vm206, %v807, 0
  %813 = vmatpush.msra.mxu0 %v77
  %814 = vmatpush.msra.mxu0 %v74
  %815 = vmatpush.msra.mxu0 %v71
  %816 = vmatpush.msra.mxu0 %v68
  %817 = vmatpush.msra.mxu0 %v65
  %818 = vmatpush.msra.mxu0 %v62
  %819 = vmatpush.msra.mxu0 %v59
  %820 = vmatpush.msra.mxu0 %v56
  %821 = vmatpush.msra.mxu0 %v53
  %822 = vmatpush.msra.mxu0 %v50
  %823 = vmatpush.msra.mxu0 %v47
  %824 = vmatpush.msra.mxu0 %v44
  %825 = vmatpush.msra.mxu0 %v41
  %826 = vmatpush.msra.mxu0 %v38
  %827 = vmatpush.msra.mxu0 %v35
  %828 = vmatpush.msra.mxu0 %v32
  %829 = vmatmul.f32.gmra.mxu0 %v804
  %v830 = vpop.f32.mrf.mxu0
  %v831 = vadd.f32 %v200, %v830
  %832 = vdwg.mxu0
  %833 = vmatpush.msra.mxu0 %v125
  %834 = vmatpush.msra.mxu0 %v122
  %835 = vmatpush.msra.mxu0 %v119
  %836 = vmatpush.msra.mxu0 %v116
  %837 = vmatpush.msra.mxu0 %v113
  %838 = vmatpush.msra.mxu0 %v110
  %839 = vmatpush.msra.mxu0 %v107
  %840 = vmatpush.msra.mxu0 %v104
  %841 = vmatpush.msra.mxu0 %v101
  %842 = vmatpush.msra.mxu0 %v98
  %843 = vmatpush.msra.mxu0 %v95
  %844 = vmatpush.msra.mxu0 %v92
  %845 = vmatpush.msra.mxu0 %v89
  %846 = vmatpush.msra.mxu0 %v86
  %847 = vmatpush.msra.mxu0 %v83
  %848 = vmatpush.msra.mxu0 %v80
  %849 = vmatmul.f32.gmra.mxu0 %v805
  %v850 = vpop.f32.mrf.mxu0
  %v851 = vadd.f32 %v831, %v850
  %852 = vdwg.mxu0
  %853 = vmatpush.msra.mxu0 %v173
  %854 = vmatpush.msra.mxu0 %v170
  %855 = vmatpush.msra.mxu0 %v167
  %856 = vmatpush.msra.mxu0 %v164
  %857 = vmatpush.msra.mxu0 %v161
  %858 = vmatpush.msra.mxu0 %v158
  %859 = vmatpush.msra.mxu0 %v155
  %860 = vmatpush.msra.mxu0 %v152
  %861 = vmatpush.msra.mxu0 %v149
  %862 = vmatpush.msra.mxu0 %v146
  %863 = vmatpush.msra.mxu0 %v143
  %864 = vmatpush.msra.mxu0 %v140
  %865 = vmatpush.msra.mxu0 %v137
  %866 = vmatpush.msra.mxu0 %v134
  %867 = vmatpush.msra.mxu0 %v131
  %868 = vmatpush.msra.mxu0 %v128
  %869 = vmatmul.f32.gmra.mxu0 %v806
  %v870 = vpop.f32.mrf.mxu0
  %v871 = vadd.f32 %v851, %v870
  %872 = vdwg.mxu0
  %873 = vmatpush.msra.mxu0 0.0
  %874 = vmatpush.msra.mxu0 0.0
  %875 = vmatpush.msra.mxu0 0.0
  %876 = vmatpush.msra.mxu0 0.0
  %877 = vmatpush.msra.mxu0 0.0
  %878 = vmatpush.msra.mxu0 0.0
  %879 = vmatpush.msra.mxu0 0.0
  %880 = vmatpush.msra.mxu0 0.0
  %881 = vmatpush.msra.mxu0 0.0
  %882 = vmatpush.msra.mxu0 0.0
  %883 = vmatpush.msra.mxu0 %v191
  %884 = vmatpush.msra.mxu0 %v188
  %885 = vmatpush.msra.mxu0 %v185
  %886 = vmatpush.msra.mxu0 %v182
  %887 = vmatpush.msra.mxu0 %v179
  %888 = vmatpush.msra.mxu0 %v176
  %889 = vmatmul.f32.gmra.mxu0 %v811
  %v890 = vpop.f32.mrf.mxu0
  %v891 = vadd.f32 %v871, %v890
  %892 = vdwg.mxu0
  %893 = vmatpush.msra.mxu0 %v78
  %894 = vmatpush.msra.mxu0 %v75
  %895 = vmatpush.msra.mxu0 %v72
  %896 = vmatpush.msra.mxu0 %v69
  %897 = vmatpush.msra.mxu0 %v66
  %898 = vmatpush.msra.mxu0 %v63
  %899 = vmatpush.msra.mxu0 %v60
  %900 = vmatpush.msra.mxu0 %v57
  %901 = vmatpush.msra.mxu0 %v54
  %902 = vmatpush.msra.mxu0 %v51
  %903 = vmatpush.msra.mxu0 %v48
  %904 = vmatpush.msra.mxu0 %v45
  %905 = vmatpush.msra.mxu0 %v42
  %906 = vmatpush.msra.mxu0 %v39
  %907 = vmatpush.msra.mxu0 %v36
  %908 = vmatpush.msra.mxu0 %v33
  %909 = vmatmul.f32.gmra.mxu0 %v804
  %v910 = vpop.f32.mrf.mxu0
  %v911 = vadd.f32 %v201, %v910
  %912 = vdwg.mxu0
  %913 = vmatpush.msra.mxu0 %v126
  %914 = vmatpush.msra.mxu0 %v123
  %915 = vmatpush.msra.mxu0 %v120
  %916 = vmatpush.msra.mxu0 %v117
  %917 = vmatpush.msra.mxu0 %v114
  %918 = vmatpush.msra.mxu0 %v111
  %919 = vmatpush.msra.mxu0 %v108
  %920 = vmatpush.msra.mxu0 %v105
  %921 = vmatpush.msra.mxu0 %v102
  %922 = vmatpush.msra.mxu0 %v99
  %923 = vmatpush.msra.mxu0 %v96
  %924 = vmatpush.msra.mxu0 %v93
  %925 = vmatpush.msra.mxu0 %v90
  %926 = vmatpush.msra.mxu0 %v87
  %927 = vmatpush.msra.mxu0 %v84
  %928 = vmatpush.msra.mxu0 %v81
  %929 = vmatmul.f32.gmra.mxu0 %v805
  %v930 = vpop.f32.mrf.mxu0
  %v931 = vadd.f32 %v911, %v930
  %932 = vdwg.mxu0
  %933 = vmatpush.msra.mxu0 %v174
  %934 = vmatpush.msra.mxu0 %v171
  %935 = vmatpush.msra.mxu0 %v168
  %936 = vmatpush.msra.mxu0 %v165
  %937 = vmatpush.msra.mxu0 %v162
  %938 = vmatpush.msra.mxu0 %v159
  %939 = vmatpush.msra.mxu0 %v156
  %940 = vmatpush.msra.mxu0 %v153
  %941 = vmatpush.msra.mxu0 %v150
  %942 = vmatpush.msra.mxu0 %v147
  %943 = vmatpush.msra.mxu0 %v144
  %944 = vmatpush.msra.mxu0 %v141
  %945 = vmatpush.msra.mxu0 %v138
  %946 = vmatpush.msra.mxu0 %v135
  %947 = vmatpush.msra.mxu0 %v132
  %948 = vmatpush.msra.mxu0 %v129
  %949 = vmatmul.f32.gmra.mxu0 %v806
  %v950 = vpop.f32.mrf.mxu0
  %v951 = vadd.f32 %v931, %v950
  %952 = vdwg.mxu0
  %953 = vmatpush.msra.mxu0 0.0
  %954 = vmatpush.msra.mxu0 0.0
  %955 = vmatpush.msra.mxu0 0.0
  %956 = vmatpush.msra.mxu0 0.0
  %957 = vmatpush.msra.mxu0 0.0
  %958 = vmatpush.msra.mxu0 0.0
  %959 = vmatpush.msra.mxu0 0.0
  %960 = vmatpush.msra.mxu0 0.0
  %961 = vmatpush.msra.mxu0 0.0
  %962 = vmatpush.msra.mxu0 0.0
  %963 = vmatpush.msra.mxu0 %v192
  %964 = vmatpush.msra.mxu0 %v189
  %965 = vmatpush.msra.mxu0 %v186
  %966 = vmatpush.msra.mxu0 %v183
  %967 = vmatpush.msra.mxu0 %v180
  %968 = vmatpush.msra.mxu0 %v177
  %969 = vmatmul.f32.gmra.mxu0 %v811
  %v970 = vpop.f32.mrf.mxu0
  %v971 = vadd.f32 %v951, %v970
  %972 = vdwg.mxu0
  %973 = vmatpush.msra.mxu0 %v79
  %974 = vmatpush.msra.mxu0 %v76
  %975 = vmatpush.msra.mxu0 %v73
  %976 = vmatpush.msra.mxu0 %v70
  %977 = vmatpush.msra.mxu0 %v67
  %978 = vmatpush.msra.mxu0 %v64
  %979 = vmatpush.msra.mxu0 %v61
  %980 = vmatpush.msra.mxu0 %v58
  %981 = vmatpush.msra.mxu0 %v55
  %982 = vmatpush.msra.mxu0 %v52
  %983 = vmatpush.msra.mxu0 %v49
  %984 = vmatpush.msra.mxu0 %v46
  %985 = vmatpush.msra.mxu0 %v43
  %986 = vmatpush.msra.mxu0 %v40
  %987 = vmatpush.msra.mxu0 %v37
  %988 = vmatpush.msra.mxu0 %v34
  %989 = vmatmul.f32.gmra.mxu0 %v804
  %v990 = vpop.f32.mrf.mxu0
  %v991 = vadd.f32 %v202, %v990
  %992 = vdwg.mxu0
  %993 = vmatpush.msra.mxu0 %v127
  %994 = vmatpush.msra.mxu0 %v124
  %995 = vmatpush.msra.mxu0 %v121
  %996 = vmatpush.msra.mxu0 %v118
  %997 = vmatpush.msra.mxu0 %v115
  %998 = vmatpush.msra.mxu0 %v112
  %999 = vmatpush.msra.mxu0 %v109
  %1000 = vmatpush.msra.mxu0 %v106
  %1001 = vmatpush.msra.mxu0 %v103
  %1002 = vmatpush.msra.mxu0 %v100
  %1003 = vmatpush.msra.mxu0 %v97
  %1004 = vmatpush.msra.mxu0 %v94
  %1005 = vmatpush.msra.mxu0 %v91
  %1006 = vmatpush.msra.mxu0 %v88
  %1007 = vmatpush.msra.mxu0 %v85
  %1008 = vmatpush.msra.mxu0 %v82
  %1009 = vmatmul.f32.gmra.mxu0 %v805
  %v1010 = vpop.f32.mrf.mxu0
  %v1011 = vadd.f32 %v991, %v1010
  %1012 = vdwg.mxu0
  %1013 = vmatpush.msra.mxu0 %v175
  %1014 = vmatpush.msra.mxu0 %v172
  %1015 = vmatpush.msra.mxu0 %v169
  %1016 = vmatpush.msra.mxu0 %v166
  %1017 = vmatpush.msra.mxu0 %v163
  %1018 = vmatpush.msra.mxu0 %v160
  %1019 = vmatpush.msra.mxu0 %v157
  %1020 = vmatpush.msra.mxu0 %v154
  %1021 = vmatpush.msra.mxu0 %v151
  %1022 = vmatpush.msra.mxu0 %v148
  %1023 = vmatpush.msra.mxu0 %v145
  %1024 = vmatpush.msra.mxu0 %v142
  %1025 = vmatpush.msra.mxu0 %v139
  %1026 = vmatpush.msra.mxu0 %v136
  %1027 = vmatpush.msra.mxu0 %v133
  %1028 = vmatpush.msra.mxu0 %v130
  %1029 = vmatmul.f32.gmra.mxu0 %v806
  %v1030 = vpop.f32.mrf.mxu0
  %v1031 = vadd.f32 %v1011, %v1030
  %1032 = vdwg.mxu0
  %1033 = vmatpush.msra.mxu0 0.0
  %1034 = vmatpush.msra.mxu0 0.0
  %1035 = vmatpush.msra.mxu0 0.0
  %1036 = vmatpush.msra.mxu0 0.0
  %1037 = vmatpush.msra.mxu0 0.0
  %1038 = vmatpush.msra.mxu0 0.0
  %1039 = vmatpush.msra.mxu0 0.0
  %1040 = vmatpush.msra.mxu0 0.0
  %1041 = vmatpush.msra.mxu0 0.0
  %1042 = vmatpush.msra.mxu0 0.0
  %1043 = vmatpush.msra.mxu0 %v193
  %1044 = vmatpush.msra.mxu0 %v190
  %1045 = vmatpush.msra.mxu0 %v187
  %1046 = vmatpush.msra.mxu0 %v184
  %1047 = vmatpush.msra.mxu0 %v181
  %1048 = vmatpush.msra.mxu0 %v178
  %1049 = vmatmul.f32.gmra.mxu0 %v811
  %v1050 = vpop.f32.mrf.mxu0
  %v1051 = vadd.f32 %v1031, %v1050
  %1052 = vdwg.mxu0
  %v1053 = vmax.f32 %v891, 0.0
  %v1054 = vmax.f32 %v971, 0.0
  %v1055 = vmax.f32 %v1051, 0.0
  %vm1056 = vcmask 1041408
  %v1057 = vsel %vm1056, %v1053, 0.0
  %v1058 = vrot.slane %v1057, 4
  %v1059 = vadd.f32 %v1057, %v1058
  %v1060 = vrot.slane %v1059, 2
  %v1061 = vadd.f32 %v1059, %v1060
  %v1062 = vrot.slane %v1061, 1
  %v1063 = vadd.f32 %v1061, %v1062
  %v1064 = vsel %vm1056, %v1054, 0.0
  %v1065 = vrot.slane %v1064, 4
  %v1066 = vadd.f32 %v1064, %v1065
  %v1067 = vrot.slane %v1066, 2
  %v1068 = vadd.f32 %v1066, %v1067
  %v1069 = vrot.slane %v1068, 1
  %v1070 = vadd.f32 %v1068, %v1069
  %vm1071 = vcmask 254976
  %v1072 = vsel %vm1071, %v1055, 0.0
  %v1073 = vrot.slane %v1072, 4
  %v1074 = vadd.f32 %v1072, %v1073
  %v1075 = vrot.slane %v1074, 2
  %v1076 = vadd.f32 %v1074, %v1075
  %v1077 = vrot.slane %v1076, 1
  %v1078 = vadd.f32 %v1076, %v1077
  %v1079 = vadd.f32 %v747, %v1063
  %v1080 = vadd.f32 %v748, %v1070
  %v1081 = vadd.f32 %v749, %v1078
  %v1082 = vmul.f32 %v1053, %v1053
  %v1083 = vmul.f32 %v1054, %v1054
  %v1084 = vmul.f32 %v1055, %v1055
  %v1085 = vsel %vm1056, %v1082, 0.0
  %v1086 = vrot.slane %v1085, 4
  %v1087 = vadd.f32 %v1085, %v1086
  %v1088 = vrot.slane %v1087, 2
  %v1089 = vadd.f32 %v1087, %v1088
  %v1090 = vrot.slane %v1089, 1
  %v1091 = vadd.f32 %v1089, %v1090
  %v1092 = vsel %vm1056, %v1083, 0.0
  %v1093 = vrot.slane %v1092, 4
  %v1094 = vadd.f32 %v1092, %v1093
  %v1095 = vrot.slane %v1094, 2
  %v1096 = vadd.f32 %v1094, %v1095
  %v1097 = vrot.slane %v1096, 1
  %v1098 = vadd.f32 %v1096, %v1097
  %v1099 = vsel %vm1071, %v1084, 0.0
  %v1100 = vrot.slane %v1099, 4
  %v1101 = vadd.f32 %v1099, %v1100
  %v1102 = vrot.slane %v1101, 2
  %v1103 = vadd.f32 %v1101, %v1102
  %v1104 = vrot.slane %v1103, 1
  %v1105 = vadd.f32 %v1103, %v1104
  %v1106 = vadd.f32 %v798, %v1091
  %v1107 = vadd.f32 %v799, %v1098
  %v1108 = vadd.f32 %v800, %v1105
  %v1109 = vld [vmem:[%s7] sm:$0xff]
  %v1110 = vld [vmem:[%s7 + $0x8] sm:$0xff]
  %v1111 = vld [vmem:[%s7 + $0x10] sm:$0xff]
  %v1112 = vld [vmem:[%s7 + $0x18] sm:$0xff]
  %v1113 = vld [vmem:[%s7 + $0x20] sm:$0xff]
  %v1114 = vld [vmem:[%s7 + $0x28] sm:$0xff]
  %v1115 = vld [vmem:[%s7 + $0x30] sm:$0xff]
  %v1116 = vld [vmem:[%s7 + $0x38] sm:$0xff]
  %v1117 = vld [vmem:[%s7 + $0x40] sm:$0xff]
  %v1118 = vld [vmem:[%s7 + $0x48] sm:$0xff]
  %v1119 = vld [vmem:[%s7 + $0x50] sm:$0xff]
  %v1120 = vld [vmem:[%s7 + $0x58] sm:$0xff]
  %v1121 = vld [vmem:[%s7 + $0x60] sm:$0xff]
  %v1122 = vld [vmem:[%s7 + $0x68] sm:$0xff]
  %v1123 = vld [vmem:[%s7 + $0x70] sm:$0xff]
  %v1124 = vld [vmem:[%s7 + $0x78] sm:$0xff]
  %v1125 = vld [vmem:[%s7 + $0x80] sm:$0xff]
  %v1126 = vld [vmem:[%s7 + $0x88] sm:$0xff]
  %v1127 = vld [vmem:[%s7 + $0x90] sm:$0xff]
  %v1128 = vld [vmem:[%s7 + $0x98] sm:$0xff]
  %v1129 = vld [vmem:[%s7 + $0xa0] sm:$0xff]
  %v1130 = vld [vmem:[%s7 + $0xa8] sm:$0xff]
  %v1131 = vld [vmem:[%s7 + $0xb0] sm:$0xff]
  %v1132 = vld [vmem:[%s7 + $0xb8] sm:$0xff]
  %v1133 = vld [vmem:[%s7 + $0xc0] sm:$0xff]
  %v1134 = vld [vmem:[%s7 + $0xc8] sm:$0xff]
  %v1135 = vld [vmem:[%s7 + $0xd0] sm:$0xff]
  %v1136 = vld [vmem:[%s7 + $0xd8] sm:$0xff]
  %v1137 = vld [vmem:[%s7 + $0xe0] sm:$0xff]
  %v1138 = vld [vmem:[%s7 + $0xe8] sm:$0xff]
  %v1139 = vld [vmem:[%s7 + $0xf0] sm:$0xff]
  %v1140 = vld [vmem:[%s7 + $0xf8] sm:$0xff]
  %v1141 = vld [vmem:[%s7 + $0x100] sm:$0xff]
  %v1142 = vld [vmem:[%s7 + $0x108] sm:$0xff]
  %v1143 = vld [vmem:[%s7 + $0x110] sm:$0xff]
  %v1144 = vld [vmem:[%s7 + $0x118] sm:$0xff]
  %vm1145 = vcmask 261120
  %v1147 = vsel %vm1145, %v1081, 0
  %1149 = vmatpush.msra.mxu0 %v1124
  %1150 = vmatpush.msra.mxu0 %v1123
  %1151 = vmatpush.msra.mxu0 %v1122
  %1152 = vmatpush.msra.mxu0 %v1121
  %1153 = vmatpush.msra.mxu0 %v1120
  %1154 = vmatpush.msra.mxu0 %v1119
  %1155 = vmatpush.msra.mxu0 %v1118
  %1156 = vmatpush.msra.mxu0 %v1117
  %1157 = vmatpush.msra.mxu0 %v1116
  %1158 = vmatpush.msra.mxu0 %v1115
  %1159 = vmatpush.msra.mxu0 %v1114
  %1160 = vmatpush.msra.mxu0 %v1113
  %1161 = vmatpush.msra.mxu0 %v1112
  %1162 = vmatpush.msra.mxu0 %v1111
  %1163 = vmatpush.msra.mxu0 %v1110
  %1164 = vmatpush.msra.mxu0 %v1109
  %1165 = vmatmul.f32.gmra.mxu0 %v1079
  %v1166 = vpop.f32.mrf.mxu0
  %v1167 = vadd.f32 0.0, %v1166
  %1168 = vdwg.mxu0
  %1169 = vmatpush.msra.mxu0 %v1140
  %1170 = vmatpush.msra.mxu0 %v1139
  %1171 = vmatpush.msra.mxu0 %v1138
  %1172 = vmatpush.msra.mxu0 %v1137
  %1173 = vmatpush.msra.mxu0 %v1136
  %1174 = vmatpush.msra.mxu0 %v1135
  %1175 = vmatpush.msra.mxu0 %v1134
  %1176 = vmatpush.msra.mxu0 %v1133
  %1177 = vmatpush.msra.mxu0 %v1132
  %1178 = vmatpush.msra.mxu0 %v1131
  %1179 = vmatpush.msra.mxu0 %v1130
  %1180 = vmatpush.msra.mxu0 %v1129
  %1181 = vmatpush.msra.mxu0 %v1128
  %1182 = vmatpush.msra.mxu0 %v1127
  %1183 = vmatpush.msra.mxu0 %v1126
  %1184 = vmatpush.msra.mxu0 %v1125
  %1185 = vmatmul.f32.gmra.mxu0 %v1080
  %v1186 = vpop.f32.mrf.mxu0
  %v1187 = vadd.f32 %v1167, %v1186
  %1188 = vdwg.mxu0
  %1189 = vmatpush.msra.mxu0 0.0
  %1190 = vmatpush.msra.mxu0 0.0
  %1191 = vmatpush.msra.mxu0 0.0
  %1192 = vmatpush.msra.mxu0 0.0
  %1193 = vmatpush.msra.mxu0 0.0
  %1194 = vmatpush.msra.mxu0 0.0
  %1195 = vmatpush.msra.mxu0 0.0
  %1196 = vmatpush.msra.mxu0 0.0
  %1197 = vmatpush.msra.mxu0 0.0
  %1198 = vmatpush.msra.mxu0 0.0
  %1199 = vmatpush.msra.mxu0 0.0
  %1200 = vmatpush.msra.mxu0 0.0
  %1201 = vmatpush.msra.mxu0 %v1144
  %1202 = vmatpush.msra.mxu0 %v1143
  %1203 = vmatpush.msra.mxu0 %v1142
  %1204 = vmatpush.msra.mxu0 %v1141
  %1205 = vmatmul.f32.gmra.mxu0 %v1147
  %v1206 = vpop.f32.mrf.mxu0
  %v1207 = vadd.f32 %v1187, %v1206
  %1208 = vdwg.mxu0
  %v1209 = vmul.f32 %v1207, 0.010204081
  %v1211 = vsel %vm1145, %v1108, 0
  %1213 = vmatpush.msra.mxu0 %v1124
  %1214 = vmatpush.msra.mxu0 %v1123
  %1215 = vmatpush.msra.mxu0 %v1122
  %1216 = vmatpush.msra.mxu0 %v1121
  %1217 = vmatpush.msra.mxu0 %v1120
  %1218 = vmatpush.msra.mxu0 %v1119
  %1219 = vmatpush.msra.mxu0 %v1118
  %1220 = vmatpush.msra.mxu0 %v1117
  %1221 = vmatpush.msra.mxu0 %v1116
  %1222 = vmatpush.msra.mxu0 %v1115
  %1223 = vmatpush.msra.mxu0 %v1114
  %1224 = vmatpush.msra.mxu0 %v1113
  %1225 = vmatpush.msra.mxu0 %v1112
  %1226 = vmatpush.msra.mxu0 %v1111
  %1227 = vmatpush.msra.mxu0 %v1110
  %1228 = vmatpush.msra.mxu0 %v1109
  %1229 = vmatmul.f32.gmra.mxu0 %v1106
  %v1230 = vpop.f32.mrf.mxu0
  %v1231 = vadd.f32 0.0, %v1230
  %1232 = vdwg.mxu0
  %1233 = vmatpush.msra.mxu0 %v1140
  %1234 = vmatpush.msra.mxu0 %v1139
  %1235 = vmatpush.msra.mxu0 %v1138
  %1236 = vmatpush.msra.mxu0 %v1137
  %1237 = vmatpush.msra.mxu0 %v1136
  %1238 = vmatpush.msra.mxu0 %v1135
  %1239 = vmatpush.msra.mxu0 %v1134
  %1240 = vmatpush.msra.mxu0 %v1133
  %1241 = vmatpush.msra.mxu0 %v1132
  %1242 = vmatpush.msra.mxu0 %v1131
  %1243 = vmatpush.msra.mxu0 %v1130
  %1244 = vmatpush.msra.mxu0 %v1129
  %1245 = vmatpush.msra.mxu0 %v1128
  %1246 = vmatpush.msra.mxu0 %v1127
  %1247 = vmatpush.msra.mxu0 %v1126
  %1248 = vmatpush.msra.mxu0 %v1125
  %1249 = vmatmul.f32.gmra.mxu0 %v1107
  %v1250 = vpop.f32.mrf.mxu0
  %v1251 = vadd.f32 %v1231, %v1250
  %1252 = vdwg.mxu0
  %1253 = vmatpush.msra.mxu0 0.0
  %1254 = vmatpush.msra.mxu0 0.0
  %1255 = vmatpush.msra.mxu0 0.0
  %1256 = vmatpush.msra.mxu0 0.0
  %1257 = vmatpush.msra.mxu0 0.0
  %1258 = vmatpush.msra.mxu0 0.0
  %1259 = vmatpush.msra.mxu0 0.0
  %1260 = vmatpush.msra.mxu0 0.0
  %1261 = vmatpush.msra.mxu0 0.0
  %1262 = vmatpush.msra.mxu0 0.0
  %1263 = vmatpush.msra.mxu0 0.0
  %1264 = vmatpush.msra.mxu0 0.0
  %1265 = vmatpush.msra.mxu0 %v1144
  %1266 = vmatpush.msra.mxu0 %v1143
  %1267 = vmatpush.msra.mxu0 %v1142
  %1268 = vmatpush.msra.mxu0 %v1141
  %1269 = vmatmul.f32.gmra.mxu0 %v1211
  %v1270 = vpop.f32.mrf.mxu0
  %v1271 = vadd.f32 %v1251, %v1270
  %1272 = vdwg.mxu0
  %v1273 = vmul.f32 %v1271, 0.010204081
  %v1274 = vmul.f32 %v1209, %v1209
  %v1275 = vsub.f32 %v1273, %v1274
  %v1276 = vmax.f32 %v1275, 0.0
  %v1277 = vld [vmem:[%s5] sm:$0x1]
  %v1278 = vadd.f32 %v1276, 1e-05
  %v1279 = vrsqrt.pop %v1278
  %v1280 = vmul.f32 %v1279, %v1278
  %v1281 = vmul.f32 %v1280, %v1279
  %v1282 = vmul.f32 0.5, %v1281
  %v1283 = vsub.f32 1.5, %v1282
  %v1284 = vmul.f32 %v1279, %v1283
  %vm1285 = vweird.f32 %v1278
  %vm1286 = vweird.f32 %v1279
  %vm1287 = vmor %vm1285, %vm1286
  %v1288 = vsel %vm1287, %v1279, %v1284
  %v1289 = vmul.f32 %v1277, %v1288
  %v1290 = vld [vmem:[%s6] sm:$0x1]
  %v1291 = vmul.f32 %v1209, %v1289
  %v1292 = vsub.f32 %v1290, %v1291
  %v1293 = vld [vmem:[%s8] sm:$0xff]
  %v1294 = vld [vmem:[%s8 + $0x8] sm:$0xff]
  %v1295 = vld [vmem:[%s8 + $0x18] sm:$0xff]
  %v1296 = vld [vmem:[%s8 + $0x20] sm:$0xff]
  %v1297 = vld [vmem:[%s8 + $0x30] sm:$0xff]
  %v1298 = vld [vmem:[%s8 + $0x38] sm:$0xff]
  %v1299 = vld [vmem:[%s8 + $0x48] sm:$0xff]
  %v1300 = vld [vmem:[%s8 + $0x50] sm:$0xff]
  %v1302 = vsel %vm1145, %v1289, 0
  %1304 = vmatpush.msra.mxu0 0.0
  %1305 = vmatpush.msra.mxu0 0.0
  %1306 = vmatpush.msra.mxu0 0.0
  %1307 = vmatpush.msra.mxu0 0.0
  %1308 = vmatpush.msra.mxu0 0.0
  %1309 = vmatpush.msra.mxu0 0.0
  %1310 = vmatpush.msra.mxu0 0.0
  %1311 = vmatpush.msra.mxu0 0.0
  %1312 = vmatpush.msra.mxu0 0.0
  %1313 = vmatpush.msra.mxu0 0.0
  %1314 = vmatpush.msra.mxu0 0.0
  %1315 = vmatpush.msra.mxu0 0.0
  %1316 = vmatpush.msra.mxu0 %v1299
  %1317 = vmatpush.msra.mxu0 %v1297
  %1318 = vmatpush.msra.mxu0 %v1295
  %1319 = vmatpush.msra.mxu0 %v1293
  %1320 = vmatmul.f32.gmra.mxu0 %v1302
  %v1321 = vpop.f32.mrf.mxu0
  %v1322 = vadd.f32 0.0, %v1321
  %1323 = vdwg.mxu0
  %1324 = vmatpush.msra.mxu0 0.0
  %1325 = vmatpush.msra.mxu0 0.0
  %1326 = vmatpush.msra.mxu0 0.0
  %1327 = vmatpush.msra.mxu0 0.0
  %1328 = vmatpush.msra.mxu0 0.0
  %1329 = vmatpush.msra.mxu0 0.0
  %1330 = vmatpush.msra.mxu0 0.0
  %1331 = vmatpush.msra.mxu0 0.0
  %1332 = vmatpush.msra.mxu0 0.0
  %1333 = vmatpush.msra.mxu0 0.0
  %1334 = vmatpush.msra.mxu0 0.0
  %1335 = vmatpush.msra.mxu0 0.0
  %1336 = vmatpush.msra.mxu0 %v1300
  %1337 = vmatpush.msra.mxu0 %v1298
  %1338 = vmatpush.msra.mxu0 %v1296
  %1339 = vmatpush.msra.mxu0 %v1294
  %1340 = vmatmul.f32.gmra.mxu0 %v1302
  %v1341 = vpop.f32.mrf.mxu0
  %v1342 = vadd.f32 0.0, %v1341
  %1343 = vdwg.mxu0
  %v1345 = vsel %vm1145, %v1292, 0
  %1347 = vmatpush.msra.mxu0 0.0
  %1348 = vmatpush.msra.mxu0 0.0
  %1349 = vmatpush.msra.mxu0 0.0
  %1350 = vmatpush.msra.mxu0 0.0
  %1351 = vmatpush.msra.mxu0 0.0
  %1352 = vmatpush.msra.mxu0 0.0
  %1353 = vmatpush.msra.mxu0 0.0
  %1354 = vmatpush.msra.mxu0 0.0
  %1355 = vmatpush.msra.mxu0 0.0
  %1356 = vmatpush.msra.mxu0 0.0
  %1357 = vmatpush.msra.mxu0 0.0
  %1358 = vmatpush.msra.mxu0 0.0
  %1359 = vmatpush.msra.mxu0 %v1299
  %1360 = vmatpush.msra.mxu0 %v1297
  %1361 = vmatpush.msra.mxu0 %v1295
  %1362 = vmatpush.msra.mxu0 %v1293
  %1363 = vmatmul.f32.gmra.mxu0 %v1345
  %v1364 = vpop.f32.mrf.mxu0
  %v1365 = vadd.f32 0.0, %v1364
  %1366 = vdwg.mxu0
  %1367 = vmatpush.msra.mxu0 0.0
  %1368 = vmatpush.msra.mxu0 0.0
  %1369 = vmatpush.msra.mxu0 0.0
  %1370 = vmatpush.msra.mxu0 0.0
  %1371 = vmatpush.msra.mxu0 0.0
  %1372 = vmatpush.msra.mxu0 0.0
  %1373 = vmatpush.msra.mxu0 0.0
  %1374 = vmatpush.msra.mxu0 0.0
  %1375 = vmatpush.msra.mxu0 0.0
  %1376 = vmatpush.msra.mxu0 0.0
  %1377 = vmatpush.msra.mxu0 0.0
  %1378 = vmatpush.msra.mxu0 0.0
  %1379 = vmatpush.msra.mxu0 %v1300
  %1380 = vmatpush.msra.mxu0 %v1298
  %1381 = vmatpush.msra.mxu0 %v1296
  %1382 = vmatpush.msra.mxu0 %v1294
  %1383 = vmatmul.f32.gmra.mxu0 %v1345
  %v1384 = vpop.f32.mrf.mxu0
  %v1385 = vadd.f32 0.0, %v1384
  %1386 = vdwg.mxu0
  %v1387 = vperm.slane %v1322, 0
  %v1388 = vperm.slane %v1342, 0
  %v1389 = vmul.f32 %v450, %v1387
  %v1390 = vmul.f32 %v451, %v1388
  %v1391 = vperm.slane %v1365, 0
  %v1392 = vperm.slane %v1385, 0
  %v1393 = vadd.f32 %v1389, %v1391
  %v1394 = vadd.f32 %v1390, %v1392
  %v1395 = vmul.f32 %v700, %v1387
  %v1396 = vmul.f32 %v701, %v1388
  %v1397 = vadd.f32 %v1395, %v1391
  %v1398 = vadd.f32 %v1396, %v1392
  %v1399 = vmax.f32 %v1393, %v1397
  %v1400 = vmax.f32 %v1394, %v1398
  %v1401 = vmax.f32 %v1399, %v1400
  %1402 = vst [vmem:[%s9] sm:$0x3f] %v1401
  // Predicated region
  $region38: #{forward.6} parent=0 // pred_check
    _
  $region39: #{forward.6} parent=0 // pred_check_branch
    %1404 = sbr.rel (0) target = $region41
  $region40: #{forward.6} parent=0 // pred_region
    _
  $region41: #{forward.6} parent=0 // pred_fallthru
    _
  // Predicated region
  $region42: #{forward.6} parent=0 // pred_check
    _
  $region43: #{forward.6} parent=0 // pred_check_branch
    %1406 = sbr.rel (0) target = $region45
  $region44: #{forward.6} parent=0 // pred_region
    _
  $region45: #{forward.6} parent=0 // pred_fallthru
    _

</llo_original>
